<compile_context>
chip_gen: v5e
topology: v5e:2x2
jax: 0.10.0
libtpu: 0.0.40
codegen_flags: <defaults>
</compile_context>

<pallas_src>
import functools

import numpy as np

import jax
import jax.numpy as jnp
from jax.experimental import pallas as pl
from jax.experimental.pallas import tpu as pltpu

# Rows of the packed bias/gamma/beta slab (single f32 DMA instead of 9 tiny ones).
(ROW_B_EMB, ROW_B1, ROW_GAMMA, ROW_BETA, ROW_B2,
 ROW_B_MV, ROW_BD1, ROW_BD2, ROW_BML) = range(9)
NUM_BIAS_ROWS = 9
BN_EPS = 1e-5


def _round_up(x, m):
    return (x + m - 1) // m * m


# --------------------------------------------------------------------------
# Parameters
# --------------------------------------------------------------------------
def init_params(key, n_inputs, n_latents, n_cond, n_cond_in, hidden=512):
    """Torch-style f32 parameters (weights stored as (in, out) matrices)."""
    def lin(k, fan_in, fan_out):
        kw, kb = jax.random.split(k)
        bound = 1.0 / jnp.sqrt(fan_in)   # torch.nn.Linear default init
        w = jax.random.uniform(kw, (fan_in, fan_out), jnp.float32, -bound, bound)
        b = jax.random.uniform(kb, (1, fan_out), jnp.float32, -bound, bound)
        return w, b

    ks = jax.random.split(key, 8)
    p = {}
    p["w_emb"], p["b_emb"] = lin(ks[0], n_cond_in, n_cond)
    w1, p["b1"] = lin(ks[1], n_inputs + n_cond, hidden)
    p["w1x"], p["w1c"] = w1[:n_inputs], w1[n_inputs:]
    p["gamma"] = jnp.ones((1, hidden), jnp.float32)
    p["beta"] = jnp.zeros((1, hidden), jnp.float32)
    p["w2"], p["b2"] = lin(ks[2], hidden, hidden)
    p["wm"], p["bm"] = lin(ks[3], hidden, n_latents)
    p["wv"], p["bv"] = lin(ks[4], hidden, n_latents)
    wd1, p["bd1"] = lin(ks[5], n_latents + n_cond, hidden)
    p["wdz"], p["wdc"] = wd1[:n_latents], wd1[n_latents:]
    p["wd2"], p["bd2"] = lin(ks[6], hidden, n_inputs)
    p["wml"], p["bml"] = lin(ks[7], n_inputs, n_cond_in)
    return p


def pack_params(p):
    """Kernel-ready params: bf16 MXU weights, fused means|log_var head,
    precomposed conditioning path and one packed f32 bias/gamma/beta slab."""
    f32, bf16 = jnp.float32, jnp.bfloat16
    n_in, H = p["w1x"].shape
    n_cond_in, n_cond = p["w_emb"].shape
    L = p["wm"].shape[1]

    # Precompose the conditioning path in f32:
    #   c_embed @ W = c @ (w_emb @ W) + b_emb @ W   (bias folded into b1 / bd1)
    w1c_pre = p["w_emb"] @ p["w1c"]                       # (n_cond_in, H)
    b1_fold = p["b1"] + p["b_emb"] @ p["w1c"]
    wdc_pre = p["w_emb"] @ p["wdc"]                       # (n_cond_in, H)
    bd1_fold = p["bd1"] + p["b_emb"] @ p["wdc"]

    maxw = _round_up(max(H, n_in, 2 * L, n_cond, n_cond_in), 128)
    slab = jnp.zeros((NUM_BIAS_ROWS, maxw), f32)

    def put(s, row, vec):
        vec = jnp.asarray(vec, f32).reshape(-1)
        return s.at[row, : vec.shape[0]].set(vec)

    slab = put(slab, ROW_B_EMB, p["b_emb"])
    slab = put(slab, ROW_B1, b1_fold)
    slab = put(slab, ROW_GAMMA, p["gamma"])
    slab = put(slab, ROW_BETA, p["beta"])
    slab = put(slab, ROW_B2, p["b2"])
    slab = put(slab, ROW_B_MV,
               jnp.concatenate([p["bm"].reshape(-1), p["bv"].reshape(-1)]))
    slab = put(slab, ROW_BD1, bd1_fold)
    slab = put(slab, ROW_BD2, p["bd2"])
    slab = put(slab, ROW_BML, p["bml"])

    return {
        "bias": slab,
        "w_emb": p["w_emb"].astype(bf16),
        "w1x": p["w1x"].astype(bf16),
        "w1c": w1c_pre.astype(bf16),          # precomposed c -> layer-1 path
        "w2": p["w2"].astype(bf16),
        # fused means|log_var head: single (H, 2L) matmul
        "w_mv": jnp.concatenate([p["wm"], p["wv"]], axis=1).astype(bf16),
        "wdz": p["wdz"].astype(bf16),
        "wdc": wdc_pre.astype(bf16),          # precomposed c -> decoder path
        "wd2": p["wd2"].astype(bf16),
        "wml": p["wml"].astype(bf16),
    }


# --------------------------------------------------------------------------
# Forward pass (single fused pallas_call)
# --------------------------------------------------------------------------
@functools.partial(jax.jit, static_argnames=("tile_rows",))
def multilab_class_vae_forward(x, c, eps, kp, tile_rows=None):
    f32, bf16 = jnp.float32, jnp.bfloat16

    B, n_in = x.shape
    n_cond_in = c.shape[1]
    L = eps.shape[1]
    n_cond = kp["w_emb"].shape[1]
    H = kp["w1x"].shape[1]
    assert H % 128 == 0

    tile = B if tile_rows is None else min(tile_rows, B)
    assert B % tile == 0 and tile % 8 == 0, "batch must be a multiple of the tile"
    nt = B // tile
    inv_b = 1.0 / float(B)

    # packed narrow-head output: [ means | log_var | predClass | c_embed | 0-pad ]
    OFF_MV, OFF_PRED, OFF_CEMB = 0, 2 * L, 2 * L + n_cond_in
    USED = 2 * L + n_cond_in + n_cond
    PACKW = _round_up(USED, 128)

    # ---------------- fused kernel: grid = (pass, batch-tile) ----------------
    # pass 0: encoder layer 1 (+ global BN sums) -> persistent VMEM scratch
    # pass 1: BN + ReLU + encoder L2 + heads + reparam + decoder + multilab
    def fused_vae_kernel(x_ref, c_ref, eps_ref, bias_ref, w_emb_ref, w1x_ref,
                         w1c_ref, w2_ref, wmv_ref, wdz_ref, wdc_ref, wd2_ref,
                         wml_ref, recon_ref, packed_ref, h1_scr, stat_scr):
        p = pl.program_id(0)
        i = pl.program_id(1)
        row0 = pl.multiple_of(i * tile, 8)

        @pl.when(p == 0)
        def _encoder_front():
            # cat(x, c_embed) @ W1 realized as x @ W1x + c @ (Wemb @ W1c) with
            # b_emb folded into b1 (precomposed at pack time).
            h1 = (jnp.dot(x_ref[...], w1x_ref[...], preferred_element_type=f32)
                  + jnp.dot(c_ref[...].astype(bf16), w1c_ref[...],
                            preferred_element_type=f32)
                  + bias_ref[ROW_B1:ROW_B1 + 1, :H])
            h1_scr[pl.ds(row0, tile), :] = h1       # stays in VMEM (no HBM trip)

            @pl.when(i == 0)
            def _init():
                stat_scr[...] = jnp.zeros_like(stat_scr)

            # one-pass global BN stats accumulated across batch tiles
            stat_scr[0:1, :H] += jnp.sum(h1, axis=0, keepdims=True)
            stat_scr[0:1, H:] += jnp.sum(h1 * h1, axis=0, keepdims=True)

            @pl.when(i == nt - 1)
            def _finalize():                        # sums -> affine (scale, shift)
                mean = stat_scr[0:1, :H] * inv_b
                var = stat_scr[0:1, H:] * inv_b - mean * mean   # biased (torch train)
                gamma = bias_ref[ROW_GAMMA:ROW_GAMMA + 1, :H]
                beta = bias_ref[ROW_BETA:ROW_BETA + 1, :H]
                scale = gamma * jax.lax.rsqrt(var + BN_EPS)
                shift = beta - mean * scale
                stat_scr[0:1, :H] = scale
                stat_scr[0:1, H:] = shift

        @pl.when(p == 1)
        def _bn_and_decoder():
            h1 = h1_scr[pl.ds(row0, tile), :]
            h = jnp.maximum(h1 * stat_scr[0:1, :H] + stat_scr[0:1, H:], 0.0)

            c_bf = c_ref[...].astype(bf16)
            # c_embed only computed because the module returns it
            c_embed = (jnp.dot(c_bf, w_emb_ref[...], preferred_element_type=f32)
                       + bias_ref[ROW_B_EMB:ROW_B_EMB + 1, :n_cond])

            h2 = (jnp.dot(h.astype(bf16), w2_ref[...], preferred_element_type=f32)
                  + bias_ref[ROW_B2:ROW_B2 + 1, :H])
            mv = (jnp.dot(h2.astype(bf16), wmv_ref[...], preferred_element_type=f32)
                  + bias_ref[ROW_B_MV:ROW_B_MV + 1, :2 * L])    # fused means|log_var
            means = mv[:, :L]
            log_var = mv[:, L:]

            z = eps_ref[...] * jnp.exp(0.5 * log_var) + means   # reparameterization

            d = (jnp.dot(z.astype(bf16), wdz_ref[...], preferred_element_type=f32)
                 + jnp.dot(c_bf, wdc_ref[...], preferred_element_type=f32)
                 + bias_ref[ROW_BD1:ROW_BD1 + 1, :H])
            d = jnp.maximum(d, 0.0)

            recon = (jnp.dot(d.astype(bf16), wd2_ref[...], preferred_element_type=f32)
                     + bias_ref[ROW_BD2:ROW_BD2 + 1, :n_in])
            pred = (jnp.dot(recon.astype(bf16), wml_ref[...],
                            preferred_element_type=f32)
                    + bias_ref[ROW_BML:ROW_BML + 1, :n_cond_in])

            recon_ref[...] = recon
            # single lane-dense (128-wide) unmasked store of all narrow heads
            pieces = [mv, pred, c_embed]
            if PACKW > USED:
                pieces.append(jnp.zeros((tile, PACKW - USED), f32))
            packed_ref[...] = jnp.concatenate(pieces, axis=1)

    def resident(arr):                  # weight stays VMEM-resident across the grid
        nd = arr.ndim
        return pl.BlockSpec(arr.shape, lambda p, i, _nd=nd: (0,) * _nd)

    recon, packed = pl.pallas_call(
        fused_vae_kernel,
        grid=(2, nt),
        in_specs=[
            # x only needed in pass 0 (block index pinned to 0 during pass 1)
            pl.BlockSpec((tile, n_in), lambda p, i: ((1 - p) * i, 0)),
            # c needed in both passes (layer-1 path and c_embed output)
            pl.BlockSpec((tile, n_cond_in), lambda p, i: (i, 0)),
            # eps only needed in pass 1
            pl.BlockSpec((tile, L), lambda p, i: (p * i, 0)),
            resident(kp["bias"]),
            resident(kp["w_emb"]),
            resident(kp["w1x"]),
            resident(kp["w1c"]),
            resident(kp["w2"]),
            resident(kp["w_mv"]),
            resident(kp["wdz"]),
            resident(kp["wdc"]),
            resident(kp["wd2"]),
            resident(kp["wml"]),
        ],
        out_specs=(
            # outputs are only written during pass 1; during pass 0 the block
            # index stays at 0 so no garbage block is ever written back
            pl.BlockSpec((tile, n_in), lambda p, i: (p * i, 0)),
            pl.BlockSpec((tile, PACKW), lambda p, i: (p * i, 0)),
        ),
        out_shape=(
            jax.ShapeDtypeStruct((B, n_in), f32),
            jax.ShapeDtypeStruct((B, PACKW), f32),
        ),
        scratch_shapes=[
            pltpu.VMEM((B, H), f32),        # persistent h1 across both passes
            pltpu.VMEM((1, 2 * H), f32),    # sum/sum-sq -> BN scale/shift
        ],
        compiler_params=pltpu.CompilerParams(
            # pass axis is sequential; pass-0 batch axis accumulates BN stats
            dimension_semantics=("arbitrary", "arbitrary"),
            vmem_limit_bytes=32 * 1024 * 1024),
    )(x.astype(bf16), c, eps, kp["bias"], kp["w_emb"], kp["w1x"], kp["w1c"],
      kp["w2"], kp["w_mv"], kp["wdz"], kp["wdc"], kp["wd2"], kp["wml"])

    means = packed[:, OFF_MV:OFF_MV + L]
    log_var = packed[:, OFF_MV + L:OFF_MV + 2 * L]
    pred_class = packed[:, OFF_PRED:OFF_PRED + n_cond_in]
    c_embed = packed[:, OFF_CEMB:OFF_CEMB + n_cond]
    # forward returns (recon_x, x, means, log_var, c_embed, predClass, c)
    return recon, x, means, log_var, c_embed, pred_class, c


# --------------------------------------------------------------------------
# Pure-JAX reference with the same bf16-matmul numerics (for validation)
# --------------------------------------------------------------------------
def reference_forward(x, c, eps, p):
    f32, bf16 = jnp.float32, jnp.bfloat16

    def mm(a, w):
        return jnp.dot(a.astype(bf16), w.astype(bf16), preferred_element_type=f32)

    c_embed = mm(c, p["w_emb"]) + p["b_emb"]
    h1 = mm(x, p["w1x"]) + mm(c_embed, p["w1c"]) + p["b1"]
    mean = jnp.mean(h1, axis=0, keepdims=True)
    var = jnp.mean(h1 * h1, axis=0, keepdims=True) - mean * mean
    h = (h1 - mean) * jax.lax.rsqrt(var + BN_EPS) * p["gamma"] + p["beta"]
    h = jnp.maximum(h, 0.0)
    h2 = mm(h, p["w2"]) + p["b2"]
    means = mm(h2, p["wm"]) + p["bm"]
    log_var = mm(h2, p["wv"]) + p["bv"]
    z = eps * jnp.exp(0.5 * log_var) + means
    d = jnp.maximum(mm(z, p["wdz"]) + mm(c_embed, p["wdc"]) + p["bd1"], 0.0)
    recon = mm(d, p["wd2"]) + p["bd2"]
    pred = mm(recon, p["wml"]) + p["bml"]
    return recon, means, log_var, c_embed, pred


if __name__ == "__main__":
    B = 64
    n_inputs = 256
    n_latents = 32
    n_cond = 16
    n_cond_in = 8

    key = jax.random.PRNGKey(0)
    k_x, k_c, k_eps, k_params = jax.random.split(key, 4)

    x = jax.random.normal(k_x, (B, n_inputs), jnp.float32)
    c = jax.random.normal(k_c, (B, n_cond_in), jnp.float32)
    eps = jax.random.normal(k_eps, (B, n_latents), jnp.float32)  # torch.randn_like

    params = init_params(k_params, n_inputs, n_latents, n_cond, n_cond_in)
    kparams = pack_params(params)

    r_recon, r_means, r_logvar, r_cemb, r_pred = jax.block_until_ready(
        reference_forward(x, c, eps, params))

    # run once with the whole batch resident (default) and once batch-tiled
    # (exercises the cross-tile global-BN accumulation path)
    for tr in (None, 32):
        outs = multilab_class_vae_forward(x, c, eps, kparams, tile_rows=tr)
        outs = jax.block_until_ready(outs)
        recon_x, x_out, means, log_var, c_embed, pred_class, c_out = outs

        assert recon_x.shape == (B, n_inputs)
        assert means.shape == (B, n_latents)
        assert log_var.shape == (B, n_latents)
        assert c_embed.shape == (B, n_cond)
        assert pred_class.shape == (B, n_cond_in)
        assert x_out.shape == x.shape and c_out.shape == c.shape

        np.testing.assert_allclose(np.asarray(recon_x), np.asarray(r_recon),
                                   rtol=2e-2, atol=2e-2)
        np.testing.assert_allclose(np.asarray(means), np.asarray(r_means),
                                   rtol=2e-2, atol=2e-2)
        np.testing.assert_allclose(np.asarray(log_var), np.asarray(r_logvar),
                                   rtol=2e-2, atol=2e-2)
        np.testing.assert_allclose(np.asarray(c_embed), np.asarray(r_cemb),
                                   rtol=2e-2, atol=2e-2)
        np.testing.assert_allclose(np.asarray(pred_class), np.asarray(r_pred),
                                   rtol=2e-2, atol=2e-2)

    print("KERNEL_OK")
</pallas_src>

<mosaic_0001>
module attributes {stable_mosaic.version = 11 : i64} {
  func.func @fused_vae_kernel(%arg0: i32, %arg1: i32, %arg2: memref<64x256xbf16, #tpu.memory_space<vmem>>, %arg3: memref<64x8xf32, #tpu.memory_space<vmem>>, %arg4: memref<64x32xf32, #tpu.memory_space<vmem>>, %arg5: memref<9x512xf32, #tpu.memory_space<vmem>>, %arg6: memref<8x16xbf16, #tpu.memory_space<vmem>>, %arg7: memref<256x512xbf16, #tpu.memory_space<vmem>>, %arg8: memref<8x512xbf16, #tpu.memory_space<vmem>>, %arg9: memref<512x512xbf16, #tpu.memory_space<vmem>>, %arg10: memref<512x64xbf16, #tpu.memory_space<vmem>>, %arg11: memref<32x512xbf16, #tpu.memory_space<vmem>>, %arg12: memref<8x512xbf16, #tpu.memory_space<vmem>>, %arg13: memref<512x256xbf16, #tpu.memory_space<vmem>>, %arg14: memref<256x8xbf16, #tpu.memory_space<vmem>>, %arg15: memref<64x256xf32, #tpu.memory_space<vmem>>, %arg16: memref<64x128xf32, #tpu.memory_space<vmem>>, %arg17: memref<64x512xf32, #tpu.memory_space<vmem>>, %arg18: memref<1x1024xf32, #tpu.memory_space<vmem>>) attributes {dimension_semantics = [#tpu.dimension_semantics<arbitrary>, #tpu.dimension_semantics<arbitrary>], iteration_bounds = array<i64: 2, 1>, scalar_prefetch = 0 : i64, scratch_operands = 2 : i64, tpu.core_type = #tpu.core_type<tc>, window_params = [{transform_indices = @transform_0, window_bounds = array<i64: 64, 256>}, {transform_indices = @transform_1, window_bounds = array<i64: 64, 8>}, {transform_indices = @transform_2, window_bounds = array<i64: 64, 32>}, {pipeline_mode = #tpu.pipeline_mode<synchronous>, transform_indices = @transform_3, window_bounds = array<i64: 9, 512>}, {pipeline_mode = #tpu.pipeline_mode<synchronous>, transform_indices = @transform_4, window_bounds = array<i64: 8, 16>}, {pipeline_mode = #tpu.pipeline_mode<synchronous>, transform_indices = @transform_5, window_bounds = array<i64: 256, 512>}, {pipeline_mode = #tpu.pipeline_mode<synchronous>, transform_indices = @transform_6, window_bounds = array<i64: 8, 512>}, {pipeline_mode = #tpu.pipeline_mode<synchronous>, transform_indices = @transform_7, window_bounds = array<i64: 512, 512>}, {pipeline_mode = #tpu.pipeline_mode<synchronous>, transform_indices = @transform_8, window_bounds = array<i64: 512, 64>}, {pipeline_mode = #tpu.pipeline_mode<synchronous>, transform_indices = @transform_9, window_bounds = array<i64: 32, 512>}, {pipeline_mode = #tpu.pipeline_mode<synchronous>, transform_indices = @transform_10, window_bounds = array<i64: 8, 512>}, {pipeline_mode = #tpu.pipeline_mode<synchronous>, transform_indices = @transform_11, window_bounds = array<i64: 512, 256>}, {pipeline_mode = #tpu.pipeline_mode<synchronous>, transform_indices = @transform_12, window_bounds = array<i64: 256, 8>}, {transform_indices = @transform_13, window_bounds = array<i64: 64, 256>}, {transform_indices = @transform_14, window_bounds = array<i64: 64, 128>}]} {
    %c64_i32 = arith.constant 64 : i32
    %0 = arith.muli %arg1, %c64_i32 : i32
    %1 = tpu.assume_multiple %0, 8 : i32
    %c0_i32 = arith.constant 0 : i32
    %2 = arith.cmpi eq, %arg0, %c0_i32 : i32
    %3 = arith.extui %2 : i1 to i32
    %c0_i32_0 = arith.constant 0 : i32
    %4 = arith.cmpi ne, %3, %c0_i32_0 : i32
    scf.if %4 {
      %c0 = arith.constant 0 : index
      %c0_2 = arith.constant 0 : index
      %8 = vector.load %arg2[%c0, %c0_2] : memref<64x256xbf16, #tpu.memory_space<vmem>>, vector<64x256xbf16>
      %c0_3 = arith.constant 0 : index
      %c0_4 = arith.constant 0 : index
      %9 = vector.load %arg7[%c0_3, %c0_4] : memref<256x512xbf16, #tpu.memory_space<vmem>>, vector<256x512xbf16>
      %cst = arith.constant dense<0.000000e+00> : vector<64x512xf32>
      %10 = tpu.matmul %8, %9, %cst {dimension_numbers = #tpu.dot_dimension_numbers<[1], [0], [0], [1], [0, 0, 1, 1], [], []>} : vector<64x256xbf16>, vector<256x512xbf16>, vector<64x512xf32> -> vector<64x512xf32>
      %c0_5 = arith.constant 0 : index
      %c0_6 = arith.constant 0 : index
      %11 = vector.load %arg3[%c0_5, %c0_6] : memref<64x8xf32, #tpu.memory_space<vmem>>, vector<64x8xf32>
      %12 = arith.truncf %11 : vector<64x8xf32> to vector<64x8xbf16>
      %c0_7 = arith.constant 0 : index
      %c0_8 = arith.constant 0 : index
      %13 = vector.load %arg8[%c0_7, %c0_8] : memref<8x512xbf16, #tpu.memory_space<vmem>>, vector<8x512xbf16>
      %cst_9 = arith.constant dense<0.000000e+00> : vector<64x512xf32>
      %14 = tpu.matmul %12, %13, %cst_9 {dimension_numbers = #tpu.dot_dimension_numbers<[1], [0], [0], [1], [0, 0, 1, 1], [], []>} : vector<64x8xbf16>, vector<8x512xbf16>, vector<64x512xf32> -> vector<64x512xf32>
      %15 = arith.addf %10, %14 : vector<64x512xf32>
      %c1 = arith.constant 1 : index
      %c0_10 = arith.constant 0 : index
      %16 = vector.load %arg5[%c1, %c0_10] : memref<9x512xf32, #tpu.memory_space<vmem>>, vector<1x512xf32>
      %17 = vector.broadcast %16 : vector<1x512xf32> to vector<64x512xf32>
      %18 = arith.addf %15, %17 : vector<64x512xf32>
      %19 = arith.index_cast %1 : i32 to index
      %c0_11 = arith.constant 0 : index
      %20 = vector.load %arg17[%19, %c0_11] : memref<64x512xf32, #tpu.memory_space<vmem>>, vector<64x512xf32>
      tpu.vector_store %arg17[%19, %c0_11], %18 {strides = array<i32>} : memref<64x512xf32, #tpu.memory_space<vmem>>, vector<64x512xf32>,
      %c0_i32_12 = arith.constant 0 : i32
      %21 = arith.cmpi eq, %arg1, %c0_i32_12 : i32
      %22 = arith.extui %21 : i1 to i32
      %c0_i32_13 = arith.constant 0 : i32
      %23 = arith.cmpi ne, %22, %c0_i32_13 : i32
      scf.if %23 {
        %cst_25 = arith.constant 0.000000e+00 : f32
        %38 = vector.broadcast %cst_25 : f32 to vector<1x1024xf32>
        %c0_26 = arith.constant 0 : index
        %c0_27 = arith.constant 0 : index
        %39 = vector.load %arg18[%c0_26, %c0_27] : memref<1x1024xf32, #tpu.memory_space<vmem>>, vector<1x1024xf32>
        tpu.vector_store %arg18[%c0_26, %c0_27], %38 {strides = array<i32>} : memref<1x1024xf32, #tpu.memory_space<vmem>>, vector<1x1024xf32>,
      } else {
      }
      %c0_14 = arith.constant 0 : index
      %c0_15 = arith.constant 0 : index
      %24 = vector.load %arg18[%c0_14, %c0_15] : memref<1x1024xf32, #tpu.memory_space<vmem>>, vector<1x512xf32>
      %cst_16 = arith.constant dense<0.000000e+00> : vector<512xf32>
      %25 = vector.multi_reduction <add>, %18, %cst_16 [0] : vector<64x512xf32> to vector<512xf32>
      %26 = vector.shape_cast %25 : vector<512xf32> to vector<1x512xf32>
      %27 = arith.addf %24, %26 : vector<1x512xf32>
      %c0_17 = arith.constant 0 : index
      %c0_18 = arith.constant 0 : index
      %28 = vector.load %arg18[%c0_17, %c0_18] : memref<1x1024xf32, #tpu.memory_space<vmem>>, vector<1x512xf32>
      tpu.vector_store %arg18[%c0_17, %c0_18], %27 {strides = array<i32>} : memref<1x1024xf32, #tpu.memory_space<vmem>>, vector<1x512xf32>,
      %c0_19 = arith.constant 0 : index
      %c512 = arith.constant 512 : index
      %29 = vector.load %arg18[%c0_19, %c512] : memref<1x1024xf32, #tpu.memory_space<vmem>>, vector<1x512xf32>
      %30 = arith.mulf %18, %18 : vector<64x512xf32>
      %cst_20 = arith.constant dense<0.000000e+00> : vector<512xf32>
      %31 = vector.multi_reduction <add>, %30, %cst_20 [0] : vector<64x512xf32> to vector<512xf32>
      %32 = vector.shape_cast %31 : vector<512xf32> to vector<1x512xf32>
      %33 = arith.addf %29, %32 : vector<1x512xf32>
      %c0_21 = arith.constant 0 : index
      %c512_22 = arith.constant 512 : index
      %34 = vector.load %arg18[%c0_21, %c512_22] : memref<1x1024xf32, #tpu.memory_space<vmem>>, vector<1x512xf32>
      tpu.vector_store %arg18[%c0_21, %c512_22], %33 {strides = array<i32>} : memref<1x1024xf32, #tpu.memory_space<vmem>>, vector<1x512xf32>,
      %c0_i32_23 = arith.constant 0 : i32
      %35 = arith.cmpi eq, %arg1, %c0_i32_23 : i32
      %36 = arith.extui %35 : i1 to i32
      %c0_i32_24 = arith.constant 0 : i32
      %37 = arith.cmpi ne, %36, %c0_i32_24 : i32
      scf.if %37 {
        %c0_25 = arith.constant 0 : index
        %c0_26 = arith.constant 0 : index
        %38 = vector.load %arg18[%c0_25, %c0_26] : memref<1x1024xf32, #tpu.memory_space<vmem>>, vector<1x512xf32>
        %cst_27 = arith.constant 1.562500e-02 : f32
        %39 = vector.broadcast %cst_27 : f32 to vector<1x512xf32>
        %40 = arith.mulf %38, %39 : vector<1x512xf32>
        %c0_28 = arith.constant 0 : index
        %c512_29 = arith.constant 512 : index
        %41 = vector.load %arg18[%c0_28, %c512_29] : memref<1x1024xf32, #tpu.memory_space<vmem>>, vector<1x512xf32>
        %cst_30 = arith.constant 1.562500e-02 : f32
        %42 = vector.broadcast %cst_30 : f32 to vector<1x512xf32>
        %43 = arith.mulf %41, %42 : vector<1x512xf32>
        %44 = arith.mulf %40, %40 : vector<1x512xf32>
        %45 = arith.subf %43, %44 : vector<1x512xf32>
        %c2 = arith.constant 2 : index
        %c0_31 = arith.constant 0 : index
        %46 = vector.load %arg5[%c2, %c0_31] : memref<9x512xf32, #tpu.memory_space<vmem>>, vector<1x512xf32>
        %c3 = arith.constant 3 : index
        %c0_32 = arith.constant 0 : index
        %47 = vector.load %arg5[%c3, %c0_32] : memref<9x512xf32, #tpu.memory_space<vmem>>, vector<1x512xf32>
        %cst_33 = arith.constant 9.99999974E-6 : f32
        %48 = vector.broadcast %cst_33 : f32 to vector<1x512xf32>
        %49 = arith.addf %45, %48 : vector<1x512xf32>
        %50 = math.rsqrt %49 : vector<1x512xf32>
        %51 = arith.mulf %46, %50 : vector<1x512xf32>
        %52 = arith.mulf %40, %51 : vector<1x512xf32>
        %53 = arith.subf %47, %52 : vector<1x512xf32>
        %c0_34 = arith.constant 0 : index
        %c0_35 = arith.constant 0 : index
        %54 = vector.load %arg18[%c0_34, %c0_35] : memref<1x1024xf32, #tpu.memory_space<vmem>>, vector<1x512xf32>
        tpu.vector_store %arg18[%c0_34, %c0_35], %51 {strides = array<i32>} : memref<1x1024xf32, #tpu.memory_space<vmem>>, vector<1x512xf32>,
        %c0_36 = arith.constant 0 : index
        %c512_37 = arith.constant 512 : index
        %55 = vector.load %arg18[%c0_36, %c512_37] : memref<1x1024xf32, #tpu.memory_space<vmem>>, vector<1x512xf32>
        tpu.vector_store %arg18[%c0_36, %c512_37], %53 {strides = array<i32>} : memref<1x1024xf32, #tpu.memory_space<vmem>>, vector<1x512xf32>,
      } else {
      }
    } else {
    }
    %c1_i32 = arith.constant 1 : i32
    %5 = arith.cmpi eq, %arg0, %c1_i32 : i32
    %6 = arith.extui %5 : i1 to i32
    %c0_i32_1 = arith.constant 0 : i32
    %7 = arith.cmpi ne, %6, %c0_i32_1 : i32
    scf.if %7 {
      %8 = arith.index_cast %1 : i32 to index
      %c0 = arith.constant 0 : index
      %9 = vector.load %arg17[%8, %c0] : memref<64x512xf32, #tpu.memory_space<vmem>>, vector<64x512xf32>
      %c0_2 = arith.constant 0 : index
      %c0_3 = arith.constant 0 : index
      %10 = vector.load %arg18[%c0_2, %c0_3] : memref<1x1024xf32, #tpu.memory_space<vmem>>, vector<1x512xf32>
      %11 = vector.broadcast %10 : vector<1x512xf32> to vector<64x512xf32>
      %12 = arith.mulf %9, %11 : vector<64x512xf32>
      %c0_4 = arith.constant 0 : index
      %c512 = arith.constant 512 : index
      %13 = vector.load %arg18[%c0_4, %c512] : memref<1x1024xf32, #tpu.memory_space<vmem>>, vector<1x512xf32>
      %14 = vector.broadcast %13 : vector<1x512xf32> to vector<64x512xf32>
      %15 = arith.addf %12, %14 : vector<64x512xf32>
      %cst = arith.constant 0.000000e+00 : f32
      %16 = vector.broadcast %cst : f32 to vector<64x512xf32>
      %17 = arith.maximumf %15, %16 : vector<64x512xf32>
      %c0_5 = arith.constant 0 : index
      %c0_6 = arith.constant 0 : index
      %18 = vector.load %arg3[%c0_5, %c0_6] : memref<64x8xf32, #tpu.memory_space<vmem>>, vector<64x8xf32>
      %19 = arith.truncf %18 : vector<64x8xf32> to vector<64x8xbf16>
      %c0_7 = arith.constant 0 : index
      %c0_8 = arith.constant 0 : index
      %20 = vector.load %arg6[%c0_7, %c0_8] : memref<8x16xbf16, #tpu.memory_space<vmem>>, vector<8x16xbf16>
      %cst_9 = arith.constant dense<0.000000e+00> : vector<64x16xf32>
      %21 = tpu.matmul %19, %20, %cst_9 {dimension_numbers = #tpu.dot_dimension_numbers<[1], [0], [0], [1], [0, 0, 1, 1], [], []>} : vector<64x8xbf16>, vector<8x16xbf16>, vector<64x16xf32> -> vector<64x16xf32>
      %c0_10 = arith.constant 0 : index
      %c0_11 = arith.constant 0 : index
      %22 = vector.load %arg5[%c0_10, %c0_11] : memref<9x512xf32, #tpu.memory_space<vmem>>, vector<1x16xf32>
      %23 = vector.broadcast %22 : vector<1x16xf32> to vector<64x16xf32>
      %24 = arith.addf %21, %23 : vector<64x16xf32>
      %25 = arith.truncf %17 : vector<64x512xf32> to vector<64x512xbf16>
      %c0_12 = arith.constant 0 : index
      %c0_13 = arith.constant 0 : index
      %26 = vector.load %arg9[%c0_12, %c0_13] : memref<512x512xbf16, #tpu.memory_space<vmem>>, vector<512x512xbf16>
      %cst_14 = arith.constant dense<0.000000e+00> : vector<64x512xf32>
      %27 = tpu.matmul %25, %26, %cst_14 {dimension_numbers = #tpu.dot_dimension_numbers<[1], [0], [0], [1], [0, 0, 1, 1], [], []>} : vector<64x512xbf16>, vector<512x512xbf16>, vector<64x512xf32> -> vector<64x512xf32>
      %c4 = arith.constant 4 : index
      %c0_15 = arith.constant 0 : index
      %28 = vector.load %arg5[%c4, %c0_15] : memref<9x512xf32, #tpu.memory_space<vmem>>, vector<1x512xf32>
      %29 = vector.broadcast %28 : vector<1x512xf32> to vector<64x512xf32>
      %30 = arith.addf %27, %29 : vector<64x512xf32>
      %31 = arith.truncf %30 : vector<64x512xf32> to vector<64x512xbf16>
      %c0_16 = arith.constant 0 : index
      %c0_17 = arith.constant 0 : index
      %32 = vector.load %arg10[%c0_16, %c0_17] : memref<512x64xbf16, #tpu.memory_space<vmem>>, vector<512x64xbf16>
      %cst_18 = arith.constant dense<0.000000e+00> : vector<64x64xf32>
      %33 = tpu.matmul %31, %32, %cst_18 {dimension_numbers = #tpu.dot_dimension_numbers<[1], [0], [0], [1], [0, 0, 1, 1], [], []>} : vector<64x512xbf16>, vector<512x64xbf16>, vector<64x64xf32> -> vector<64x64xf32>
      %c5 = arith.constant 5 : index
      %c0_19 = arith.constant 0 : index
      %34 = vector.load %arg5[%c5, %c0_19] : memref<9x512xf32, #tpu.memory_space<vmem>>, vector<1x64xf32>
      %35 = vector.broadcast %34 : vector<1x64xf32> to vector<64x64xf32>
      %36 = arith.addf %33, %35 : vector<64x64xf32>
      %37 = vector.extract_strided_slice %36 {offsets = [0, 0], sizes = [64, 32], strides = [1, 1]} : vector<64x64xf32> to vector<64x32xf32>
      %38 = vector.extract_strided_slice %36 {offsets = [0, 32], sizes = [64, 32], strides = [1, 1]} : vector<64x64xf32> to vector<64x32xf32>
      %c0_20 = arith.constant 0 : index
      %c0_21 = arith.constant 0 : index
      %39 = vector.load %arg4[%c0_20, %c0_21] : memref<64x32xf32, #tpu.memory_space<vmem>>, vector<64x32xf32>
      %cst_22 = arith.constant 5.000000e-01 : f32
      %40 = vector.broadcast %cst_22 : f32 to vector<64x32xf32>
      %41 = arith.mulf %40, %38 : vector<64x32xf32>
      %42 = math.exp %41 : vector<64x32xf32>
      %43 = arith.mulf %39, %42 : vector<64x32xf32>
      %44 = arith.addf %43, %37 : vector<64x32xf32>
      %45 = arith.truncf %44 : vector<64x32xf32> to vector<64x32xbf16>
      %c0_23 = arith.constant 0 : index
      %c0_24 = arith.constant 0 : index
      %46 = vector.load %arg11[%c0_23, %c0_24] : memref<32x512xbf16, #tpu.memory_space<vmem>>, vector<32x512xbf16>
      %cst_25 = arith.constant dense<0.000000e+00> : vector<64x512xf32>
      %47 = tpu.matmul %45, %46, %cst_25 {dimension_numbers = #tpu.dot_dimension_numbers<[1], [0], [0], [1], [0, 0, 1, 1], [], []>} : vector<64x32xbf16>, vector<32x512xbf16>, vector<64x512xf32> -> vector<64x512xf32>
      %c0_26 = arith.constant 0 : index
      %c0_27 = arith.constant 0 : index
      %48 = vector.load %arg12[%c0_26, %c0_27] : memref<8x512xbf16, #tpu.memory_space<vmem>>, vector<8x512xbf16>
      %cst_28 = arith.constant dense<0.000000e+00> : vector<64x512xf32>
      %49 = tpu.matmul %19, %48, %cst_28 {dimension_numbers = #tpu.dot_dimension_numbers<[1], [0], [0], [1], [0, 0, 1, 1], [], []>} : vector<64x8xbf16>, vector<8x512xbf16>, vector<64x512xf32> -> vector<64x512xf32>
      %50 = arith.addf %47, %49 : vector<64x512xf32>
      %c6 = arith.constant 6 : index
      %c0_29 = arith.constant 0 : index
      %51 = vector.load %arg5[%c6, %c0_29] : memref<9x512xf32, #tpu.memory_space<vmem>>, vector<1x512xf32>
      %52 = vector.broadcast %51 : vector<1x512xf32> to vector<64x512xf32>
      %53 = arith.addf %50, %52 : vector<64x512xf32>
      %cst_30 = arith.constant 0.000000e+00 : f32
      %54 = vector.broadcast %cst_30 : f32 to vector<64x512xf32>
      %55 = arith.maximumf %53, %54 : vector<64x512xf32>
      %56 = arith.truncf %55 : vector<64x512xf32> to vector<64x512xbf16>
      %c0_31 = arith.constant 0 : index
      %c0_32 = arith.constant 0 : index
      %57 = vector.load %arg13[%c0_31, %c0_32] : memref<512x256xbf16, #tpu.memory_space<vmem>>, vector<512x256xbf16>
      %cst_33 = arith.constant dense<0.000000e+00> : vector<64x256xf32>
      %58 = tpu.matmul %56, %57, %cst_33 {dimension_numbers = #tpu.dot_dimension_numbers<[1], [0], [0], [1], [0, 0, 1, 1], [], []>} : vector<64x512xbf16>, vector<512x256xbf16>, vector<64x256xf32> -> vector<64x256xf32>
      %c7 = arith.constant 7 : index
      %c0_34 = arith.constant 0 : index
      %59 = vector.load %arg5[%c7, %c0_34] : memref<9x512xf32, #tpu.memory_space<vmem>>, vector<1x256xf32>
      %60 = vector.broadcast %59 : vector<1x256xf32> to vector<64x256xf32>
      %61 = arith.addf %58, %60 : vector<64x256xf32>
      %62 = arith.truncf %61 : vector<64x256xf32> to vector<64x256xbf16>
      %c0_35 = arith.constant 0 : index
      %c0_36 = arith.constant 0 : index
      %63 = vector.load %arg14[%c0_35, %c0_36] : memref<256x8xbf16, #tpu.memory_space<vmem>>, vector<256x8xbf16>
      %cst_37 = arith.constant dense<0.000000e+00> : vector<64x8xf32>
      %64 = tpu.matmul %62, %63, %cst_37 {dimension_numbers = #tpu.dot_dimension_numbers<[1], [0], [0], [1], [0, 0, 1, 1], [], []>} : vector<64x256xbf16>, vector<256x8xbf16>, vector<64x8xf32> -> vector<64x8xf32>
      %c8 = arith.constant 8 : index
      %c0_38 = arith.constant 0 : index
      %65 = vector.load %arg5[%c8, %c0_38] : memref<9x512xf32, #tpu.memory_space<vmem>>, vector<1x8xf32>
      %66 = vector.broadcast %65 : vector<1x8xf32> to vector<64x8xf32>
      %67 = arith.addf %64, %66 : vector<64x8xf32>
      %c0_39 = arith.constant 0 : index
      %c0_40 = arith.constant 0 : index
      %68 = vector.load %arg15[%c0_39, %c0_40] : memref<64x256xf32, #tpu.memory_space<vmem>>, vector<64x256xf32>
      tpu.vector_store %arg15[%c0_39, %c0_40], %61 {strides = array<i32>} : memref<64x256xf32, #tpu.memory_space<vmem>>, vector<64x256xf32>,
      %cst_41 = arith.constant 0.000000e+00 : f32
      %69 = vector.broadcast %cst_41 : f32 to vector<64x40xf32>
      %70 = tpu.concatenate %36, %67, %24, %69 in 1 : vector<64x64xf32>, vector<64x8xf32>, vector<64x16xf32>, vector<64x40xf32> -> vector<64x128xf32>
      %c0_42 = arith.constant 0 : index
      %c0_43 = arith.constant 0 : index
      %71 = vector.load %arg16[%c0_42, %c0_43] : memref<64x128xf32, #tpu.memory_space<vmem>>, vector<64x128xf32>
      tpu.vector_store %arg16[%c0_42, %c0_43], %70 {strides = array<i32>} : memref<64x128xf32, #tpu.memory_space<vmem>>, vector<64x128xf32>,
    } else {
    }
    return
  }
  func.func @transform_0(%arg0: i32, %arg1: i32) -> (i32, i32) {
    %c1_i32 = arith.constant 1 : i32
    %0 = arith.subi %c1_i32, %arg0 : i32
    %1 = arith.muli %0, %arg1 : i32
    %c0_i32 = arith.constant 0 : i32
    %c0_i32_0 = arith.constant 0 : i32
    return %1, %c0_i32 : i32, i32
  }
  func.func @transform_1(%arg0: i32, %arg1: i32) -> (i32, i32) {
    %c0_i32 = arith.constant 0 : i32
    %c0_i32_0 = arith.constant 0 : i32
    return %arg1, %c0_i32 : i32, i32
  }
  func.func @transform_2(%arg0: i32, %arg1: i32) -> (i32, i32) {
    %0 = arith.muli %arg0, %arg1 : i32
    %c0_i32 = arith.constant 0 : i32
    %c0_i32_0 = arith.constant 0 : i32
    return %0, %c0_i32 : i32, i32
  }
  func.func @transform_3(%arg0: i32, %arg1: i32) -> (i32, i32) {
    %c0_i32 = arith.constant 0 : i32
    %c0_i32_0 = arith.constant 0 : i32
    %c0_i32_1 = arith.constant 0 : i32
    return %c0_i32, %c0_i32_0 : i32, i32
  }
  func.func @transform_4(%arg0: i32, %arg1: i32) -> (i32, i32) {
    %c0_i32 = arith.constant 0 : i32
    %c0_i32_0 = arith.constant 0 : i32
    %c0_i32_1 = arith.constant 0 : i32
    return %c0_i32, %c0_i32_0 : i32, i32
  }
  func.func @transform_5(%arg0: i32, %arg1: i32) -> (i32, i32) {
    %c0_i32 = arith.constant 0 : i32
    %c0_i32_0 = arith.constant 0 : i32
    %c0_i32_1 = arith.constant 0 : i32
    return %c0_i32, %c0_i32_0 : i32, i32
  }
  func.func @transform_6(%arg0: i32, %arg1: i32) -> (i32, i32) {
    %c0_i32 = arith.constant 0 : i32
    %c0_i32_0 = arith.constant 0 : i32
    %c0_i32_1 = arith.constant 0 : i32
    return %c0_i32, %c0_i32_0 : i32, i32
  }
  func.func @transform_7(%arg0: i32, %arg1: i32) -> (i32, i32) {
    %c0_i32 = arith.constant 0 : i32
    %c0_i32_0 = arith.constant 0 : i32
    %c0_i32_1 = arith.constant 0 : i32
    return %c0_i32, %c0_i32_0 : i32, i32
  }
  func.func @transform_8(%arg0: i32, %arg1: i32) -> (i32, i32) {
    %c0_i32 = arith.constant 0 : i32
    %c0_i32_0 = arith.constant 0 : i32
    %c0_i32_1 = arith.constant 0 : i32
    return %c0_i32, %c0_i32_0 : i32, i32
  }
  func.func @transform_9(%arg0: i32, %arg1: i32) -> (i32, i32) {
    %c0_i32 = arith.constant 0 : i32
    %c0_i32_0 = arith.constant 0 : i32
    %c0_i32_1 = arith.constant 0 : i32
    return %c0_i32, %c0_i32_0 : i32, i32
  }
  func.func @transform_10(%arg0: i32, %arg1: i32) -> (i32, i32) {
    %c0_i32 = arith.constant 0 : i32
    %c0_i32_0 = arith.constant 0 : i32
    %c0_i32_1 = arith.constant 0 : i32
    return %c0_i32, %c0_i32_0 : i32, i32
  }
  func.func @transform_11(%arg0: i32, %arg1: i32) -> (i32, i32) {
    %c0_i32 = arith.constant 0 : i32
    %c0_i32_0 = arith.constant 0 : i32
    %c0_i32_1 = arith.constant 0 : i32
    return %c0_i32, %c0_i32_0 : i32, i32
  }
  func.func @transform_12(%arg0: i32, %arg1: i32) -> (i32, i32) {
    %c0_i32 = arith.constant 0 : i32
    %c0_i32_0 = arith.constant 0 : i32
    %c0_i32_1 = arith.constant 0 : i32
    return %c0_i32, %c0_i32_0 : i32, i32
  }
  func.func @transform_13(%arg0: i32, %arg1: i32) -> (i32, i32) {
    %0 = arith.muli %arg0, %arg1 : i32
    %c0_i32 = arith.constant 0 : i32
    %c0_i32_0 = arith.constant 0 : i32
    return %0, %c0_i32 : i32, i32
  }
  func.func @transform_14(%arg0: i32, %arg1: i32) -> (i32, i32) {
    %0 = arith.muli %arg0, %arg1 : i32
    %c0_i32 = arith.constant 0 : i32
    %c0_i32_0 = arith.constant 0 : i32
    return %0, %c0_i32 : i32, i32
  }
}

</mosaic_0001>

<llo_original>
// kernel: multilab_class_vae_forward.1
$region0: #{multilab_class_vae_forward.1}
  #allocation0 [shape = 'u32[]', space=smem, size = 0x4, offset = 0x4, fixed_abs, tag = 'smem constant byte address 0x4 - core index']
  #allocation1 [shape = 'u32[72,128]{1,0:T(1,128)}', space=vmem, size = 0x9000, scoped, tag = 'internal scratch']
  #allocation2 [shape = 'f32[64,512]{1,0:T(8,128)}', space=vmem, size = 0x20000, scoped, tag = 'scratch operand']
  #allocation3 [shape = 'f32[1,1024]{1,0:T(1,128)}', space=vmem, size = 0x1000, scoped, tag = 'scratch operand']
  %s0 = inlined_call_operand.vmem [shape: bf16[64,256], index: 0, kind: input, shape index: {}]
  %s1 = inlined_call_operand.vmem [shape: f32[64,8], index: 1, kind: input, shape index: {}]
  %s2 = inlined_call_operand.vmem [shape: f32[64,32], index: 2, kind: input, shape index: {}]
  %s3 = inlined_call_operand.vmem [shape: f32[9,512], index: 3, kind: input, shape index: {}]
  %s4 = inlined_call_operand.vmem [shape: bf16[8,16], index: 4, kind: input, shape index: {}]
  %s5 = inlined_call_operand.hbm [shape: bf16[256,512], index: 5, kind: input, shape index: {}]
  %s6 = inlined_call_operand.vmem [shape: bf16[8,512], index: 6, kind: input, shape index: {}]
  %s7 = inlined_call_operand.hbm [shape: bf16[512,512], index: 7, kind: input, shape index: {}]
  %s8 = inlined_call_operand.vmem [shape: bf16[512,64], index: 8, kind: input, shape index: {}]
  %s9 = inlined_call_operand.vmem [shape: bf16[32,512], index: 9, kind: input, shape index: {}]
  %s10 = inlined_call_operand.vmem [shape: bf16[8,512], index: 10, kind: input, shape index: {}]
  %s11 = inlined_call_operand.hbm [shape: bf16[512,256], index: 11, kind: input, shape index: {}]
  %s12 = inlined_call_operand.vmem [shape: bf16[256,8], index: 12, kind: input, shape index: {}]
  %s13 = inlined_call_operand.hbm [shape: f32[64,256], index: 13, kind: output, shape index: {0}]
  %s14 = inlined_call_operand.vmem [shape: f32[64,128], index: 14, kind: output, shape index: {1}]
  %15 = xla_tuple %s13, %s14
  %s16 = sld [smem:[#allocation0]]
  $region121: #{multilab_class_vae_forward.1} parent=0
    _
  %s18 = ssub.s32 1, %s16
  %s19 = scalar_select 0, %s18, %s16
  $region1: #{multilab_class_vae_forward.1} parent=0
    #allocation4 [shape = 'u8[262144]{0}', space=vmem, size = 0x40000, scoped, tag = 'input window, operand 5, single buffered']
    #allocation5 [shape = 's32[2]{0}', space=sflag, size = 0x8, scoped, tag = 'scoped memory for multilab_class_vae_forward.1']
    #allocation6 [shape = 's32[2]{0}', space=sflag, size = 0x8, scoped, tag = 'scoped memory for multilab_class_vae_forward.1']
    #allocation7 [shape = 'u8[524288]{0}', space=vmem, size = 0x80000, scoped, tag = 'input window, operand 7, single buffered']
    #allocation8 [shape = 's32[1]{0}', space=sflag, size = 0x4, scoped, tag = 'scoped memory for multilab_class_vae_forward.1']
    #allocation9 [shape = 'u8[262144]{0}', space=vmem, size = 0x40000, scoped, tag = 'input window, operand 11, single buffered']
    #allocation10 [shape = 'u8[131072]{0}', space=vmem, size = 0x20000, scoped, tag = 'output window, operand 0']
    %20 = vsyncpa [#allocation5], 0
    %21 = vsyncpa [#allocation8], 0
    %22 = vsyncpa [#allocation6], 0
    %s23 = scalar_lea.sflag [#allocation6], 1
    %24 = vsyncpa %s23, 0
    loop: start=0, step=1, limit=4
    $region2: #{multilab_class_vae_forward.1} parent=1 // loop_pre_header
      _
    $region3: #{multilab_class_vae_forward.1} parent=1 // loop_header
      %s26 = sphi 0, %s30
      %p27 = scmp.ge.s32.totalorder %s26, 4
      %s33 = sphi 0, %s45
      %s34 = sphi 0, %s41
      %s35 = sphi 0, %s33
      %s36 = sphi 0, %s34
      %s37 = sphi 0, %s35
      %s38 = sphi 0, %s36
      %s52 = sphi 0, %s54
      %s55 = sphi 0, %s52
      %s56 = sphi 0, %s55
      %s72 = sphi 0, %s56
      %s78 = sphi 0, %s80
      %s81 = sphi 0, %s78
      %s82 = sphi 0, %s81
      %s98 = sphi 0, %s82
      %s106 = sphi 0, %s108
      %s109 = sphi 0, %s106
      %s110 = sphi 0, %s109
      %s126 = sphi 0, %s110
      %s130 = sphi 0, %s130
      %s132 = sphi 0, %s130
      %s133 = sphi 0, %s132
      %s147 = sphi 0, %s133
      %s151 = sphi 0, %s151
      %s153 = sphi 0, %s151
      %s154 = sphi 0, %s153
      %s168 = sphi 0, %s154
      %s172 = sphi 0, %s172
      %s174 = sphi 0, %s172
      %s175 = sphi 0, %s174
      %s189 = sphi 0, %s175
      %s193 = sphi 0, %s193
      %s195 = sphi 0, %s193
      %s196 = sphi 0, %s195
      %s210 = sphi 0, %s196
      %s214 = sphi 0, %s214
      %s216 = sphi 0, %s214
      %s217 = sphi 0, %s216
      %s231 = sphi 0, %s217
      %s235 = sphi 0, %s235
      %s237 = sphi 0, %s235
      %s238 = sphi 0, %s237
      %s252 = sphi 0, %s238
      %s256 = sphi 0, %s256
      %s258 = sphi 0, %s256
      %s259 = sphi 0, %s258
      %s273 = sphi 0, %s259
      %s277 = sphi 0, %s277
      %s279 = sphi 0, %s277
      %s280 = sphi 0, %s279
      %s294 = sphi 0, %s280
      %s298 = sphi 0, %s298
      %s300 = sphi 0, %s298
      %s301 = sphi 0, %s300
      %s315 = sphi 0, %s301
      %s319 = sphi 0, %s319
      %s321 = sphi 0, %s319
      %s322 = sphi 0, %s321
      %s336 = sphi 0, %s322
      %s344 = sphi 0, %s346
      %s347 = sphi 0, %s344
      %s348 = sphi 0, %s347
      %s364 = sphi 0, %s348
      %s372 = sphi 0, %s374
      %s375 = sphi 0, %s372
      %s376 = sphi 0, %s375
      %s392 = sphi 0, %s376
    $region4: #{multilab_class_vae_forward.1} parent=1 // loop_header_branch
      %29 = sbr.rel (%p27) target = $region8
    $region5: #{multilab_class_vae_forward.1} parent=1 // loop_body
      %s31 = ssub.s32 %s26, 1
      %s32 = ssub.s32 %s26, 2
      %s39 = sadd.s32 1, %s34
      %p40 = scmp.ge.s32.totalorder %s39, 1
      %s41 = scalar_select %p40, 0, %s39
      %s42 = sadd.s32 1, %s33
      %s43 = scalar_select %p40, %s42, %s33
      %p44 = scmp.ge.s32.totalorder %s43, 2
      %s45 = scalar_select %p44, 0, %s43
      %s46 = ssub.s32 1, %s33
      %s47 = smul.u32 %s46, %s34
      %s48 = ssub.s32 1, %s45
      %s49 = smul.u32 %s48, %s41
      %s50 = ssub.s32 %s47, %s49
      %p51 = scmp.eq.s32.totalorder %s50, 0
      %s53 = sadd.s32 %s52, 1
      %s54 = scalar_select %p51, %s52, %s53
      %p57 = pneg %p51
      %p58 = scmp.eq.s32.totalorder %s26, 1
      %p59 = por %p57, %p58
      %p60 = scmp.ne.s32.totalorder %s52, %s55
      %p61 = scmp.eq.s32.totalorder %s26, 0
      %p62 = por %p60, %p61
      %p63 = scmp.ne.s32.totalorder %s52, %s55
      %p64 = scmp.eq.s32.totalorder %s31, 1
      %p65 = por %p63, %p64
      %p66 = scmp.ne.s32.totalorder %s55, %s56
      %p67 = scmp.eq.s32.totalorder %s31, 0
      %p68 = por %p66, %p67
      %p69 = scmp.ne.s32.totalorder %s55, %s56
      %p70 = scmp.eq.s32.totalorder %s32, 1
      %p71 = por %p69, %p70
      %p73 = scmp.ne.s32.totalorder %s56, %s72
      %p74 = scmp.eq.s32.totalorder %s32, 0
      %p75 = por %p73, %p74
      %s76 = ssub.s32 %s34, %s41
      %p77 = scmp.eq.s32.totalorder %s76, 0
      %s79 = sadd.s32 %s78, 1
      %s80 = scalar_select %p77, %s78, %s79
      %p83 = pneg %p77
      %p84 = scmp.eq.s32.totalorder %s26, 1
      %p85 = por %p83, %p84
      %p86 = scmp.ne.s32.totalorder %s78, %s81
      %p87 = scmp.eq.s32.totalorder %s26, 0
      %p88 = por %p86, %p87
      %p89 = scmp.ne.s32.totalorder %s78, %s81
      %p90 = scmp.eq.s32.totalorder %s31, 1
      %p91 = por %p89, %p90
      %p92 = scmp.ne.s32.totalorder %s81, %s82
      %p93 = scmp.eq.s32.totalorder %s31, 0
      %p94 = por %p92, %p93
      %p95 = scmp.ne.s32.totalorder %s81, %s82
      %p96 = scmp.eq.s32.totalorder %s32, 1
      %p97 = por %p95, %p96
      %p99 = scmp.ne.s32.totalorder %s82, %s98
      %p100 = scmp.eq.s32.totalorder %s32, 0
      %p101 = por %p99, %p100
      %s102 = smul.u32 %s33, %s34
      %s103 = smul.u32 %s45, %s41
      %s104 = ssub.s32 %s102, %s103
      %p105 = scmp.eq.s32.totalorder %s104, 0
      %s107 = sadd.s32 %s106, 1
      %s108 = scalar_select %p105, %s106, %s107
      %p111 = pneg %p105
      %p112 = scmp.eq.s32.totalorder %s26, 1
      %p113 = por %p111, %p112
      %p114 = scmp.ne.s32.totalorder %s106, %s109
      %p115 = scmp.eq.s32.totalorder %s26, 0
      %p116 = por %p114, %p115
      %p117 = scmp.ne.s32.totalorder %s106, %s109
      %p118 = scmp.eq.s32.totalorder %s31, 1
      %p119 = por %p117, %p118
      %p120 = scmp.ne.s32.totalorder %s109, %s110
      %p121 = scmp.eq.s32.totalorder %s31, 0
      %p122 = por %p120, %p121
      %p123 = scmp.ne.s32.totalorder %s109, %s110
      %p124 = scmp.eq.s32.totalorder %s32, 1
      %p125 = por %p123, %p124
      %p127 = scmp.ne.s32.totalorder %s110, %s126
      %p128 = scmp.eq.s32.totalorder %s32, 0
      %p129 = por %p127, %p128
      %s131 = sadd.s32 %s130, 1
      %p134 = scmp.eq.s32.totalorder %s26, 1
      %p135 = scmp.ne.s32.totalorder %s130, %s132
      %p136 = scmp.eq.s32.totalorder %s26, 0
      %p137 = por %p135, %p136
      %p138 = scmp.ne.s32.totalorder %s130, %s132
      %p139 = scmp.eq.s32.totalorder %s31, 1
      %p140 = por %p138, %p139
      %p141 = scmp.ne.s32.totalorder %s132, %s133
      %p142 = scmp.eq.s32.totalorder %s31, 0
      %p143 = por %p141, %p142
      %p144 = scmp.ne.s32.totalorder %s132, %s133
      %p145 = scmp.eq.s32.totalorder %s32, 1
      %p146 = por %p144, %p145
      %p148 = scmp.ne.s32.totalorder %s133, %s147
      %p149 = scmp.eq.s32.totalorder %s32, 0
      %p150 = por %p148, %p149
      %s152 = sadd.s32 %s151, 1
      %p155 = scmp.eq.s32.totalorder %s26, 1
      %p156 = scmp.ne.s32.totalorder %s151, %s153
      %p157 = scmp.eq.s32.totalorder %s26, 0
      %p158 = por %p156, %p157
      %p159 = scmp.ne.s32.totalorder %s151, %s153
      %p160 = scmp.eq.s32.totalorder %s31, 1
      %p161 = por %p159, %p160
      %p162 = scmp.ne.s32.totalorder %s153, %s154
      %p163 = scmp.eq.s32.totalorder %s31, 0
      %p164 = por %p162, %p163
      %p165 = scmp.ne.s32.totalorder %s153, %s154
      %p166 = scmp.eq.s32.totalorder %s32, 1
      %p167 = por %p165, %p166
      %p169 = scmp.ne.s32.totalorder %s154, %s168
      %p170 = scmp.eq.s32.totalorder %s32, 0
      %p171 = por %p169, %p170
      %s173 = sadd.s32 %s172, 1
      %p176 = scmp.eq.s32.totalorder %s26, 1
      %p177 = scmp.ne.s32.totalorder %s172, %s174
      %p178 = scmp.eq.s32.totalorder %s26, 0
      %p179 = por %p177, %p178
      %p180 = scmp.ne.s32.totalorder %s172, %s174
      %p181 = scmp.eq.s32.totalorder %s31, 1
      %p182 = por %p180, %p181
      %p183 = scmp.ne.s32.totalorder %s174, %s175
      %p184 = scmp.eq.s32.totalorder %s31, 0
      %p185 = por %p183, %p184
      %p186 = scmp.ne.s32.totalorder %s174, %s175
      %p187 = scmp.eq.s32.totalorder %s32, 1
      %p188 = por %p186, %p187
      %p190 = scmp.ne.s32.totalorder %s175, %s189
      %p191 = scmp.eq.s32.totalorder %s32, 0
      %p192 = por %p190, %p191
      %s194 = sadd.s32 %s193, 1
      %p197 = scmp.eq.s32.totalorder %s26, 1
      %p198 = scmp.ne.s32.totalorder %s193, %s195
      %p199 = scmp.eq.s32.totalorder %s26, 0
      %p200 = por %p198, %p199
      %p201 = scmp.ne.s32.totalorder %s193, %s195
      %p202 = scmp.eq.s32.totalorder %s31, 1
      %p203 = por %p201, %p202
      %p204 = scmp.ne.s32.totalorder %s195, %s196
      %p205 = scmp.eq.s32.totalorder %s31, 0
      %p206 = por %p204, %p205
      %p207 = scmp.ne.s32.totalorder %s195, %s196
      %p208 = scmp.eq.s32.totalorder %s32, 1
      %p209 = por %p207, %p208
      %p211 = scmp.ne.s32.totalorder %s196, %s210
      %p212 = scmp.eq.s32.totalorder %s32, 0
      %p213 = por %p211, %p212
      %s215 = sadd.s32 %s214, 1
      %p218 = scmp.eq.s32.totalorder %s26, 1
      %p219 = scmp.ne.s32.totalorder %s214, %s216
      %p220 = scmp.eq.s32.totalorder %s26, 0
      %p221 = por %p219, %p220
      %p222 = scmp.ne.s32.totalorder %s214, %s216
      %p223 = scmp.eq.s32.totalorder %s31, 1
      %p224 = por %p222, %p223
      %p225 = scmp.ne.s32.totalorder %s216, %s217
      %p226 = scmp.eq.s32.totalorder %s31, 0
      %p227 = por %p225, %p226
      %p228 = scmp.ne.s32.totalorder %s216, %s217
      %p229 = scmp.eq.s32.totalorder %s32, 1
      %p230 = por %p228, %p229
      %p232 = scmp.ne.s32.totalorder %s217, %s231
      %p233 = scmp.eq.s32.totalorder %s32, 0
      %p234 = por %p232, %p233
      %s236 = sadd.s32 %s235, 1
      %p239 = scmp.eq.s32.totalorder %s26, 1
      %p240 = scmp.ne.s32.totalorder %s235, %s237
      %p241 = scmp.eq.s32.totalorder %s26, 0
      %p242 = por %p240, %p241
      %p243 = scmp.ne.s32.totalorder %s235, %s237
      %p244 = scmp.eq.s32.totalorder %s31, 1
      %p245 = por %p243, %p244
      %p246 = scmp.ne.s32.totalorder %s237, %s238
      %p247 = scmp.eq.s32.totalorder %s31, 0
      %p248 = por %p246, %p247
      %p249 = scmp.ne.s32.totalorder %s237, %s238
      %p250 = scmp.eq.s32.totalorder %s32, 1
      %p251 = por %p249, %p250
      %p253 = scmp.ne.s32.totalorder %s238, %s252
      %p254 = scmp.eq.s32.totalorder %s32, 0
      %p255 = por %p253, %p254
      %s257 = sadd.s32 %s256, 1
      %p260 = scmp.eq.s32.totalorder %s26, 1
      %p261 = scmp.ne.s32.totalorder %s256, %s258
      %p262 = scmp.eq.s32.totalorder %s26, 0
      %p263 = por %p261, %p262
      %p264 = scmp.ne.s32.totalorder %s256, %s258
      %p265 = scmp.eq.s32.totalorder %s31, 1
      %p266 = por %p264, %p265
      %p267 = scmp.ne.s32.totalorder %s258, %s259
      %p268 = scmp.eq.s32.totalorder %s31, 0
      %p269 = por %p267, %p268
      %p270 = scmp.ne.s32.totalorder %s258, %s259
      %p271 = scmp.eq.s32.totalorder %s32, 1
      %p272 = por %p270, %p271
      %p274 = scmp.ne.s32.totalorder %s259, %s273
      %p275 = scmp.eq.s32.totalorder %s32, 0
      %p276 = por %p274, %p275
      %s278 = sadd.s32 %s277, 1
      %p281 = scmp.eq.s32.totalorder %s26, 1
      %p282 = scmp.ne.s32.totalorder %s277, %s279
      %p283 = scmp.eq.s32.totalorder %s26, 0
      %p284 = por %p282, %p283
      %p285 = scmp.ne.s32.totalorder %s277, %s279
      %p286 = scmp.eq.s32.totalorder %s31, 1
      %p287 = por %p285, %p286
      %p288 = scmp.ne.s32.totalorder %s279, %s280
      %p289 = scmp.eq.s32.totalorder %s31, 0
      %p290 = por %p288, %p289
      %p291 = scmp.ne.s32.totalorder %s279, %s280
      %p292 = scmp.eq.s32.totalorder %s32, 1
      %p293 = por %p291, %p292
      %p295 = scmp.ne.s32.totalorder %s280, %s294
      %p296 = scmp.eq.s32.totalorder %s32, 0
      %p297 = por %p295, %p296
      %s299 = sadd.s32 %s298, 1
      %p302 = scmp.eq.s32.totalorder %s26, 1
      %p303 = scmp.ne.s32.totalorder %s298, %s300
      %p304 = scmp.eq.s32.totalorder %s26, 0
      %p305 = por %p303, %p304
      %p306 = scmp.ne.s32.totalorder %s298, %s300
      %p307 = scmp.eq.s32.totalorder %s31, 1
      %p308 = por %p306, %p307
      %p309 = scmp.ne.s32.totalorder %s300, %s301
      %p310 = scmp.eq.s32.totalorder %s31, 0
      %p311 = por %p309, %p310
      %p312 = scmp.ne.s32.totalorder %s300, %s301
      %p313 = scmp.eq.s32.totalorder %s32, 1
      %p314 = por %p312, %p313
      %p316 = scmp.ne.s32.totalorder %s301, %s315
      %p317 = scmp.eq.s32.totalorder %s32, 0
      %p318 = por %p316, %p317
      %s320 = sadd.s32 %s319, 1
      %p323 = scmp.eq.s32.totalorder %s26, 1
      %p324 = scmp.ne.s32.totalorder %s319, %s321
      %p325 = scmp.eq.s32.totalorder %s26, 0
      %p326 = por %p324, %p325
      %p327 = scmp.ne.s32.totalorder %s319, %s321
      %p328 = scmp.eq.s32.totalorder %s31, 1
      %p329 = por %p327, %p328
      %p330 = scmp.ne.s32.totalorder %s321, %s322
      %p331 = scmp.eq.s32.totalorder %s31, 0
      %p332 = por %p330, %p331
      %p333 = scmp.ne.s32.totalorder %s321, %s322
      %p334 = scmp.eq.s32.totalorder %s32, 1
      %p335 = por %p333, %p334
      %p337 = scmp.ne.s32.totalorder %s322, %s336
      %p338 = scmp.eq.s32.totalorder %s32, 0
      %p339 = por %p337, %p338
      %s340 = smul.u32 %s33, %s34
      %s341 = smul.u32 %s45, %s41
      %s342 = ssub.s32 %s340, %s341
      %p343 = scmp.eq.s32.totalorder %s342, 0
      %s345 = sadd.s32 %s344, 1
      %s346 = scalar_select %p343, %s344, %s345
      %p349 = pneg %p343
      %p350 = scmp.eq.s32.totalorder %s26, 1
      %p351 = por %p349, %p350
      %p352 = scmp.ne.s32.totalorder %s344, %s347
      %p353 = scmp.eq.s32.totalorder %s26, 0
      %p354 = por %p352, %p353
      %p355 = scmp.ne.s32.totalorder %s344, %s347
      %p356 = scmp.eq.s32.totalorder %s31, 1
      %p357 = por %p355, %p356
      %p358 = scmp.ne.s32.totalorder %s347, %s348
      %p359 = scmp.eq.s32.totalorder %s31, 0
      %p360 = por %p358, %p359
      %p361 = scmp.ne.s32.totalorder %s347, %s348
      %p362 = scmp.eq.s32.totalorder %s32, 1
      %p363 = por %p361, %p362
      %p365 = scmp.ne.s32.totalorder %s348, %s364
      %p366 = scmp.eq.s32.totalorder %s32, 0
      %p367 = por %p365, %p366
      %s368 = smul.u32 %s33, %s34
      %s369 = smul.u32 %s45, %s41
      %s370 = ssub.s32 %s368, %s369
      %p371 = scmp.eq.s32.totalorder %s370, 0
      %s373 = sadd.s32 %s372, 1
      %s374 = scalar_select %p371, %s372, %s373
      %p377 = pneg %p371
      %p378 = scmp.eq.s32.totalorder %s26, 1
      %p379 = por %p377, %p378
      %p380 = scmp.ne.s32.totalorder %s372, %s375
      %p381 = scmp.eq.s32.totalorder %s26, 0
      %p382 = por %p380, %p381
      %p383 = scmp.ne.s32.totalorder %s372, %s375
      %p384 = scmp.eq.s32.totalorder %s31, 1
      %p385 = por %p383, %p384
      %p386 = scmp.ne.s32.totalorder %s375, %s376
      %p387 = scmp.eq.s32.totalorder %s31, 0
      %p388 = por %p386, %p387
      %p389 = scmp.ne.s32.totalorder %s375, %s376
      %p390 = scmp.eq.s32.totalorder %s32, 1
      %p391 = por %p389, %p390
      %p393 = scmp.ne.s32.totalorder %s376, %s392
      %p394 = scmp.eq.s32.totalorder %s32, 0
      %p395 = por %p393, %p394
      %p396 = scmp.le.s32.totalorder 1, %s26
      %p397 = scmp.lt.s32.totalorder %s26, 3
      %p398 = pnand %p396, %p397
      %p399 = pneg %p398
      // Predicated region
      $region9: #{multilab_class_vae_forward.1} parent=5 // pred_check
        _
      $region10: #{multilab_class_vae_forward.1} parent=5 // pred_check_branch
        %401 = sbr.rel (%p398) target = $region12
      $region11: #{multilab_class_vae_forward.1} parent=5 // pred_region
        %s402 = ssub.s32 %s26, 1
        // Predicated region
        $region13: #{multilab_class_vae_forward.1} parent=11 // pred_check
          %p403 = pneg %p94
        $region14: #{multilab_class_vae_forward.1} parent=11 // pred_check_branch
          %405 = sbr.rel (%p403) target = $region16
        $region15: #{multilab_class_vae_forward.1} parent=11 // pred_region
          %s406 = smul.u32 8, %s36
          %p407 = scmp.lt.s32.totalorder %s406, 7
          %s408 = scalar_select %p407, %s406, 7
          %s409 = smul.addr %s408, 8
          %s410 = scalar_lea.vmem %s1, %s409
          %s411 = smul.u32 8, %s36
        $region16: #{multilab_class_vae_forward.1} parent=11 // pred_fallthru
          _
        // Predicated region
        $region17: #{multilab_class_vae_forward.1} parent=11 // pred_check
          %p412 = pneg %p143
        $region18: #{multilab_class_vae_forward.1} parent=11 // pred_check_branch
          %414 = sbr.rel (%p412) target = $region20
        $region19: #{multilab_class_vae_forward.1} parent=11 // pred_region
          _
        $region20: #{multilab_class_vae_forward.1} parent=11 // pred_fallthru
          _
        // Predicated region
        $region21: #{multilab_class_vae_forward.1} parent=11 // pred_check
          %p415 = pneg %p164
        $region22: #{multilab_class_vae_forward.1} parent=11 // pred_check_branch
          %417 = sbr.rel (%p415) target = $region24
        $region23: #{multilab_class_vae_forward.1} parent=11 // pred_region
          _
        $region24: #{multilab_class_vae_forward.1} parent=11 // pred_fallthru
          _
        // Predicated region
        $region25: #{multilab_class_vae_forward.1} parent=11 // pred_check
          %p418 = pneg %p185
        $region26: #{multilab_class_vae_forward.1} parent=11 // pred_check_branch
          %420 = sbr.rel (%p418) target = $region28
        $region27: #{multilab_class_vae_forward.1} parent=11 // pred_region
          %422 = vsyncadd [#allocation5], 0
          %s423 = sshll.u32 %s5, 4
          %s424 = int_to_ptr.hbm [resolvable:$true] %s423
          %s425 = sshll.u32 [#allocation4], 4
          %s426 = int_to_ptr.vmem [resolvable:$true] %s425
          %431 = dma.hbm_to_vmem [thread:$0]  %s424, 8192, %s426, [#allocation5], 256, 256, 16
        $region28: #{multilab_class_vae_forward.1} parent=11 // pred_fallthru
          _
        // Predicated region
        $region29: #{multilab_class_vae_forward.1} parent=11 // pred_check
          %p432 = pneg %p206
        $region30: #{multilab_class_vae_forward.1} parent=11 // pred_check_branch
          %434 = sbr.rel (%p432) target = $region32
        $region31: #{multilab_class_vae_forward.1} parent=11 // pred_region
          _
        $region32: #{multilab_class_vae_forward.1} parent=11 // pred_fallthru
          _
        // Predicated region
        $region33: #{multilab_class_vae_forward.1} parent=11 // pred_check
          %p435 = pneg %p227
        $region34: #{multilab_class_vae_forward.1} parent=11 // pred_check_branch
          %437 = sbr.rel (%p435) target = $region36
        $region35: #{multilab_class_vae_forward.1} parent=11 // pred_region
          %439 = vsyncadd [#allocation8], 0
          %s440 = sshll.u32 %s7, 4
          %s441 = int_to_ptr.hbm [resolvable:$true] %s440
          %s442 = sshll.u32 [#allocation7], 4
          %s443 = int_to_ptr.vmem [resolvable:$true] %s442
          %448 = dma.hbm_to_vmem [thread:$0]  %s441, 16384, %s443, [#allocation8], 256, 256, 16
        $region36: #{multilab_class_vae_forward.1} parent=11 // pred_fallthru
          _
        // Predicated region
        $region37: #{multilab_class_vae_forward.1} parent=11 // pred_check
          %p449 = pneg %p248
        $region38: #{multilab_class_vae_forward.1} parent=11 // pred_check_branch
          %451 = sbr.rel (%p449) target = $region40
        $region39: #{multilab_class_vae_forward.1} parent=11 // pred_region
          _
        $region40: #{multilab_class_vae_forward.1} parent=11 // pred_fallthru
          _
        // Predicated region
        $region41: #{multilab_class_vae_forward.1} parent=11 // pred_check
          %p452 = pneg %p269
        $region42: #{multilab_class_vae_forward.1} parent=11 // pred_check_branch
          %454 = sbr.rel (%p452) target = $region44
        $region43: #{multilab_class_vae_forward.1} parent=11 // pred_region
          _
        $region44: #{multilab_class_vae_forward.1} parent=11 // pred_fallthru
          _
        // Predicated region
        $region45: #{multilab_class_vae_forward.1} parent=11 // pred_check
          %p455 = pneg %p290
        $region46: #{multilab_class_vae_forward.1} parent=11 // pred_check_branch
          %457 = sbr.rel (%p455) target = $region48
        $region47: #{multilab_class_vae_forward.1} parent=11 // pred_region
          _
        $region48: #{multilab_class_vae_forward.1} parent=11 // pred_fallthru
          _
        // Predicated region
        $region49: #{multilab_class_vae_forward.1} parent=11 // pred_check
          %p458 = pneg %p311
        $region50: #{multilab_class_vae_forward.1} parent=11 // pred_check_branch
          %460 = sbr.rel (%p458) target = $region52
        $region51: #{multilab_class_vae_forward.1} parent=11 // pred_region
          %462 = vsyncadd [#allocation8], 0
          %s463 = sshll.u32 %s11, 4
          %s464 = int_to_ptr.hbm [resolvable:$true] %s463
          %s465 = sshll.u32 [#allocation9], 4
          %s466 = int_to_ptr.vmem [resolvable:$true] %s465
          %471 = dma.hbm_to_vmem [thread:$0]  %s464, 8192, %s466, [#allocation8], 128, 128, 8
        $region52: #{multilab_class_vae_forward.1} parent=11 // pred_fallthru
          _
        // Predicated region
        $region53: #{multilab_class_vae_forward.1} parent=11 // pred_check
          %p472 = pneg %p332
        $region54: #{multilab_class_vae_forward.1} parent=11 // pred_check_branch
          %474 = sbr.rel (%p472) target = $region56
        $region55: #{multilab_class_vae_forward.1} parent=11 // pred_region
          _
        $region56: #{multilab_class_vae_forward.1} parent=11 // pred_fallthru
          _
      $region12: #{multilab_class_vae_forward.1} parent=5 // pred_fallthru
        _
      %p475 = scmp.lt.s32.totalorder %s26, 2
      // Predicated region
      $region57: #{multilab_class_vae_forward.1} parent=5 // pred_check
        %p476 = pneg %p475
      $region58: #{multilab_class_vae_forward.1} parent=5 // pred_check_branch
        %478 = sbr.rel (%p476) target = $region60
      $region59: #{multilab_class_vae_forward.1} parent=5 // pred_region
        // Predicated region
        $region61: #{multilab_class_vae_forward.1} parent=59 // pred_check
          %p479 = pneg %p62
        $region62: #{multilab_class_vae_forward.1} parent=59 // pred_check_branch
          %481 = sbr.rel (%p479) target = $region64
        $region63: #{multilab_class_vae_forward.1} parent=59 // pred_region
          %s482 = ssub.s32 1, %s33
          %s483 = smul.u32 %s482, %s34
          %s484 = smul.u32 8, %s483
          %p485 = scmp.lt.s32.totalorder %s484, 7
          %s486 = scalar_select %p485, %s484, 7
          %s487 = smul.addr %s486, 2
          %s488 = smul.addr %s487, 4
          %s489 = scalar_lea.vmem %s0, %s488
          %s490 = ssub.s32 1, %s33
          %s491 = smul.u32 %s490, %s34
          %s492 = smul.u32 8, %s491
        $region64: #{multilab_class_vae_forward.1} parent=59 // pred_fallthru
          _
        // Predicated region
        $region65: #{multilab_class_vae_forward.1} parent=59 // pred_check
          %p493 = pneg %p116
        $region66: #{multilab_class_vae_forward.1} parent=59 // pred_check_branch
          %495 = sbr.rel (%p493) target = $region68
        $region67: #{multilab_class_vae_forward.1} parent=59 // pred_region
          %s496 = smul.u32 %s33, %s34
          %s497 = smul.u32 8, %s496
          %p498 = scmp.lt.s32.totalorder %s497, 7
          %s499 = scalar_select %p498, %s497, 7
          %s500 = smul.addr %s499, 8
          %s501 = scalar_lea.vmem %s2, %s500
          %s502 = smul.u32 %s33, %s34
          %s503 = smul.u32 8, %s502
        $region68: #{multilab_class_vae_forward.1} parent=59 // pred_fallthru
          _
      $region60: #{multilab_class_vae_forward.1} parent=5 // pred_fallthru
        _
      %p504 = scmp.le.s32.totalorder 1, %s26
      %p505 = scmp.lt.s32.totalorder %s26, 3
      %p506 = pnand %p504, %p505
      %p507 = pneg %p506
      // Predicated region
      $region69: #{multilab_class_vae_forward.1} parent=5 // pred_check
        _
      $region70: #{multilab_class_vae_forward.1} parent=5 // pred_check_branch
        %509 = sbr.rel (%p506) target = $region72
      $region71: #{multilab_class_vae_forward.1} parent=5 // pred_region
        %s510 = ssub.s32 %s26, 1
        // Predicated region
        $region73: #{multilab_class_vae_forward.1} parent=71 // pred_check
          %p511 = pneg %p185
        $region74: #{multilab_class_vae_forward.1} parent=71 // pred_check_branch
          %513 = sbr.rel (%p511) target = $region76
        $region75: #{multilab_class_vae_forward.1} parent=71 // pred_region
          %515 = dma.done [#allocation5], 8192
        $region76: #{multilab_class_vae_forward.1} parent=71 // pred_fallthru
          _
        // Predicated region
        $region77: #{multilab_class_vae_forward.1} parent=71 // pred_check
          %p516 = pneg %p227
        $region78: #{multilab_class_vae_forward.1} parent=71 // pred_check_branch
          %518 = sbr.rel (%p516) target = $region80
        $region79: #{multilab_class_vae_forward.1} parent=71 // pred_region
          %520 = dma.done [#allocation8], 16384
        $region80: #{multilab_class_vae_forward.1} parent=71 // pred_fallthru
          _
        // Predicated region
        $region81: #{multilab_class_vae_forward.1} parent=71 // pred_check
          %p521 = pneg %p311
        $region82: #{multilab_class_vae_forward.1} parent=71 // pred_check_branch
          %523 = sbr.rel (%p521) target = $region84
        $region83: #{multilab_class_vae_forward.1} parent=71 // pred_region
          %525 = dma.done [#allocation8], 8192
        $region84: #{multilab_class_vae_forward.1} parent=71 // pred_fallthru
          _
        %s526 = ssub.s32 1, %s35
        %s527 = smul.u32 %s526, %s36
        %s528 = smul.u32 8, %s527
        %p529 = scmp.lt.s32.totalorder %s528, 7
        %s530 = scalar_select %p529, %s528, 7
        %s531 = smul.addr %s530, 2
        %s532 = smul.addr %s531, 4
        %s533 = scalar_lea.vmem %s0, %s532
        %p534 = pneg %p68
        %p535 = pneg %p65
        %s536 = smul.u32 8, %s36
        %p537 = scmp.lt.s32.totalorder %s536, 7
        %s538 = scalar_select %p537, %s536, 7
        %s539 = smul.addr %s538, 8
        %s540 = scalar_lea.vmem %s1, %s539
        %p541 = pneg %p94
        %p542 = pneg %p91
        %s543 = smul.u32 %s35, %s36
        %s544 = smul.u32 8, %s543
        %p545 = scmp.lt.s32.totalorder %s544, 7
        %s546 = scalar_select %p545, %s544, 7
        %s547 = smul.addr %s546, 8
        %s548 = scalar_lea.vmem %s2, %s547
        %p549 = pneg %p122
        %p550 = pneg %p119
        %p551 = pneg %p143
        %p552 = pneg %p140
        %p553 = pneg %p164
        %p554 = pneg %p161
        %p555 = pneg %p185
        %p556 = pneg %p182
        %p557 = pneg %p206
        %p558 = pneg %p203
        %p559 = pneg %p227
        %p560 = pneg %p224
        %p561 = pneg %p248
        %p562 = pneg %p245
        %p563 = pneg %p269
        %p564 = pneg %p266
        %p565 = pneg %p290
        %p566 = pneg %p287
        %p567 = pneg %p311
        %p568 = pneg %p308
        %p569 = pneg %p332
        %p570 = pneg %p329
        %p571 = pneg %p360
        %p572 = pneg %p357
        %s573 = sand.u32 %s347, 1
        %s574 = scalar_lea.sflag [#allocation6], %s573
        %s575 = sand.u32 %s347, 1
        %s576 = smul.addr %s575, 128
        %s577 = scalar_lea.vmem [#allocation10], %s576
        %p578 = pneg %p388
        %p579 = pneg %p385
        %s580 = smul.u32 %s35, %s36
        %s581 = smul.u32 8, %s580
        %p582 = scmp.lt.s32.totalorder %s581, 7
        %s583 = scalar_select %p582, %s581, 7
        %s584 = smul.addr %s583, 8
        %s585 = scalar_lea.vmem %s14, %s584
        %s586 = ssub.s32 1, %s35
        %s587 = smul.u32 %s586, %s36
        %s588 = smul.u32 8, %s587
        %p589 = scmp.lt.s32.totalorder %s588, 7
        %s590 = scalar_select %p589, %s588, 7
        %s591 = smul.addr %s590, 2
        %s592 = smul.addr %s591, 4
        %s593 = scalar_lea.vmem %s0, %s592
        %s594 = ssub.s32 1, %s35
        %s595 = smul.u32 %s594, %s36
        %s596 = smul.u32 8, %s595
        %s597 = smul.u32 8, %s36
        %p598 = scmp.lt.s32.totalorder %s597, 7
        %s599 = scalar_select %p598, %s597, 7
        %s600 = smul.addr %s599, 8
        %s601 = scalar_lea.vmem %s1, %s600
        %s602 = smul.u32 8, %s36
        %s603 = smul.u32 %s35, %s36
        %s604 = smul.u32 8, %s603
        %p605 = scmp.lt.s32.totalorder %s604, 7
        %s606 = scalar_select %p605, %s604, 7
        %s607 = smul.addr %s606, 8
        %s608 = scalar_lea.vmem %s2, %s607
        %s609 = smul.u32 %s35, %s36
        %s610 = smul.u32 8, %s609
        %s611 = smul.u32 %s35, %s36
        %s612 = smul.u32 8, %s611
        %s613 = smul.u32 %s35, %s36
        %s614 = smul.u32 8, %s613
        %p615 = scmp.lt.s32.totalorder %s614, 7
        %s616 = scalar_select %p615, %s614, 7
        %s617 = smul.addr %s616, 8
        %s618 = scalar_lea.vmem %s14, %s617
        %s619 = smul.u32 %s35, %s36
        %s620 = smul.u32 8, %s619
        %s622 = smul.u32 %s36, 64
        %p623 = scmp.eq.s32.totalorder %s35, 0
        // Predicated region
        $region85: #{multilab_class_vae_forward.1} parent=71 // pred_check
          %p624 = pneg %p623
        $region86: #{multilab_class_vae_forward.1} parent=71 // pred_check_branch
          %626 = sbr.rel (%p624) target = $region88
        $region87: #{multilab_class_vae_forward.1} parent=71 // pred_region
          %v627 = vld [vmem:[%s593] sm:$0xff]
          %v628 = vld [vmem:[%s593 + $0x8] sm:$0xff]
          %v629 = vld [vmem:[%s593 + $0x10] sm:$0xff]
          %v630 = vld [vmem:[%s593 + $0x18] sm:$0xff]
          %v631 = vld [vmem:[%s593 + $0x20] sm:$0xff]
          %v632 = vld [vmem:[%s593 + $0x28] sm:$0xff]
          %v633 = vld [vmem:[%s593 + $0x30] sm:$0xff]
          %v634 = vld [vmem:[%s593 + $0x38] sm:$0xff]
          %v635 = vld [vmem:[#allocation4] sm:$0xff]
          %v636 = vld [vmem:[#allocation4 + $0x8] sm:$0xff]
          %v637 = vld [vmem:[#allocation4 + $0x10] sm:$0xff]
          %v638 = vld [vmem:[#allocation4 + $0x18] sm:$0xff]
          %v639 = vld [vmem:[#allocation4 + $0x20] sm:$0xff]
          %v640 = vld [vmem:[#allocation4 + $0x28] sm:$0xff]
          %v641 = vld [vmem:[#allocation4 + $0x30] sm:$0xff]
          %v642 = vld [vmem:[#allocation4 + $0x38] sm:$0xff]
          %v643 = vld [vmem:[#allocation4 + $0x40] sm:$0xff]
          %v644 = vld [vmem:[#allocation4 + $0x48] sm:$0xff]
          %v645 = vld [vmem:[#allocation4 + $0x50] sm:$0xff]
          %v646 = vld [vmem:[#allocation4 + $0x58] sm:$0xff]
          %v647 = vld [vmem:[#allocation4 + $0x60] sm:$0xff]
          %v648 = vld [vmem:[#allocation4 + $0x68] sm:$0xff]
          %v649 = vld [vmem:[#allocation4 + $0x70] sm:$0xff]
          %v650 = vld [vmem:[#allocation4 + $0x78] sm:$0xff]
          %v651 = vld [vmem:[#allocation4 + $0x80] sm:$0xff]
          %v652 = vld [vmem:[#allocation4 + $0x88] sm:$0xff]
          %v653 = vld [vmem:[#allocation4 + $0x90] sm:$0xff]
          %v654 = vld [vmem:[#allocation4 + $0x98] sm:$0xff]
          %v655 = vld [vmem:[#allocation4 + $0xa0] sm:$0xff]
          %v656 = vld [vmem:[#allocation4 + $0xa8] sm:$0xff]
          %v657 = vld [vmem:[#allocation4 + $0xb0] sm:$0xff]
          %v658 = vld [vmem:[#allocation4 + $0xb8] sm:$0xff]
          %v659 = vld [vmem:[#allocation4 + $0xc0] sm:$0xff]
          %v660 = vld [vmem:[#allocation4 + $0xc8] sm:$0xff]
          %v661 = vld [vmem:[#allocation4 + $0xd0] sm:$0xff]
          %v662 = vld [vmem:[#allocation4 + $0xd8] sm:$0xff]
          %v663 = vld [vmem:[#allocation4 + $0xe0] sm:$0xff]
          %v664 = vld [vmem:[#allocation4 + $0xe8] sm:$0xff]
          %v665 = vld [vmem:[#allocation4 + $0xf0] sm:$0xff]
          %v666 = vld [vmem:[#allocation4 + $0xf8] sm:$0xff]
          %v667 = vld [vmem:[#allocation4 + $0x100] sm:$0xff]
          %v668 = vld [vmem:[#allocation4 + $0x108] sm:$0xff]
          %v669 = vld [vmem:[#allocation4 + $0x110] sm:$0xff]
          %v670 = vld [vmem:[#allocation4 + $0x118] sm:$0xff]
          %v671 = vld [vmem:[#allocation4 + $0x120] sm:$0xff]
          %v672 = vld [vmem:[#allocation4 + $0x128] sm:$0xff]
          %v673 = vld [vmem:[#allocation4 + $0x130] sm:$0xff]
          %v674 = vld [vmem:[#allocation4 + $0x138] sm:$0xff]
          %v675 = vld [vmem:[#allocation4 + $0x140] sm:$0xff]
          %v676 = vld [vmem:[#allocation4 + $0x148] sm:$0xff]
          %v677 = vld [vmem:[#allocation4 + $0x150] sm:$0xff]
          %v678 = vld [vmem:[#allocation4 + $0x158] sm:$0xff]
          %v679 = vld [vmem:[#allocation4 + $0x160] sm:$0xff]
          %v680 = vld [vmem:[#allocation4 + $0x168] sm:$0xff]
          %v681 = vld [vmem:[#allocation4 + $0x170] sm:$0xff]
          %v682 = vld [vmem:[#allocation4 + $0x178] sm:$0xff]
          %v683 = vld [vmem:[#allocation4 + $0x180] sm:$0xff]
          %v684 = vld [vmem:[#allocation4 + $0x188] sm:$0xff]
          %v685 = vld [vmem:[#allocation4 + $0x190] sm:$0xff]
          %v686 = vld [vmem:[#allocation4 + $0x198] sm:$0xff]
          %v687 = vld [vmem:[#allocation4 + $0x1a0] sm:$0xff]
          %v688 = vld [vmem:[#allocation4 + $0x1a8] sm:$0xff]
          %v689 = vld [vmem:[#allocation4 + $0x1b0] sm:$0xff]
          %v690 = vld [vmem:[#allocation4 + $0x1b8] sm:$0xff]
          %v691 = vld [vmem:[#allocation4 + $0x1c0] sm:$0xff]
          %v692 = vld [vmem:[#allocation4 + $0x1c8] sm:$0xff]
          %v693 = vld [vmem:[#allocation4 + $0x1d0] sm:$0xff]
          %v694 = vld [vmem:[#allocation4 + $0x1d8] sm:$0xff]
          %v695 = vld [vmem:[#allocation4 + $0x1e0] sm:$0xff]
          %v696 = vld [vmem:[#allocation4 + $0x1e8] sm:$0xff]
          %v697 = vld [vmem:[#allocation4 + $0x1f0] sm:$0xff]
          %v698 = vld [vmem:[#allocation4 + $0x1f8] sm:$0xff]
          %v699 = vld [vmem:[%s601] sm:$0xff]
          %v700 = vld [vmem:[%s601 + $0x8] sm:$0xff]
          %v701 = vld [vmem:[%s601 + $0x10] sm:$0xff]
          %v702 = vld [vmem:[%s601 + $0x18] sm:$0xff]
          %v703 = vld [vmem:[%s601 + $0x20] sm:$0xff]
          %v704 = vld [vmem:[%s601 + $0x28] sm:$0xff]
          %v705 = vld [vmem:[%s601 + $0x30] sm:$0xff]
          %v706 = vld [vmem:[%s601 + $0x38] sm:$0xff]
          %v707 = vpack.c.bf16 %v700, %v699
          %v708 = vpack.c.bf16 %v702, %v701
          %v709 = vpack.c.bf16 %v704, %v703
          %v710 = vpack.c.bf16 %v706, %v705
          %v711 = vld [vmem:[%s6] sm:$0xff]
          %v712 = vld [vmem:[%s6 + $0x8] sm:$0xff]
          %v715 = vunpack.c.l.b16 %v711
          %v716 = vunpack.c.h.b16 %v711
          %v717 = vunpack.c.l.b16 %v712
          %v718 = vunpack.c.h.b16 %v712
          %v719 = vpack.c.b16 %v715, %v715
          %v720 = vpack.c.b16 %v716, %v716
          %v721 = vpack.c.b16 %v717, %v717
          %v722 = vpack.c.b16 %v718, %v718
          %vm723 = vcmask 64512
          %v725 = vsel %vm723, %v707, 0
          %v728 = vsel %vm723, %v708, 0
          %v731 = vsel %vm723, %v709, 0
          %v734 = vsel %vm723, %v710, 0
          %vm736 = vcmask 1043456
          %v738 = vsel %vm736, %v719, 0
          %v741 = vsel %vm736, %v720, 0
          %v744 = vsel %vm736, %v721, 0
          %v747 = vsel %vm736, %v722, 0
          %749 = vmatpush.bf16.msra.mxu0 0
          %750 = vmatpush.bf16.msra.mxu0 0
          %751 = vmatpush.bf16.msra.mxu0 0
          %752 = vmatpush.bf16.msra.mxu0 0
          %753 = vmatpush.bf16.msra.mxu0 0
          %754 = vmatpush.bf16.msra.mxu0 0
          %755 = vmatpush.bf16.msra.mxu0 0
          %756 = vmatpush.bf16.msra.mxu0 %v738
          %757 = vmatmul.bf16.gmra.mxu0 %v725
          %v758 = vpop.f32.mrf.mxu0
          %v759 = vadd.f32 0.0, %v758
          %v760 = vpop.f32.mrf.mxu0
          %v761 = vadd.f32 0.0, %v760
          %762 = vmatmul.bf16.gmra.mxu0 %v728
          %v763 = vpop.f32.mrf.mxu0
          %v764 = vadd.f32 0.0, %v763
          %v765 = vpop.f32.mrf.mxu0
          %v766 = vadd.f32 0.0, %v765
          %767 = vmatmul.bf16.gmra.mxu0 %v731
          %v768 = vpop.f32.mrf.mxu0
          %v769 = vadd.f32 0.0, %v768
          %v770 = vpop.f32.mrf.mxu0
          %v771 = vadd.f32 0.0, %v770
          %772 = vmatmul.bf16.gmra.mxu0 %v734
          %v773 = vpop.f32.mrf.mxu0
          %v774 = vadd.f32 0.0, %v773
          %v775 = vpop.f32.mrf.mxu0
          %v776 = vadd.f32 0.0, %v775
          %777 = vdwg.mxu0
          %778 = vmatpush.bf16.msra.mxu0 0
          %779 = vmatpush.bf16.msra.mxu0 0
          %780 = vmatpush.bf16.msra.mxu0 0
          %781 = vmatpush.bf16.msra.mxu0 0
          %782 = vmatpush.bf16.msra.mxu0 0
          %783 = vmatpush.bf16.msra.mxu0 0
          %784 = vmatpush.bf16.msra.mxu0 0
          %785 = vmatpush.bf16.msra.mxu0 %v741
          %786 = vmatmul.bf16.gmra.mxu0 %v725
          %v787 = vpop.f32.mrf.mxu0
          %v788 = vadd.f32 0.0, %v787
          %v789 = vpop.f32.mrf.mxu0
          %v790 = vadd.f32 0.0, %v789
          %791 = vmatmul.bf16.gmra.mxu0 %v728
          %v792 = vpop.f32.mrf.mxu0
          %v793 = vadd.f32 0.0, %v792
          %v794 = vpop.f32.mrf.mxu0
          %v795 = vadd.f32 0.0, %v794
          %796 = vmatmul.bf16.gmra.mxu0 %v731
          %v797 = vpop.f32.mrf.mxu0
          %v798 = vadd.f32 0.0, %v797
          %v799 = vpop.f32.mrf.mxu0
          %v800 = vadd.f32 0.0, %v799
          %801 = vmatmul.bf16.gmra.mxu0 %v734
          %v802 = vpop.f32.mrf.mxu0
          %v803 = vadd.f32 0.0, %v802
          %v804 = vpop.f32.mrf.mxu0
          %v805 = vadd.f32 0.0, %v804
          %806 = vdwg.mxu0
          %807 = vmatpush.bf16.msra.mxu0 0
          %808 = vmatpush.bf16.msra.mxu0 0
          %809 = vmatpush.bf16.msra.mxu0 0
          %810 = vmatpush.bf16.msra.mxu0 0
          %811 = vmatpush.bf16.msra.mxu0 0
          %812 = vmatpush.bf16.msra.mxu0 0
          %813 = vmatpush.bf16.msra.mxu0 0
          %814 = vmatpush.bf16.msra.mxu0 %v744
          %815 = vmatmul.bf16.gmra.mxu0 %v725
          %v816 = vpop.f32.mrf.mxu0
          %v817 = vadd.f32 0.0, %v816
          %v818 = vpop.f32.mrf.mxu0
          %v819 = vadd.f32 0.0, %v818
          %820 = vmatmul.bf16.gmra.mxu0 %v728
          %v821 = vpop.f32.mrf.mxu0
          %v822 = vadd.f32 0.0, %v821
          %v823 = vpop.f32.mrf.mxu0
          %v824 = vadd.f32 0.0, %v823
          %825 = vmatmul.bf16.gmra.mxu0 %v731
          %v826 = vpop.f32.mrf.mxu0
          %v827 = vadd.f32 0.0, %v826
          %v828 = vpop.f32.mrf.mxu0
          %v829 = vadd.f32 0.0, %v828
          %830 = vmatmul.bf16.gmra.mxu0 %v734
          %v831 = vpop.f32.mrf.mxu0
          %v832 = vadd.f32 0.0, %v831
          %v833 = vpop.f32.mrf.mxu0
          %v834 = vadd.f32 0.0, %v833
          %835 = vdwg.mxu0
          %836 = vmatpush.bf16.msra.mxu0 0
          %837 = vmatpush.bf16.msra.mxu0 0
          %838 = vmatpush.bf16.msra.mxu0 0
          %839 = vmatpush.bf16.msra.mxu0 0
          %840 = vmatpush.bf16.msra.mxu0 0
          %841 = vmatpush.bf16.msra.mxu0 0
          %842 = vmatpush.bf16.msra.mxu0 0
          %843 = vmatpush.bf16.msra.mxu0 %v747
          %844 = vmatmul.bf16.gmra.mxu0 %v725
          %v845 = vpop.f32.mrf.mxu0
          %v846 = vadd.f32 0.0, %v845
          %v847 = vpop.f32.mrf.mxu0
          %v848 = vadd.f32 0.0, %v847
          %849 = vmatmul.bf16.gmra.mxu0 %v728
          %v850 = vpop.f32.mrf.mxu0
          %v851 = vadd.f32 0.0, %v850
          %v852 = vpop.f32.mrf.mxu0
          %v853 = vadd.f32 0.0, %v852
          %854 = vmatmul.bf16.gmra.mxu0 %v731
          %v855 = vpop.f32.mrf.mxu0
          %v856 = vadd.f32 0.0, %v855
          %v857 = vpop.f32.mrf.mxu0
          %v858 = vadd.f32 0.0, %v857
          %859 = vmatmul.bf16.gmra.mxu0 %v734
          %v860 = vpop.f32.mrf.mxu0
          %v861 = vadd.f32 0.0, %v860
          %v862 = vpop.f32.mrf.mxu0
          %v863 = vadd.f32 0.0, %v862
          %864 = vdwg.mxu0
          %v873 = vunpack.c.l.b16 %v627
          %v874 = vunpack.c.h.b16 %v627
          %v875 = vunpack.c.l.b16 %v628
          %v876 = vunpack.c.h.b16 %v628
          %v877 = vunpack.c.l.b16 %v629
          %v878 = vunpack.c.h.b16 %v629
          %v879 = vunpack.c.l.b16 %v630
          %v880 = vunpack.c.h.b16 %v630
          %v881 = vunpack.c.l.b16 %v631
          %v882 = vunpack.c.h.b16 %v631
          %v883 = vunpack.c.l.b16 %v632
          %v884 = vunpack.c.h.b16 %v632
          %v885 = vunpack.c.l.b16 %v633
          %v886 = vunpack.c.h.b16 %v633
          %v887 = vunpack.c.l.b16 %v634
          %v888 = vunpack.c.h.b16 %v634
          %v889 = vpack.c.b16 %v875, %v873
          %v890 = vpack.c.b16 %v876, %v874
          %v891 = vpack.c.b16 %v879, %v877
          %v892 = vpack.c.b16 %v880, %v878
          %v893 = vpack.c.b16 %v883, %v881
          %v894 = vpack.c.b16 %v884, %v882
          %v895 = vpack.c.b16 %v887, %v885
          %v896 = vpack.c.b16 %v888, %v886
          %v969 = vunpack.c.l.b16 %v635
          %v970 = vunpack.c.h.b16 %v635
          %v971 = vunpack.c.l.b16 %v636
          %v972 = vunpack.c.h.b16 %v636
          %v973 = vunpack.c.l.b16 %v637
          %v974 = vunpack.c.h.b16 %v637
          %v975 = vunpack.c.l.b16 %v638
          %v976 = vunpack.c.h.b16 %v638
          %v977 = vunpack.c.l.b16 %v639
          %v978 = vunpack.c.h.b16 %v639
          %v979 = vunpack.c.l.b16 %v640
          %v980 = vunpack.c.h.b16 %v640
          %v981 = vunpack.c.l.b16 %v641
          %v982 = vunpack.c.h.b16 %v641
          %v983 = vunpack.c.l.b16 %v642
          %v984 = vunpack.c.h.b16 %v642
          %v985 = vunpack.c.l.b16 %v643
          %v986 = vunpack.c.h.b16 %v643
          %v987 = vunpack.c.l.b16 %v644
          %v988 = vunpack.c.h.b16 %v644
          %v989 = vunpack.c.l.b16 %v645
          %v990 = vunpack.c.h.b16 %v645
          %v991 = vunpack.c.l.b16 %v646
          %v992 = vunpack.c.h.b16 %v646
          %v993 = vunpack.c.l.b16 %v647
          %v994 = vunpack.c.h.b16 %v647
          %v995 = vunpack.c.l.b16 %v648
          %v996 = vunpack.c.h.b16 %v648
          %v997 = vunpack.c.l.b16 %v649
          %v998 = vunpack.c.h.b16 %v649
          %v999 = vunpack.c.l.b16 %v650
          %v1000 = vunpack.c.h.b16 %v650
          %v1001 = vunpack.c.l.b16 %v651
          %v1002 = vunpack.c.h.b16 %v651
          %v1003 = vunpack.c.l.b16 %v652
          %v1004 = vunpack.c.h.b16 %v652
          %v1005 = vunpack.c.l.b16 %v653
          %v1006 = vunpack.c.h.b16 %v653
          %v1007 = vunpack.c.l.b16 %v654
          %v1008 = vunpack.c.h.b16 %v654
          %v1009 = vunpack.c.l.b16 %v655
          %v1010 = vunpack.c.h.b16 %v655
          %v1011 = vunpack.c.l.b16 %v656
          %v1012 = vunpack.c.h.b16 %v656
          %v1013 = vunpack.c.l.b16 %v657
          %v1014 = vunpack.c.h.b16 %v657
          %v1015 = vunpack.c.l.b16 %v658
          %v1016 = vunpack.c.h.b16 %v658
          %v1017 = vunpack.c.l.b16 %v659
          %v1018 = vunpack.c.h.b16 %v659
          %v1019 = vunpack.c.l.b16 %v660
          %v1020 = vunpack.c.h.b16 %v660
          %v1021 = vunpack.c.l.b16 %v661
          %v1022 = vunpack.c.h.b16 %v661
          %v1023 = vunpack.c.l.b16 %v662
          %v1024 = vunpack.c.h.b16 %v662
          %v1025 = vunpack.c.l.b16 %v663
          %v1026 = vunpack.c.h.b16 %v663
          %v1027 = vunpack.c.l.b16 %v664
          %v1028 = vunpack.c.h.b16 %v664
          %v1029 = vunpack.c.l.b16 %v665
          %v1030 = vunpack.c.h.b16 %v665
          %v1031 = vunpack.c.l.b16 %v666
          %v1032 = vunpack.c.h.b16 %v666
          %v1033 = vunpack.c.l.b16 %v667
          %v1034 = vunpack.c.h.b16 %v667
          %v1035 = vunpack.c.l.b16 %v668
          %v1036 = vunpack.c.h.b16 %v668
          %v1037 = vunpack.c.l.b16 %v669
          %v1038 = vunpack.c.h.b16 %v669
          %v1039 = vunpack.c.l.b16 %v670
          %v1040 = vunpack.c.h.b16 %v670
          %v1041 = vunpack.c.l.b16 %v671
          %v1042 = vunpack.c.h.b16 %v671
          %v1043 = vunpack.c.l.b16 %v672
          %v1044 = vunpack.c.h.b16 %v672
          %v1045 = vunpack.c.l.b16 %v673
          %v1046 = vunpack.c.h.b16 %v673
          %v1047 = vunpack.c.l.b16 %v674
          %v1048 = vunpack.c.h.b16 %v674
          %v1049 = vunpack.c.l.b16 %v675
          %v1050 = vunpack.c.h.b16 %v675
          %v1051 = vunpack.c.l.b16 %v676
          %v1052 = vunpack.c.h.b16 %v676
          %v1053 = vunpack.c.l.b16 %v677
          %v1054 = vunpack.c.h.b16 %v677
          %v1055 = vunpack.c.l.b16 %v678
          %v1056 = vunpack.c.h.b16 %v678
          %v1057 = vunpack.c.l.b16 %v679
          %v1058 = vunpack.c.h.b16 %v679
          %v1059 = vunpack.c.l.b16 %v680
          %v1060 = vunpack.c.h.b16 %v680
          %v1061 = vunpack.c.l.b16 %v681
          %v1062 = vunpack.c.h.b16 %v681
          %v1063 = vunpack.c.l.b16 %v682
          %v1064 = vunpack.c.h.b16 %v682
          %v1065 = vunpack.c.l.b16 %v683
          %v1066 = vunpack.c.h.b16 %v683
          %v1067 = vunpack.c.l.b16 %v684
          %v1068 = vunpack.c.h.b16 %v684
          %v1069 = vunpack.c.l.b16 %v685
          %v1070 = vunpack.c.h.b16 %v685
          %v1071 = vunpack.c.l.b16 %v686
          %v1072 = vunpack.c.h.b16 %v686
          %v1073 = vunpack.c.l.b16 %v687
          %v1074 = vunpack.c.h.b16 %v687
          %v1075 = vunpack.c.l.b16 %v688
          %v1076 = vunpack.c.h.b16 %v688
          %v1077 = vunpack.c.l.b16 %v689
          %v1078 = vunpack.c.h.b16 %v689
          %v1079 = vunpack.c.l.b16 %v690
          %v1080 = vunpack.c.h.b16 %v690
          %v1081 = vunpack.c.l.b16 %v691
          %v1082 = vunpack.c.h.b16 %v691
          %v1083 = vunpack.c.l.b16 %v692
          %v1084 = vunpack.c.h.b16 %v692
          %v1085 = vunpack.c.l.b16 %v693
          %v1086 = vunpack.c.h.b16 %v693
          %v1087 = vunpack.c.l.b16 %v694
          %v1088 = vunpack.c.h.b16 %v694
          %v1089 = vunpack.c.l.b16 %v695
          %v1090 = vunpack.c.h.b16 %v695
          %v1091 = vunpack.c.l.b16 %v696
          %v1092 = vunpack.c.h.b16 %v696
          %v1093 = vunpack.c.l.b16 %v697
          %v1094 = vunpack.c.h.b16 %v697
          %v1095 = vunpack.c.l.b16 %v698
          %v1096 = vunpack.c.h.b16 %v698
          %v1097 = vpack.c.b16 %v973, %v969
          %v1098 = vpack.c.b16 %v974, %v970
          %v1099 = vpack.c.b16 %v975, %v971
          %v1100 = vpack.c.b16 %v976, %v972
          %v1101 = vpack.c.b16 %v981, %v977
          %v1102 = vpack.c.b16 %v982, %v978
          %v1103 = vpack.c.b16 %v983, %v979
          %v1104 = vpack.c.b16 %v984, %v980
          %v1105 = vpack.c.b16 %v989, %v985
          %v1106 = vpack.c.b16 %v990, %v986
          %v1107 = vpack.c.b16 %v991, %v987
          %v1108 = vpack.c.b16 %v992, %v988
          %v1109 = vpack.c.b16 %v997, %v993
          %v1110 = vpack.c.b16 %v998, %v994
          %v1111 = vpack.c.b16 %v999, %v995
          %v1112 = vpack.c.b16 %v1000, %v996
          %v1113 = vpack.c.b16 %v1005, %v1001
          %v1114 = vpack.c.b16 %v1006, %v1002
          %v1115 = vpack.c.b16 %v1007, %v1003
          %v1116 = vpack.c.b16 %v1008, %v1004
          %v1117 = vpack.c.b16 %v1013, %v1009
          %v1118 = vpack.c.b16 %v1014, %v1010
          %v1119 = vpack.c.b16 %v1015, %v1011
          %v1120 = vpack.c.b16 %v1016, %v1012
          %v1121 = vpack.c.b16 %v1021, %v1017
          %v1122 = vpack.c.b16 %v1022, %v1018
          %v1123 = vpack.c.b16 %v1023, %v1019
          %v1124 = vpack.c.b16 %v1024, %v1020
          %v1125 = vpack.c.b16 %v1029, %v1025
          %v1126 = vpack.c.b16 %v1030, %v1026
          %v1127 = vpack.c.b16 %v1031, %v1027
          %v1128 = vpack.c.b16 %v1032, %v1028
          %v1129 = vpack.c.b16 %v1037, %v1033
          %v1130 = vpack.c.b16 %v1038, %v1034
          %v1131 = vpack.c.b16 %v1039, %v1035
          %v1132 = vpack.c.b16 %v1040, %v1036
          %v1133 = vpack.c.b16 %v1045, %v1041
          %v1134 = vpack.c.b16 %v1046, %v1042
          %v1135 = vpack.c.b16 %v1047, %v1043
          %v1136 = vpack.c.b16 %v1048, %v1044
          %v1137 = vpack.c.b16 %v1053, %v1049
          %v1138 = vpack.c.b16 %v1054, %v1050
          %v1139 = vpack.c.b16 %v1055, %v1051
          %v1140 = vpack.c.b16 %v1056, %v1052
          %v1141 = vpack.c.b16 %v1061, %v1057
          %v1142 = vpack.c.b16 %v1062, %v1058
          %v1143 = vpack.c.b16 %v1063, %v1059
          %v1144 = vpack.c.b16 %v1064, %v1060
          %v1145 = vpack.c.b16 %v1069, %v1065
          %v1146 = vpack.c.b16 %v1070, %v1066
          %v1147 = vpack.c.b16 %v1071, %v1067
          %v1148 = vpack.c.b16 %v1072, %v1068
          %v1149 = vpack.c.b16 %v1077, %v1073
          %v1150 = vpack.c.b16 %v1078, %v1074
          %v1151 = vpack.c.b16 %v1079, %v1075
          %v1152 = vpack.c.b16 %v1080, %v1076
          %v1153 = vpack.c.b16 %v1085, %v1081
          %v1154 = vpack.c.b16 %v1086, %v1082
          %v1155 = vpack.c.b16 %v1087, %v1083
          %v1156 = vpack.c.b16 %v1088, %v1084
          %v1157 = vpack.c.b16 %v1093, %v1089
          %v1158 = vpack.c.b16 %v1094, %v1090
          %v1159 = vpack.c.b16 %v1095, %v1091
          %v1160 = vpack.c.b16 %v1096, %v1092
          %1225 = vmatpush.bf16.msra.mxu0 %v1125
          %1226 = vmatpush.bf16.msra.mxu0 %v1121
          %1227 = vmatpush.bf16.msra.mxu0 %v1117
          %1228 = vmatpush.bf16.msra.mxu0 %v1113
          %1229 = vmatpush.bf16.msra.mxu0 %v1109
          %1230 = vmatpush.bf16.msra.mxu0 %v1105
          %1231 = vmatpush.bf16.msra.mxu0 %v1101
          %1232 = vmatpush.bf16.msra.mxu0 %v1097
          %1233 = vmatmul.bf16.gmra.mxu0 %v889
          %v1234 = vpop.f32.mrf.mxu0
          %v1235 = vadd.f32 %v759, %v1234
          %v1236 = vpop.f32.mrf.mxu0
          %v1237 = vadd.f32 %v761, %v1236
          %1238 = vmatmul.bf16.gmra.mxu0 %v891
          %v1239 = vpop.f32.mrf.mxu0
          %v1240 = vadd.f32 %v764, %v1239
          %v1241 = vpop.f32.mrf.mxu0
          %v1242 = vadd.f32 %v766, %v1241
          %1243 = vmatmul.bf16.gmra.mxu0 %v893
          %v1244 = vpop.f32.mrf.mxu0
          %v1245 = vadd.f32 %v769, %v1244
          %v1246 = vpop.f32.mrf.mxu0
          %v1247 = vadd.f32 %v771, %v1246
          %1248 = vmatmul.bf16.gmra.mxu0 %v895
          %v1249 = vpop.f32.mrf.mxu0
          %v1250 = vadd.f32 %v774, %v1249
          %v1251 = vpop.f32.mrf.mxu0
          %v1252 = vadd.f32 %v776, %v1251
          %1253 = vdwg.mxu0
          %1254 = vmatpush.bf16.msra.mxu0 %v1157
          %1255 = vmatpush.bf16.msra.mxu0 %v1153
          %1256 = vmatpush.bf16.msra.mxu0 %v1149
          %1257 = vmatpush.bf16.msra.mxu0 %v1145
          %1258 = vmatpush.bf16.msra.mxu0 %v1141
          %1259 = vmatpush.bf16.msra.mxu0 %v1137
          %1260 = vmatpush.bf16.msra.mxu0 %v1133
          %1261 = vmatpush.bf16.msra.mxu0 %v1129
          %1262 = vmatmul.bf16.gmra.mxu0 %v890
          %v1263 = vpop.f32.mrf.mxu0
          %v1264 = vadd.f32 %v1235, %v1263
          %v1265 = vpop.f32.mrf.mxu0
          %v1266 = vadd.f32 %v1237, %v1265
          %1267 = vmatmul.bf16.gmra.mxu0 %v892
          %v1268 = vpop.f32.mrf.mxu0
          %v1269 = vadd.f32 %v1240, %v1268
          %v1270 = vpop.f32.mrf.mxu0
          %v1271 = vadd.f32 %v1242, %v1270
          %1272 = vmatmul.bf16.gmra.mxu0 %v894
          %v1273 = vpop.f32.mrf.mxu0
          %v1274 = vadd.f32 %v1245, %v1273
          %v1275 = vpop.f32.mrf.mxu0
          %v1276 = vadd.f32 %v1247, %v1275
          %1277 = vmatmul.bf16.gmra.mxu0 %v896
          %v1278 = vpop.f32.mrf.mxu0
          %v1279 = vadd.f32 %v1250, %v1278
          %v1280 = vpop.f32.mrf.mxu0
          %v1281 = vadd.f32 %v1252, %v1280
          %1282 = vdwg.mxu0
          %1283 = vmatpush.bf16.msra.mxu0 %v1126
          %1284 = vmatpush.bf16.msra.mxu0 %v1122
          %1285 = vmatpush.bf16.msra.mxu0 %v1118
          %1286 = vmatpush.bf16.msra.mxu0 %v1114
          %1287 = vmatpush.bf16.msra.mxu0 %v1110
          %1288 = vmatpush.bf16.msra.mxu0 %v1106
          %1289 = vmatpush.bf16.msra.mxu0 %v1102
          %1290 = vmatpush.bf16.msra.mxu0 %v1098
          %1291 = vmatmul.bf16.gmra.mxu0 %v889
          %v1292 = vpop.f32.mrf.mxu0
          %v1293 = vadd.f32 %v788, %v1292
          %v1294 = vpop.f32.mrf.mxu0
          %v1295 = vadd.f32 %v790, %v1294
          %1296 = vmatmul.bf16.gmra.mxu0 %v891
          %v1297 = vpop.f32.mrf.mxu0
          %v1298 = vadd.f32 %v793, %v1297
          %v1299 = vpop.f32.mrf.mxu0
          %v1300 = vadd.f32 %v795, %v1299
          %1301 = vmatmul.bf16.gmra.mxu0 %v893
          %v1302 = vpop.f32.mrf.mxu0
          %v1303 = vadd.f32 %v798, %v1302
          %v1304 = vpop.f32.mrf.mxu0
          %v1305 = vadd.f32 %v800, %v1304
          %1306 = vmatmul.bf16.gmra.mxu0 %v895
          %v1307 = vpop.f32.mrf.mxu0
          %v1308 = vadd.f32 %v803, %v1307
          %v1309 = vpop.f32.mrf.mxu0
          %v1310 = vadd.f32 %v805, %v1309
          %1311 = vdwg.mxu0
          %1312 = vmatpush.bf16.msra.mxu0 %v1158
          %1313 = vmatpush.bf16.msra.mxu0 %v1154
          %1314 = vmatpush.bf16.msra.mxu0 %v1150
          %1315 = vmatpush.bf16.msra.mxu0 %v1146
          %1316 = vmatpush.bf16.msra.mxu0 %v1142
          %1317 = vmatpush.bf16.msra.mxu0 %v1138
          %1318 = vmatpush.bf16.msra.mxu0 %v1134
          %1319 = vmatpush.bf16.msra.mxu0 %v1130
          %1320 = vmatmul.bf16.gmra.mxu0 %v890
          %v1321 = vpop.f32.mrf.mxu0
          %v1322 = vadd.f32 %v1293, %v1321
          %v1323 = vpop.f32.mrf.mxu0
          %v1324 = vadd.f32 %v1295, %v1323
          %1325 = vmatmul.bf16.gmra.mxu0 %v892
          %v1326 = vpop.f32.mrf.mxu0
          %v1327 = vadd.f32 %v1298, %v1326
          %v1328 = vpop.f32.mrf.mxu0
          %v1329 = vadd.f32 %v1300, %v1328
          %1330 = vmatmul.bf16.gmra.mxu0 %v894
          %v1331 = vpop.f32.mrf.mxu0
          %v1332 = vadd.f32 %v1303, %v1331
          %v1333 = vpop.f32.mrf.mxu0
          %v1334 = vadd.f32 %v1305, %v1333
          %1335 = vmatmul.bf16.gmra.mxu0 %v896
          %v1336 = vpop.f32.mrf.mxu0
          %v1337 = vadd.f32 %v1308, %v1336
          %v1338 = vpop.f32.mrf.mxu0
          %v1339 = vadd.f32 %v1310, %v1338
          %1340 = vdwg.mxu0
          %1341 = vmatpush.bf16.msra.mxu0 %v1127
          %1342 = vmatpush.bf16.msra.mxu0 %v1123
          %1343 = vmatpush.bf16.msra.mxu0 %v1119
          %1344 = vmatpush.bf16.msra.mxu0 %v1115
          %1345 = vmatpush.bf16.msra.mxu0 %v1111
          %1346 = vmatpush.bf16.msra.mxu0 %v1107
          %1347 = vmatpush.bf16.msra.mxu0 %v1103
          %1348 = vmatpush.bf16.msra.mxu0 %v1099
          %1349 = vmatmul.bf16.gmra.mxu0 %v889
          %v1350 = vpop.f32.mrf.mxu0
          %v1351 = vadd.f32 %v817, %v1350
          %v1352 = vpop.f32.mrf.mxu0
          %v1353 = vadd.f32 %v819, %v1352
          %1354 = vmatmul.bf16.gmra.mxu0 %v891
          %v1355 = vpop.f32.mrf.mxu0
          %v1356 = vadd.f32 %v822, %v1355
          %v1357 = vpop.f32.mrf.mxu0
          %v1358 = vadd.f32 %v824, %v1357
          %1359 = vmatmul.bf16.gmra.mxu0 %v893
          %v1360 = vpop.f32.mrf.mxu0
          %v1361 = vadd.f32 %v827, %v1360
          %v1362 = vpop.f32.mrf.mxu0
          %v1363 = vadd.f32 %v829, %v1362
          %1364 = vmatmul.bf16.gmra.mxu0 %v895
          %v1365 = vpop.f32.mrf.mxu0
          %v1366 = vadd.f32 %v832, %v1365
          %v1367 = vpop.f32.mrf.mxu0
          %v1368 = vadd.f32 %v834, %v1367
          %1369 = vdwg.mxu0
          %1370 = vmatpush.bf16.msra.mxu0 %v1159
          %1371 = vmatpush.bf16.msra.mxu0 %v1155
          %1372 = vmatpush.bf16.msra.mxu0 %v1151
          %1373 = vmatpush.bf16.msra.mxu0 %v1147
          %1374 = vmatpush.bf16.msra.mxu0 %v1143
          %1375 = vmatpush.bf16.msra.mxu0 %v1139
          %1376 = vmatpush.bf16.msra.mxu0 %v1135
          %1377 = vmatpush.bf16.msra.mxu0 %v1131
          %1378 = vmatmul.bf16.gmra.mxu0 %v890
          %v1379 = vpop.f32.mrf.mxu0
          %v1380 = vadd.f32 %v1351, %v1379
          %v1381 = vpop.f32.mrf.mxu0
          %v1382 = vadd.f32 %v1353, %v1381
          %1383 = vmatmul.bf16.gmra.mxu0 %v892
          %v1384 = vpop.f32.mrf.mxu0
          %v1385 = vadd.f32 %v1356, %v1384
          %v1386 = vpop.f32.mrf.mxu0
          %v1387 = vadd.f32 %v1358, %v1386
          %1388 = vmatmul.bf16.gmra.mxu0 %v894
          %v1389 = vpop.f32.mrf.mxu0
          %v1390 = vadd.f32 %v1361, %v1389
          %v1391 = vpop.f32.mrf.mxu0
          %v1392 = vadd.f32 %v1363, %v1391
          %1393 = vmatmul.bf16.gmra.mxu0 %v896
          %v1394 = vpop.f32.mrf.mxu0
          %v1395 = vadd.f32 %v1366, %v1394
          %v1396 = vpop.f32.mrf.mxu0
          %v1397 = vadd.f32 %v1368, %v1396
          %1398 = vdwg.mxu0
          %1399 = vmatpush.bf16.msra.mxu0 %v1128
          %1400 = vmatpush.bf16.msra.mxu0 %v1124
          %1401 = vmatpush.bf16.msra.mxu0 %v1120
          %1402 = vmatpush.bf16.msra.mxu0 %v1116
          %1403 = vmatpush.bf16.msra.mxu0 %v1112
          %1404 = vmatpush.bf16.msra.mxu0 %v1108
          %1405 = vmatpush.bf16.msra.mxu0 %v1104
          %1406 = vmatpush.bf16.msra.mxu0 %v1100
          %1407 = vmatmul.bf16.gmra.mxu0 %v889
          %v1408 = vpop.f32.mrf.mxu0
          %v1409 = vadd.f32 %v846, %v1408
          %v1410 = vpop.f32.mrf.mxu0
          %v1411 = vadd.f32 %v848, %v1410
          %1412 = vmatmul.bf16.gmra.mxu0 %v891
          %v1413 = vpop.f32.mrf.mxu0
          %v1414 = vadd.f32 %v851, %v1413
          %v1415 = vpop.f32.mrf.mxu0
          %v1416 = vadd.f32 %v853, %v1415
          %1417 = vmatmul.bf16.gmra.mxu0 %v893
          %v1418 = vpop.f32.mrf.mxu0
          %v1419 = vadd.f32 %v856, %v1418
          %v1420 = vpop.f32.mrf.mxu0
          %v1421 = vadd.f32 %v858, %v1420
          %1422 = vmatmul.bf16.gmra.mxu0 %v895
          %v1423 = vpop.f32.mrf.mxu0
          %v1424 = vadd.f32 %v861, %v1423
          %v1425 = vpop.f32.mrf.mxu0
          %v1426 = vadd.f32 %v863, %v1425
          %1427 = vdwg.mxu0
          %1428 = vmatpush.bf16.msra.mxu0 %v1160
          %1429 = vmatpush.bf16.msra.mxu0 %v1156
          %1430 = vmatpush.bf16.msra.mxu0 %v1152
          %1431 = vmatpush.bf16.msra.mxu0 %v1148
          %1432 = vmatpush.bf16.msra.mxu0 %v1144
          %1433 = vmatpush.bf16.msra.mxu0 %v1140
          %1434 = vmatpush.bf16.msra.mxu0 %v1136
          %1435 = vmatpush.bf16.msra.mxu0 %v1132
          %1436 = vmatmul.bf16.gmra.mxu0 %v890
          %v1437 = vpop.f32.mrf.mxu0
          %v1438 = vadd.f32 %v1409, %v1437
          %v1439 = vpop.f32.mrf.mxu0
          %v1440 = vadd.f32 %v1411, %v1439
          %1441 = vmatmul.bf16.gmra.mxu0 %v892
          %v1442 = vpop.f32.mrf.mxu0
          %v1443 = vadd.f32 %v1414, %v1442
          %v1444 = vpop.f32.mrf.mxu0
          %v1445 = vadd.f32 %v1416, %v1444
          %1446 = vmatmul.bf16.gmra.mxu0 %v894
          %v1447 = vpop.f32.mrf.mxu0
          %v1448 = vadd.f32 %v1419, %v1447
          %v1449 = vpop.f32.mrf.mxu0
          %v1450 = vadd.f32 %v1421, %v1449
          %1451 = vmatmul.bf16.gmra.mxu0 %v896
          %v1452 = vpop.f32.mrf.mxu0
          %v1453 = vadd.f32 %v1424, %v1452
          %v1454 = vpop.f32.mrf.mxu0
          %v1455 = vadd.f32 %v1426, %v1454
          %1456 = vdwg.mxu0
          %s1457 = scalar_lea.vmem %s3, 1
          %v1458 = vld [vmem:[%s1457] ss:$8 sm:$0xf]
          %v1460 = vperm.slane %v1458, 0
          %v1461 = vperm.slane %v1458, 1
          %v1462 = vperm.slane %v1458, 2
          %v1463 = vperm.slane %v1458, 3
          %v1468 = vadd.f32 %v1264, %v1460
          %v1469 = vadd.f32 %v1322, %v1461
          %v1470 = vadd.f32 %v1380, %v1462
          %v1471 = vadd.f32 %v1438, %v1463
          %v1472 = vadd.f32 %v1266, %v1460
          %v1473 = vadd.f32 %v1324, %v1461
          %v1474 = vadd.f32 %v1382, %v1462
          %v1475 = vadd.f32 %v1440, %v1463
          %v1476 = vadd.f32 %v1269, %v1460
          %v1477 = vadd.f32 %v1327, %v1461
          %v1478 = vadd.f32 %v1385, %v1462
          %v1479 = vadd.f32 %v1443, %v1463
          %v1480 = vadd.f32 %v1271, %v1460
          %v1481 = vadd.f32 %v1329, %v1461
          %v1482 = vadd.f32 %v1387, %v1462
          %v1483 = vadd.f32 %v1445, %v1463
          %v1484 = vadd.f32 %v1274, %v1460
          %v1485 = vadd.f32 %v1332, %v1461
          %v1486 = vadd.f32 %v1390, %v1462
          %v1487 = vadd.f32 %v1448, %v1463
          %v1488 = vadd.f32 %v1276, %v1460
          %v1489 = vadd.f32 %v1334, %v1461
          %v1490 = vadd.f32 %v1392, %v1462
          %v1491 = vadd.f32 %v1450, %v1463
          %v1492 = vadd.f32 %v1279, %v1460
          %v1493 = vadd.f32 %v1337, %v1461
          %v1494 = vadd.f32 %v1395, %v1462
          %v1495 = vadd.f32 %v1453, %v1463
          %v1496 = vadd.f32 %v1281, %v1460
          %v1497 = vadd.f32 %v1339, %v1461
          %v1498 = vadd.f32 %v1397, %v1462
          %v1499 = vadd.f32 %v1455, %v1463
          %s1500 = sshra.s32 %s622, 3
          %s1501 = sand.u32 %s622, 7
          %s1502 = smul.u32 %s1500, 4
          %s1503 = smul.addr %s1502, 8
          %s1504 = scalar_lea.vmem [#allocation2], %s1503
          %1505 = vst [vmem:[%s1504] sm:$0xff] %v1468
          %1506 = vst [vmem:[%s1504 + $0x8] sm:$0xff] %v1469
          %1507 = vst [vmem:[%s1504 + $0x10] sm:$0xff] %v1470
          %1508 = vst [vmem:[%s1504 + $0x18] sm:$0xff] %v1471
          %1509 = vst [vmem:[%s1504 + $0x20] sm:$0xff] %v1472
          %1510 = vst [vmem:[%s1504 + $0x28] sm:$0xff] %v1473
          %1511 = vst [vmem:[%s1504 + $0x30] sm:$0xff] %v1474
          %1512 = vst [vmem:[%s1504 + $0x38] sm:$0xff] %v1475
          %1513 = vst [vmem:[%s1504 + $0x40] sm:$0xff] %v1476
          %1514 = vst [vmem:[%s1504 + $0x48] sm:$0xff] %v1477
          %1515 = vst [vmem:[%s1504 + $0x50] sm:$0xff] %v1478
          %1516 = vst [vmem:[%s1504 + $0x58] sm:$0xff] %v1479
          %1517 = vst [vmem:[%s1504 + $0x60] sm:$0xff] %v1480
          %1518 = vst [vmem:[%s1504 + $0x68] sm:$0xff] %v1481
          %1519 = vst [vmem:[%s1504 + $0x70] sm:$0xff] %v1482
          %1520 = vst [vmem:[%s1504 + $0x78] sm:$0xff] %v1483
          %1521 = vst [vmem:[%s1504 + $0x80] sm:$0xff] %v1484
          %1522 = vst [vmem:[%s1504 + $0x88] sm:$0xff] %v1485
          %1523 = vst [vmem:[%s1504 + $0x90] sm:$0xff] %v1486
          %1524 = vst [vmem:[%s1504 + $0x98] sm:$0xff] %v1487
          %1525 = vst [vmem:[%s1504 + $0xa0] sm:$0xff] %v1488
          %1526 = vst [vmem:[%s1504 + $0xa8] sm:$0xff] %v1489
          %1527 = vst [vmem:[%s1504 + $0xb0] sm:$0xff] %v1490
          %1528 = vst [vmem:[%s1504 + $0xb8] sm:$0xff] %v1491
          %1529 = vst [vmem:[%s1504 + $0xc0] sm:$0xff] %v1492
          %1530 = vst [vmem:[%s1504 + $0xc8] sm:$0xff] %v1493
          %1531 = vst [vmem:[%s1504 + $0xd0] sm:$0xff] %v1494
          %1532 = vst [vmem:[%s1504 + $0xd8] sm:$0xff] %v1495
          %1533 = vst [vmem:[%s1504 + $0xe0] sm:$0xff] %v1496
          %1534 = vst [vmem:[%s1504 + $0xe8] sm:$0xff] %v1497
          %1535 = vst [vmem:[%s1504 + $0xf0] sm:$0xff] %v1498
          %1536 = vst [vmem:[%s1504 + $0xf8] sm:$0xff] %v1499
          %p1537 = scmp.eq.s32.totalorder %s36, 0
          // Predicated region
          $region89: #{multilab_class_vae_forward.1} parent=87 // pred_check
            %p1538 = pneg %p1537
          $region90: #{multilab_class_vae_forward.1} parent=87 // pred_check_branch
            %1540 = sbr.rel (%p1538) target = $region92
          $region91: #{multilab_class_vae_forward.1} parent=87 // pred_region
            %1541 = vst [vmem:[#allocation3] sm:$0xff] 0.0
          $region92: #{multilab_class_vae_forward.1} parent=87 // pred_fallthru
            _
          %v1542 = vld [vmem:[#allocation3] sm:$0xf]
          %v1543 = vadd.f32 %v1468, %v1472
          %v1544 = vadd.f32 %v1543, %v1476
          %v1545 = vadd.f32 %v1544, %v1480
          %v1546 = vadd.f32 %v1545, %v1484
          %v1547 = vadd.f32 %v1546, %v1488
          %v1548 = vadd.f32 %v1547, %v1492
          %v1549 = vadd.f32 %v1548, %v1496
          %v1550 = vrot.slane %v1549, 4
          %v1551 = vadd.f32 %v1549, %v1550
          %v1552 = vrot.slane %v1551, 2
          %v1553 = vadd.f32 %v1551, %v1552
          %v1554 = vrot.slane %v1553, 1
          %v1555 = vadd.f32 %v1553, %v1554
          %v1556 = vadd.f32 %v1469, %v1473
          %v1557 = vadd.f32 %v1556, %v1477
          %v1558 = vadd.f32 %v1557, %v1481
          %v1559 = vadd.f32 %v1558, %v1485
          %v1560 = vadd.f32 %v1559, %v1489
          %v1561 = vadd.f32 %v1560, %v1493
          %v1562 = vadd.f32 %v1561, %v1497
          %v1563 = vrot.slane %v1562, 4
          %v1564 = vadd.f32 %v1562, %v1563
          %v1565 = vrot.slane %v1564, 2
          %v1566 = vadd.f32 %v1564, %v1565
          %v1567 = vrot.slane %v1566, 1
          %v1568 = vadd.f32 %v1566, %v1567
          %v1569 = vadd.f32 %v1470, %v1474
          %v1570 = vadd.f32 %v1569, %v1478
          %v1571 = vadd.f32 %v1570, %v1482
          %v1572 = vadd.f32 %v1571, %v1486
          %v1573 = vadd.f32 %v1572, %v1490
          %v1574 = vadd.f32 %v1573, %v1494
          %v1575 = vadd.f32 %v1574, %v1498
          %v1576 = vrot.slane %v1575, 4
          %v1577 = vadd.f32 %v1575, %v1576
          %v1578 = vrot.slane %v1577, 2
          %v1579 = vadd.f32 %v1577, %v1578
          %v1580 = vrot.slane %v1579, 1
          %v1581 = vadd.f32 %v1579, %v1580
          %v1582 = vadd.f32 %v1471, %v1475
          %v1583 = vadd.f32 %v1582, %v1479
          %v1584 = vadd.f32 %v1583, %v1483
          %v1585 = vadd.f32 %v1584, %v1487
          %v1586 = vadd.f32 %v1585, %v1491
          %v1587 = vadd.f32 %v1586, %v1495
          %v1588 = vadd.f32 %v1587, %v1499
          %v1589 = vrot.slane %v1588, 4
          %v1590 = vadd.f32 %v1588, %v1589
          %v1591 = vrot.slane %v1590, 2
          %v1592 = vadd.f32 %v1590, %v1591
          %v1593 = vrot.slane %v1592, 1
          %v1594 = vadd.f32 %v1592, %v1593
          %v1599 = vrot.slane %v1568, 7
          %v1600 = vrot.slane %v1581, 6
          %v1601 = vrot.slane %v1594, 5
          %vm1602 = vcmask 1040384
          %v1603 = vsel %vm1602, %v1555, %v1599
          %vm1604 = vcmask 1042434
          %v1605 = vsel %vm1604, %v1600, %v1601
          %vm1606 = vcmask 1041408
          %v1607 = vsel %vm1606, %v1603, %v1605
          %v1609 = vadd.f32 %v1542, %v1607
          %v1610 = vlaneseq
          %vm1611 = vcmp.ge.s32.totalorder %v1610, 0
          %vm1612 = vcmp.lt.s32.totalorder %v1610, 512
          %vm1613 = vmand %vm1611, %vm1612
          %1614 = vst.msk [vmem:[#allocation3] sm:$0xf] %vm1613, %v1609
          %v1615 = vld [vmem:[#allocation3 + $0x4] sm:$0xf]
          %v1616 = vmul.f32 %v1468, %v1468
          %v1617 = vmul.f32 %v1469, %v1469
          %v1618 = vmul.f32 %v1470, %v1470
          %v1619 = vmul.f32 %v1471, %v1471
          %v1620 = vmul.f32 %v1472, %v1472
          %v1621 = vmul.f32 %v1473, %v1473
          %v1622 = vmul.f32 %v1474, %v1474
          %v1623 = vmul.f32 %v1475, %v1475
          %v1624 = vmul.f32 %v1476, %v1476
          %v1625 = vmul.f32 %v1477, %v1477
          %v1626 = vmul.f32 %v1478, %v1478
          %v1627 = vmul.f32 %v1479, %v1479
          %v1628 = vmul.f32 %v1480, %v1480
          %v1629 = vmul.f32 %v1481, %v1481
          %v1630 = vmul.f32 %v1482, %v1482
          %v1631 = vmul.f32 %v1483, %v1483
          %v1632 = vmul.f32 %v1484, %v1484
          %v1633 = vmul.f32 %v1485, %v1485
          %v1634 = vmul.f32 %v1486, %v1486
          %v1635 = vmul.f32 %v1487, %v1487
          %v1636 = vmul.f32 %v1488, %v1488
          %v1637 = vmul.f32 %v1489, %v1489
          %v1638 = vmul.f32 %v1490, %v1490
          %v1639 = vmul.f32 %v1491, %v1491
          %v1640 = vmul.f32 %v1492, %v1492
          %v1641 = vmul.f32 %v1493, %v1493
          %v1642 = vmul.f32 %v1494, %v1494
          %v1643 = vmul.f32 %v1495, %v1495
          %v1644 = vmul.f32 %v1496, %v1496
          %v1645 = vmul.f32 %v1497, %v1497
          %v1646 = vmul.f32 %v1498, %v1498
          %v1647 = vmul.f32 %v1499, %v1499
          %v1648 = vadd.f32 %v1616, %v1620
          %v1649 = vadd.f32 %v1648, %v1624
          %v1650 = vadd.f32 %v1649, %v1628
          %v1651 = vadd.f32 %v1650, %v1632
          %v1652 = vadd.f32 %v1651, %v1636
          %v1653 = vadd.f32 %v1652, %v1640
          %v1654 = vadd.f32 %v1653, %v1644
          %v1655 = vrot.slane %v1654, 4
          %v1656 = vadd.f32 %v1654, %v1655
          %v1657 = vrot.slane %v1656, 2
          %v1658 = vadd.f32 %v1656, %v1657
          %v1659 = vrot.slane %v1658, 1
          %v1660 = vadd.f32 %v1658, %v1659
          %v1661 = vadd.f32 %v1617, %v1621
          %v1662 = vadd.f32 %v1661, %v1625
          %v1663 = vadd.f32 %v1662, %v1629
          %v1664 = vadd.f32 %v1663, %v1633
          %v1665 = vadd.f32 %v1664, %v1637
          %v1666 = vadd.f32 %v1665, %v1641
          %v1667 = vadd.f32 %v1666, %v1645
          %v1668 = vrot.slane %v1667, 4
          %v1669 = vadd.f32 %v1667, %v1668
          %v1670 = vrot.slane %v1669, 2
          %v1671 = vadd.f32 %v1669, %v1670
          %v1672 = vrot.slane %v1671, 1
          %v1673 = vadd.f32 %v1671, %v1672
          %v1674 = vadd.f32 %v1618, %v1622
          %v1675 = vadd.f32 %v1674, %v1626
          %v1676 = vadd.f32 %v1675, %v1630
          %v1677 = vadd.f32 %v1676, %v1634
          %v1678 = vadd.f32 %v1677, %v1638
          %v1679 = vadd.f32 %v1678, %v1642
          %v1680 = vadd.f32 %v1679, %v1646
          %v1681 = vrot.slane %v1680, 4
          %v1682 = vadd.f32 %v1680, %v1681
          %v1683 = vrot.slane %v1682, 2
          %v1684 = vadd.f32 %v1682, %v1683
          %v1685 = vrot.slane %v1684, 1
          %v1686 = vadd.f32 %v1684, %v1685
          %v1687 = vadd.f32 %v1619, %v1623
          %v1688 = vadd.f32 %v1687, %v1627
          %v1689 = vadd.f32 %v1688, %v1631
          %v1690 = vadd.f32 %v1689, %v1635
          %v1691 = vadd.f32 %v1690, %v1639
          %v1692 = vadd.f32 %v1691, %v1643
          %v1693 = vadd.f32 %v1692, %v1647
          %v1694 = vrot.slane %v1693, 4
          %v1695 = vadd.f32 %v1693, %v1694
          %v1696 = vrot.slane %v1695, 2
          %v1697 = vadd.f32 %v1695, %v1696
          %v1698 = vrot.slane %v1697, 1
          %v1699 = vadd.f32 %v1697, %v1698
          %v1704 = vrot.slane %v1673, 7
          %v1705 = vrot.slane %v1686, 6
          %v1706 = vrot.slane %v1699, 5
          %v1707 = vsel %vm1602, %v1660, %v1704
          %v1708 = vsel %vm1604, %v1705, %v1706
          %v1709 = vsel %vm1606, %v1707, %v1708
          %v1711 = vadd.f32 %v1615, %v1709
          %1712 = vst.msk [vmem:[#allocation3 + $0x4] sm:$0xf] %vm1613, %v1711
          // Predicated region
          $region93: #{multilab_class_vae_forward.1} parent=87 // pred_check
            %p1713 = pneg %p1537
          $region94: #{multilab_class_vae_forward.1} parent=87 // pred_check_branch
            %1715 = sbr.rel (%p1713) target = $region96
          $region95: #{multilab_class_vae_forward.1} parent=87 // pred_region
            %v1716 = vld [vmem:[#allocation3] sm:$0xf]
            %v1717 = vmul.f32 %v1716, 0.015625
            %v1718 = vld [vmem:[#allocation3 + $0x4] sm:$0xf]
            %v1719 = vmul.f32 %v1718, 0.015625
            %v1720 = vmul.f32 %v1717, %v1717
            %v1721 = vsub.f32 %v1719, %v1720
            %s1722 = scalar_lea.vmem %s3, 2
            %v1723 = vld [vmem:[%s1722] ss:$8 sm:$0xf]
            %s1724 = scalar_lea.vmem %s3, 3
            %v1725 = vld [vmem:[%s1724] ss:$8 sm:$0xf]
            %v1726 = vadd.f32 %v1721, 1e-05
            %v1727 = vrsqrt.pop %v1726
            %v1728 = vmul.f32 %v1727, %v1726
            %v1729 = vmul.f32 %v1728, %v1727
            %v1730 = vmul.f32 0.5, %v1729
            %v1731 = vsub.f32 1.5, %v1730
            %v1732 = vmul.f32 %v1727, %v1731
            %vm1733 = vweird.f32 %v1726
            %vm1734 = vweird.f32 %v1727
            %vm1735 = vmor %vm1733, %vm1734
            %v1736 = vsel %vm1735, %v1727, %v1732
            %v1737 = vmul.f32 %v1723, %v1736
            %v1738 = vmul.f32 %v1717, %v1737
            %v1739 = vsub.f32 %v1725, %v1738
            %1740 = vst.msk [vmem:[#allocation3] sm:$0xf] %vm1613, %v1737
            %1741 = vst.msk [vmem:[#allocation3 + $0x4] sm:$0xf] %vm1613, %v1739
          $region96: #{multilab_class_vae_forward.1} parent=87 // pred_fallthru
            _
        $region88: #{multilab_class_vae_forward.1} parent=71 // pred_fallthru
          _
        %p1742 = scmp.eq.s32.totalorder %s35, 1
        // Predicated region
        $region97: #{multilab_class_vae_forward.1} parent=71 // pred_check
          %p1743 = pneg %p1742
        $region98: #{multilab_class_vae_forward.1} parent=71 // pred_check_branch
          %1745 = sbr.rel (%p1743) target = $region100
        $region99: #{multilab_class_vae_forward.1} parent=71 // pred_region
          %s1746 = sshra.s32 %s622, 3
          %s1747 = sand.u32 %s622, 7
          %s1748 = smul.u32 %s1746, 4
          %s1749 = smul.addr %s1748, 8
          %s1750 = scalar_lea.vmem [#allocation2], %s1749
          %v1751 = vld [vmem:[%s1750] sm:$0xff]
          %v1752 = vld [vmem:[%s1750 + $0x8] sm:$0xff]
          %v1753 = vld [vmem:[%s1750 + $0x10] sm:$0xff]
          %v1754 = vld [vmem:[%s1750 + $0x18] sm:$0xff]
          %v1755 = vld [vmem:[%s1750 + $0x20] sm:$0xff]
          %v1756 = vld [vmem:[%s1750 + $0x28] sm:$0xff]
          %v1757 = vld [vmem:[%s1750 + $0x30] sm:$0xff]
          %v1758 = vld [vmem:[%s1750 + $0x38] sm:$0xff]
          %v1759 = vld [vmem:[%s1750 + $0x40] sm:$0xff]
          %v1760 = vld [vmem:[%s1750 + $0x48] sm:$0xff]
          %v1761 = vld [vmem:[%s1750 + $0x50] sm:$0xff]
          %v1762 = vld [vmem:[%s1750 + $0x58] sm:$0xff]
          %v1763 = vld [vmem:[%s1750 + $0x60] sm:$0xff]
          %v1764 = vld [vmem:[%s1750 + $0x68] sm:$0xff]
          %v1765 = vld [vmem:[%s1750 + $0x70] sm:$0xff]
          %v1766 = vld [vmem:[%s1750 + $0x78] sm:$0xff]
          %v1767 = vld [vmem:[%s1750 + $0x80] sm:$0xff]
          %v1768 = vld [vmem:[%s1750 + $0x88] sm:$0xff]
          %v1769 = vld [vmem:[%s1750 + $0x90] sm:$0xff]
          %v1770 = vld [vmem:[%s1750 + $0x98] sm:$0xff]
          %v1771 = vld [vmem:[%s1750 + $0xa0] sm:$0xff]
          %v1772 = vld [vmem:[%s1750 + $0xa8] sm:$0xff]
          %v1773 = vld [vmem:[%s1750 + $0xb0] sm:$0xff]
          %v1774 = vld [vmem:[%s1750 + $0xb8] sm:$0xff]
          %v1775 = vld [vmem:[%s1750 + $0xc0] sm:$0xff]
          %v1776 = vld [vmem:[%s1750 + $0xc8] sm:$0xff]
          %v1777 = vld [vmem:[%s1750 + $0xd0] sm:$0xff]
          %v1778 = vld [vmem:[%s1750 + $0xd8] sm:$0xff]
          %v1779 = vld [vmem:[%s1750 + $0xe0] sm:$0xff]
          %v1780 = vld [vmem:[%s1750 + $0xe8] sm:$0xff]
          %v1781 = vld [vmem:[%s1750 + $0xf0] sm:$0xff]
          %v1782 = vld [vmem:[%s1750 + $0xf8] sm:$0xff]
          %v1783 = vld [vmem:[#allocation3] sm:$0xf]
          %v1785 = vperm.slane %v1783, 0
          %v1786 = vperm.slane %v1783, 1
          %v1787 = vperm.slane %v1783, 2
          %v1788 = vperm.slane %v1783, 3
          %v1793 = vmul.f32 %v1751, %v1785
          %v1794 = vmul.f32 %v1752, %v1786
          %v1795 = vmul.f32 %v1753, %v1787
          %v1796 = vmul.f32 %v1754, %v1788
          %v1797 = vmul.f32 %v1755, %v1785
          %v1798 = vmul.f32 %v1756, %v1786
          %v1799 = vmul.f32 %v1757, %v1787
          %v1800 = vmul.f32 %v1758, %v1788
          %v1801 = vmul.f32 %v1759, %v1785
          %v1802 = vmul.f32 %v1760, %v1786
          %v1803 = vmul.f32 %v1761, %v1787
          %v1804 = vmul.f32 %v1762, %v1788
          %v1805 = vmul.f32 %v1763, %v1785
          %v1806 = vmul.f32 %v1764, %v1786
          %v1807 = vmul.f32 %v1765, %v1787
          %v1808 = vmul.f32 %v1766, %v1788
          %v1809 = vmul.f32 %v1767, %v1785
          %v1810 = vmul.f32 %v1768, %v1786
          %v1811 = vmul.f32 %v1769, %v1787
          %v1812 = vmul.f32 %v1770, %v1788
          %v1813 = vmul.f32 %v1771, %v1785
          %v1814 = vmul.f32 %v1772, %v1786
          %v1815 = vmul.f32 %v1773, %v1787
          %v1816 = vmul.f32 %v1774, %v1788
          %v1817 = vmul.f32 %v1775, %v1785
          %v1818 = vmul.f32 %v1776, %v1786
          %v1819 = vmul.f32 %v1777, %v1787
          %v1820 = vmul.f32 %v1778, %v1788
          %v1821 = vmul.f32 %v1779, %v1785
          %v1822 = vmul.f32 %v1780, %v1786
          %v1823 = vmul.f32 %v1781, %v1787
          %v1824 = vmul.f32 %v1782, %v1788
          %v1825 = vld [vmem:[#allocation3 + $0x4] sm:$0xf]
          %v1827 = vperm.slane %v1825, 0
          %v1828 = vperm.slane %v1825, 1
          %v1829 = vperm.slane %v1825, 2
          %v1830 = vperm.slane %v1825, 3
          %v1835 = vadd.f32 %v1793, %v1827
          %v1836 = vadd.f32 %v1794, %v1828
          %v1837 = vadd.f32 %v1795, %v1829
          %v1838 = vadd.f32 %v1796, %v1830
          %v1839 = vadd.f32 %v1797, %v1827
          %v1840 = vadd.f32 %v1798, %v1828
          %v1841 = vadd.f32 %v1799, %v1829
          %v1842 = vadd.f32 %v1800, %v1830
          %v1843 = vadd.f32 %v1801, %v1827
          %v1844 = vadd.f32 %v1802, %v1828
          %v1845 = vadd.f32 %v1803, %v1829
          %v1846 = vadd.f32 %v1804, %v1830
          %v1847 = vadd.f32 %v1805, %v1827
          %v1848 = vadd.f32 %v1806, %v1828
          %v1849 = vadd.f32 %v1807, %v1829
          %v1850 = vadd.f32 %v1808, %v1830
          %v1851 = vadd.f32 %v1809, %v1827
          %v1852 = vadd.f32 %v1810, %v1828
          %v1853 = vadd.f32 %v1811, %v1829
          %v1854 = vadd.f32 %v1812, %v1830
          %v1855 = vadd.f32 %v1813, %v1827
          %v1856 = vadd.f32 %v1814, %v1828
          %v1857 = vadd.f32 %v1815, %v1829
          %v1858 = vadd.f32 %v1816, %v1830
          %v1859 = vadd.f32 %v1817, %v1827
          %v1860 = vadd.f32 %v1818, %v1828
          %v1861 = vadd.f32 %v1819, %v1829
          %v1862 = vadd.f32 %v1820, %v1830
          %v1863 = vadd.f32 %v1821, %v1827
          %v1864 = vadd.f32 %v1822, %v1828
          %v1865 = vadd.f32 %v1823, %v1829
          %v1866 = vadd.f32 %v1824, %v1830
          %v1867 = vmax.f32 %v1835, 0.0
          %v1868 = vmax.f32 %v1836, 0.0
          %v1869 = vmax.f32 %v1837, 0.0
          %v1870 = vmax.f32 %v1838, 0.0
          %v1871 = vmax.f32 %v1839, 0.0
          %v1872 = vmax.f32 %v1840, 0.0
          %v1873 = vmax.f32 %v1841, 0.0
          %v1874 = vmax.f32 %v1842, 0.0
          %v1875 = vmax.f32 %v1843, 0.0
          %v1876 = vmax.f32 %v1844, 0.0
          %v1877 = vmax.f32 %v1845, 0.0
          %v1878 = vmax.f32 %v1846, 0.0
          %v1879 = vmax.f32 %v1847, 0.0
          %v1880 = vmax.f32 %v1848, 0.0
          %v1881 = vmax.f32 %v1849, 0.0
          %v1882 = vmax.f32 %v1850, 0.0
          %v1883 = vmax.f32 %v1851, 0.0
          %v1884 = vmax.f32 %v1852, 0.0
          %v1885 = vmax.f32 %v1853, 0.0
          %v1886 = vmax.f32 %v1854, 0.0
          %v1887 = vmax.f32 %v1855, 0.0
          %v1888 = vmax.f32 %v1856, 0.0
          %v1889 = vmax.f32 %v1857, 0.0
          %v1890 = vmax.f32 %v1858, 0.0
          %v1891 = vmax.f32 %v1859, 0.0
          %v1892 = vmax.f32 %v1860, 0.0
          %v1893 = vmax.f32 %v1861, 0.0
          %v1894 = vmax.f32 %v1862, 0.0
          %v1895 = vmax.f32 %v1863, 0.0
          %v1896 = vmax.f32 %v1864, 0.0
          %v1897 = vmax.f32 %v1865, 0.0
          %v1898 = vmax.f32 %v1866, 0.0
          %v1899 = vld [vmem:[%s601] sm:$0xff]
          %v1900 = vld [vmem:[%s601 + $0x8] sm:$0xff]
          %v1901 = vld [vmem:[%s601 + $0x10] sm:$0xff]
          %v1902 = vld [vmem:[%s601 + $0x18] sm:$0xff]
          %v1903 = vld [vmem:[%s601 + $0x20] sm:$0xff]
          %v1904 = vld [vmem:[%s601 + $0x28] sm:$0xff]
          %v1905 = vld [vmem:[%s601 + $0x30] sm:$0xff]
          %v1906 = vld [vmem:[%s601 + $0x38] sm:$0xff]
          %v1907 = vpack.c.bf16 %v1900, %v1899
          %v1908 = vpack.c.bf16 %v1902, %v1901
          %v1909 = vpack.c.bf16 %v1904, %v1903
          %v1910 = vpack.c.bf16 %v1906, %v1905
          %v1911 = vld [vmem:[%s4] sm:$0xf]
          %v1912 = vld [vmem:[%s3] ss:$0 sm:$0xff]
          %vm1913 = vcmask 64512
          %v1915 = vsel %vm1913, %v1907, 0
          %v1918 = vsel %vm1913, %v1908, 0
          %v1921 = vsel %vm1913, %v1909, 0
          %v1924 = vsel %vm1913, %v1910, 0
          %vm1926 = vcmask 1043456
          %v1928 = vsel %vm1926, %v1911, 0
          %1930 = vmatpush.bf16.msra.mxu0 0
          %1931 = vmatpush.bf16.msra.mxu0 0
          %1932 = vmatpush.bf16.msra.mxu0 0
          %1933 = vmatpush.bf16.msra.mxu0 0
          %1934 = vmatpush.bf16.msra.mxu0 0
          %1935 = vmatpush.bf16.msra.mxu0 0
          %1936 = vmatpush.bf16.msra.mxu0 0
          %1937 = vmatpush.bf16.msra.mxu0 %v1928
          %1938 = vmatmul.bf16.gmra.mxu0 %v1915
          %v1939 = vpop.f32.mrf.mxu0
          %v1940 = vadd.f32 %v1912, %v1939
          %v1941 = vpop.f32.mrf.mxu0
          %v1942 = vadd.f32 %v1912, %v1941
          %1943 = vmatmul.bf16.gmra.mxu0 %v1918
          %v1944 = vpop.f32.mrf.mxu0
          %v1945 = vadd.f32 %v1912, %v1944
          %v1946 = vpop.f32.mrf.mxu0
          %v1947 = vadd.f32 %v1912, %v1946
          %1948 = vmatmul.bf16.gmra.mxu0 %v1921
          %v1949 = vpop.f32.mrf.mxu0
          %v1950 = vadd.f32 %v1912, %v1949
          %v1951 = vpop.f32.mrf.mxu0
          %v1952 = vadd.f32 %v1912, %v1951
          %1953 = vmatmul.bf16.gmra.mxu0 %v1924
          %v1954 = vpop.f32.mrf.mxu0
          %v1955 = vadd.f32 %v1912, %v1954
          %v1956 = vpop.f32.mrf.mxu0
          %v1957 = vadd.f32 %v1912, %v1956
          %1958 = vdwg.mxu0
          %v1959 = vpack.c.bf16 %v1871, %v1867
          %v1960 = vpack.c.bf16 %v1872, %v1868
          %v1961 = vpack.c.bf16 %v1873, %v1869
          %v1962 = vpack.c.bf16 %v1874, %v1870
          %v1963 = vpack.c.bf16 %v1879, %v1875
          %v1964 = vpack.c.bf16 %v1880, %v1876
          %v1965 = vpack.c.bf16 %v1881, %v1877
          %v1966 = vpack.c.bf16 %v1882, %v1878
          %v1967 = vpack.c.bf16 %v1887, %v1883
          %v1968 = vpack.c.bf16 %v1888, %v1884
          %v1969 = vpack.c.bf16 %v1889, %v1885
          %v1970 = vpack.c.bf16 %v1890, %v1886
          %v1971 = vpack.c.bf16 %v1895, %v1891
          %v1972 = vpack.c.bf16 %v1896, %v1892
          %v1973 = vpack.c.bf16 %v1897, %v1893
          %v1974 = vpack.c.bf16 %v1898, %v1894
          %v1975 = vld [vmem:[#allocation7] sm:$0xff]
          %v1976 = vld [vmem:[#allocation7 + $0x8] sm:$0xff]
          %v1977 = vld [vmem:[#allocation7 + $0x10] sm:$0xff]
          %v1978 = vld [vmem:[#allocation7 + $0x18] sm:$0xff]
          %v1979 = vld [vmem:[#allocation7 + $0x20] sm:$0xff]
          %v1980 = vld [vmem:[#allocation7 + $0x28] sm:$0xff]
          %v1981 = vld [vmem:[#allocation7 + $0x30] sm:$0xff]
          %v1982 = vld [vmem:[#allocation7 + $0x38] sm:$0xff]
          %v1983 = vld [vmem:[#allocation7 + $0x40] sm:$0xff]
          %v1984 = vld [vmem:[#allocation7 + $0x48] sm:$0xff]
          %v1985 = vld [vmem:[#allocation7 + $0x50] sm:$0xff]
          %v1986 = vld [vmem:[#allocation7 + $0x58] sm:$0xff]
          %v1987 = vld [vmem:[#allocation7 + $0x60] sm:$0xff]
          %v1988 = vld [vmem:[#allocation7 + $0x68] sm:$0xff]
          %v1989 = vld [vmem:[#allocation7 + $0x70] sm:$0xff]
          %v1990 = vld [vmem:[#allocation7 + $0x78] sm:$0xff]
          %v1991 = vld [vmem:[#allocation7 + $0x80] sm:$0xff]
          %v1992 = vld [vmem:[#allocation7 + $0x88] sm:$0xff]
          %v1993 = vld [vmem:[#allocation7 + $0x90] sm:$0xff]
          %v1994 = vld [vmem:[#allocation7 + $0x98] sm:$0xff]
          %v1995 = vld [vmem:[#allocation7 + $0xa0] sm:$0xff]
          %v1996 = vld [vmem:[#allocation7 + $0xa8] sm:$0xff]
          %v1997 = vld [vmem:[#allocation7 + $0xb0] sm:$0xff]
          %v1998 = vld [vmem:[#allocation7 + $0xb8] sm:$0xff]
          %v1999 = vld [vmem:[#allocation7 + $0xc0] sm:$0xff]
          %v2000 = vld [vmem:[#allocation7 + $0xc8] sm:$0xff]
          %v2001 = vld [vmem:[#allocation7 + $0xd0] sm:$0xff]
          %v2002 = vld [vmem:[#allocation7 + $0xd8] sm:$0xff]
          %v2003 = vld [vmem:[#allocation7 + $0xe0] sm:$0xff]
          %v2004 = vld [vmem:[#allocation7 + $0xe8] sm:$0xff]
          %v2005 = vld [vmem:[#allocation7 + $0xf0] sm:$0xff]
          %v2006 = vld [vmem:[#allocation7 + $0xf8] sm:$0xff]
          %v2007 = vld [vmem:[#allocation7 + $0x100] sm:$0xff]
          %v2008 = vld [vmem:[#allocation7 + $0x108] sm:$0xff]
          %v2009 = vld [vmem:[#allocation7 + $0x110] sm:$0xff]
          %v2010 = vld [vmem:[#allocation7 + $0x118] sm:$0xff]
          %v2011 = vld [vmem:[#allocation7 + $0x120] sm:$0xff]
          %v2012 = vld [vmem:[#allocation7 + $0x128] sm:$0xff]
          %v2013 = vld [vmem:[#allocation7 + $0x130] sm:$0xff]
          %v2014 = vld [vmem:[#allocation7 + $0x138] sm:$0xff]
          %v2015 = vld [vmem:[#allocation7 + $0x140] sm:$0xff]
          %v2016 = vld [vmem:[#allocation7 + $0x148] sm:$0xff]
          %v2017 = vld [vmem:[#allocation7 + $0x150] sm:$0xff]
          %v2018 = vld [vmem:[#allocation7 + $0x158] sm:$0xff]
          %v2019 = vld [vmem:[#allocation7 + $0x160] sm:$0xff]
          %v2020 = vld [vmem:[#allocation7 + $0x168] sm:$0xff]
          %v2021 = vld [vmem:[#allocation7 + $0x170] sm:$0xff]
          %v2022 = vld [vmem:[#allocation7 + $0x178] sm:$0xff]
          %v2023 = vld [vmem:[#allocation7 + $0x180] sm:$0xff]
          %v2024 = vld [vmem:[#allocation7 + $0x188] sm:$0xff]
          %v2025 = vld [vmem:[#allocation7 + $0x190] sm:$0xff]
          %v2026 = vld [vmem:[#allocation7 + $0x198] sm:$0xff]
          %v2027 = vld [vmem:[#allocation7 + $0x1a0] sm:$0xff]
          %v2028 = vld [vmem:[#allocation7 + $0x1a8] sm:$0xff]
          %v2029 = vld [vmem:[#allocation7 + $0x1b0] sm:$0xff]
          %v2030 = vld [vmem:[#allocation7 + $0x1b8] sm:$0xff]
          %v2031 = vld [vmem:[#allocation7 + $0x1c0] sm:$0xff]
          %v2032 = vld [vmem:[#allocation7 + $0x1c8] sm:$0xff]
          %v2033 = vld [vmem:[#allocation7 + $0x1d0] sm:$0xff]
          %v2034 = vld [vmem:[#allocation7 + $0x1d8] sm:$0xff]
          %v2035 = vld [vmem:[#allocation7 + $0x1e0] sm:$0xff]
          %v2036 = vld [vmem:[#allocation7 + $0x1e8] sm:$0xff]
          %v2037 = vld [vmem:[#allocation7 + $0x1f0] sm:$0xff]
          %v2038 = vld [vmem:[#allocation7 + $0x1f8] sm:$0xff]
          %v2039 = vld [vmem:[#allocation7 + $0x200] sm:$0xff]
          %v2040 = vld [vmem:[#allocation7 + $0x208] sm:$0xff]
          %v2041 = vld [vmem:[#allocation7 + $0x210] sm:$0xff]
          %v2042 = vld [vmem:[#allocation7 + $0x218] sm:$0xff]
          %v2043 = vld [vmem:[#allocation7 + $0x220] sm:$0xff]
          %v2044 = vld [vmem:[#allocation7 + $0x228] sm:$0xff]
          %v2045 = vld [vmem:[#allocation7 + $0x230] sm:$0xff]
          %v2046 = vld [vmem:[#allocation7 + $0x238] sm:$0xff]
          %v2047 = vld [vmem:[#allocation7 + $0x240] sm:$0xff]
          %v2048 = vld [vmem:[#allocation7 + $0x248] sm:$0xff]
          %v2049 = vld [vmem:[#allocation7 + $0x250] sm:$0xff]
          %v2050 = vld [vmem:[#allocation7 + $0x258] sm:$0xff]
          %v2051 = vld [vmem:[#allocation7 + $0x260] sm:$0xff]
          %v2052 = vld [vmem:[#allocation7 + $0x268] sm:$0xff]
          %v2053 = vld [vmem:[#allocation7 + $0x270] sm:$0xff]
          %v2054 = vld [vmem:[#allocation7 + $0x278] sm:$0xff]
          %v2055 = vld [vmem:[#allocation7 + $0x280] sm:$0xff]
          %v2056 = vld [vmem:[#allocation7 + $0x288] sm:$0xff]
          %v2057 = vld [vmem:[#allocation7 + $0x290] sm:$0xff]
          %v2058 = vld [vmem:[#allocation7 + $0x298] sm:$0xff]
          %v2059 = vld [vmem:[#allocation7 + $0x2a0] sm:$0xff]
          %v2060 = vld [vmem:[#allocation7 + $0x2a8] sm:$0xff]
          %v2061 = vld [vmem:[#allocation7 + $0x2b0] sm:$0xff]
          %v2062 = vld [vmem:[#allocation7 + $0x2b8] sm:$0xff]
          %v2063 = vld [vmem:[#allocation7 + $0x2c0] sm:$0xff]
          %v2064 = vld [vmem:[#allocation7 + $0x2c8] sm:$0xff]
          %v2065 = vld [vmem:[#allocation7 + $0x2d0] sm:$0xff]
          %v2066 = vld [vmem:[#allocation7 + $0x2d8] sm:$0xff]
          %v2067 = vld [vmem:[#allocation7 + $0x2e0] sm:$0xff]
          %v2068 = vld [vmem:[#allocation7 + $0x2e8] sm:$0xff]
          %v2069 = vld [vmem:[#allocation7 + $0x2f0] sm:$0xff]
          %v2070 = vld [vmem:[#allocation7 + $0x2f8] sm:$0xff]
          %v2071 = vld [vmem:[#allocation7 + $0x300] sm:$0xff]
          %v2072 = vld [vmem:[#allocation7 + $0x308] sm:$0xff]
          %v2073 = vld [vmem:[#allocation7 + $0x310] sm:$0xff]
          %v2074 = vld [vmem:[#allocation7 + $0x318] sm:$0xff]
          %v2075 = vld [vmem:[#allocation7 + $0x320] sm:$0xff]
          %v2076 = vld [vmem:[#allocation7 + $0x328] sm:$0xff]
          %v2077 = vld [vmem:[#allocation7 + $0x330] sm:$0xff]
          %v2078 = vld [vmem:[#allocation7 + $0x338] sm:$0xff]
          %v2079 = vld [vmem:[#allocation7 + $0x340] sm:$0xff]
          %v2080 = vld [vmem:[#allocation7 + $0x348] sm:$0xff]
          %v2081 = vld [vmem:[#allocation7 + $0x350] sm:$0xff]
          %v2082 = vld [vmem:[#allocation7 + $0x358] sm:$0xff]
          %v2083 = vld [vmem:[#allocation7 + $0x360] sm:$0xff]
          %v2084 = vld [vmem:[#allocation7 + $0x368] sm:$0xff]
          %v2085 = vld [vmem:[#allocation7 + $0x370] sm:$0xff]
          %v2086 = vld [vmem:[#allocation7 + $0x378] sm:$0xff]
          %v2087 = vld [vmem:[#allocation7 + $0x380] sm:$0xff]
          %v2088 = vld [vmem:[#allocation7 + $0x388] sm:$0xff]
          %v2089 = vld [vmem:[#allocation7 + $0x390] sm:$0xff]
          %v2090 = vld [vmem:[#allocation7 + $0x398] sm:$0xff]
          %v2091 = vld [vmem:[#allocation7 + $0x3a0] sm:$0xff]
          %v2092 = vld [vmem:[#allocation7 + $0x3a8] sm:$0xff]
          %v2093 = vld [vmem:[#allocation7 + $0x3b0] sm:$0xff]
          %v2094 = vld [vmem:[#allocation7 + $0x3b8] sm:$0xff]
          %v2095 = vld [vmem:[#allocation7 + $0x3c0] sm:$0xff]
          %v2096 = vld [vmem:[#allocation7 + $0x3c8] sm:$0xff]
          %v2097 = vld [vmem:[#allocation7 + $0x3d0] sm:$0xff]
          %v2098 = vld [vmem:[#allocation7 + $0x3d8] sm:$0xff]
          %v2099 = vld [vmem:[#allocation7 + $0x3e0] sm:$0xff]
          %v2100 = vld [vmem:[#allocation7 + $0x3e8] sm:$0xff]
          %v2101 = vld [vmem:[#allocation7 + $0x3f0] sm:$0xff]
          %v2102 = vld [vmem:[#allocation7 + $0x3f8] sm:$0xff]
          %s2103 = scalar_lea.vmem %s3, 4
          %v2104 = vld [vmem:[%s2103] ss:$8 sm:$0xf]
          %v2106 = vperm.slane %v2104, 0
          %v2107 = vperm.slane %v2104, 1
          %v2108 = vperm.slane %v2104, 2
          %v2109 = vperm.slane %v2104, 3
          %v2242 = vunpack.c.l.b16 %v1975
          %v2243 = vunpack.c.h.b16 %v1975
          %v2244 = vunpack.c.l.b16 %v1976
          %v2245 = vunpack.c.h.b16 %v1976
          %v2246 = vunpack.c.l.b16 %v1977
          %v2247 = vunpack.c.h.b16 %v1977
          %v2248 = vunpack.c.l.b16 %v1978
          %v2249 = vunpack.c.h.b16 %v1978
          %v2250 = vunpack.c.l.b16 %v1979
          %v2251 = vunpack.c.h.b16 %v1979
          %v2252 = vunpack.c.l.b16 %v1980
          %v2253 = vunpack.c.h.b16 %v1980
          %v2254 = vunpack.c.l.b16 %v1981
          %v2255 = vunpack.c.h.b16 %v1981
          %v2256 = vunpack.c.l.b16 %v1982
          %v2257 = vunpack.c.h.b16 %v1982
          %v2258 = vunpack.c.l.b16 %v1983
          %v2259 = vunpack.c.h.b16 %v1983
          %v2260 = vunpack.c.l.b16 %v1984
          %v2261 = vunpack.c.h.b16 %v1984
          %v2262 = vunpack.c.l.b16 %v1985
          %v2263 = vunpack.c.h.b16 %v1985
          %v2264 = vunpack.c.l.b16 %v1986
          %v2265 = vunpack.c.h.b16 %v1986
          %v2266 = vunpack.c.l.b16 %v1987
          %v2267 = vunpack.c.h.b16 %v1987
          %v2268 = vunpack.c.l.b16 %v1988
          %v2269 = vunpack.c.h.b16 %v1988
          %v2270 = vunpack.c.l.b16 %v1989
          %v2271 = vunpack.c.h.b16 %v1989
          %v2272 = vunpack.c.l.b16 %v1990
          %v2273 = vunpack.c.h.b16 %v1990
          %v2274 = vunpack.c.l.b16 %v1991
          %v2275 = vunpack.c.h.b16 %v1991
          %v2276 = vunpack.c.l.b16 %v1992
          %v2277 = vunpack.c.h.b16 %v1992
          %v2278 = vunpack.c.l.b16 %v1993
          %v2279 = vunpack.c.h.b16 %v1993
          %v2280 = vunpack.c.l.b16 %v1994
          %v2281 = vunpack.c.h.b16 %v1994
          %v2282 = vunpack.c.l.b16 %v1995
          %v2283 = vunpack.c.h.b16 %v1995
          %v2284 = vunpack.c.l.b16 %v1996
          %v2285 = vunpack.c.h.b16 %v1996
          %v2286 = vunpack.c.l.b16 %v1997
          %v2287 = vunpack.c.h.b16 %v1997
          %v2288 = vunpack.c.l.b16 %v1998
          %v2289 = vunpack.c.h.b16 %v1998
          %v2290 = vunpack.c.l.b16 %v1999
          %v2291 = vunpack.c.h.b16 %v1999
          %v2292 = vunpack.c.l.b16 %v2000
          %v2293 = vunpack.c.h.b16 %v2000
          %v2294 = vunpack.c.l.b16 %v2001
          %v2295 = vunpack.c.h.b16 %v2001
          %v2296 = vunpack.c.l.b16 %v2002
          %v2297 = vunpack.c.h.b16 %v2002
          %v2298 = vunpack.c.l.b16 %v2003
          %v2299 = vunpack.c.h.b16 %v2003
          %v2300 = vunpack.c.l.b16 %v2004
          %v2301 = vunpack.c.h.b16 %v2004
          %v2302 = vunpack.c.l.b16 %v2005
          %v2303 = vunpack.c.h.b16 %v2005
          %v2304 = vunpack.c.l.b16 %v2006
          %v2305 = vunpack.c.h.b16 %v2006
          %v2306 = vunpack.c.l.b16 %v2007
          %v2307 = vunpack.c.h.b16 %v2007
          %v2308 = vunpack.c.l.b16 %v2008
          %v2309 = vunpack.c.h.b16 %v2008
          %v2310 = vunpack.c.l.b16 %v2009
          %v2311 = vunpack.c.h.b16 %v2009
          %v2312 = vunpack.c.l.b16 %v2010
          %v2313 = vunpack.c.h.b16 %v2010
          %v2314 = vunpack.c.l.b16 %v2011
          %v2315 = vunpack.c.h.b16 %v2011
          %v2316 = vunpack.c.l.b16 %v2012
          %v2317 = vunpack.c.h.b16 %v2012
          %v2318 = vunpack.c.l.b16 %v2013
          %v2319 = vunpack.c.h.b16 %v2013
          %v2320 = vunpack.c.l.b16 %v2014
          %v2321 = vunpack.c.h.b16 %v2014
          %v2322 = vunpack.c.l.b16 %v2015
          %v2323 = vunpack.c.h.b16 %v2015
          %v2324 = vunpack.c.l.b16 %v2016
          %v2325 = vunpack.c.h.b16 %v2016
          %v2326 = vunpack.c.l.b16 %v2017
          %v2327 = vunpack.c.h.b16 %v2017
          %v2328 = vunpack.c.l.b16 %v2018
          %v2329 = vunpack.c.h.b16 %v2018
          %v2330 = vunpack.c.l.b16 %v2019
          %v2331 = vunpack.c.h.b16 %v2019
          %v2332 = vunpack.c.l.b16 %v2020
          %v2333 = vunpack.c.h.b16 %v2020
          %v2334 = vunpack.c.l.b16 %v2021
          %v2335 = vunpack.c.h.b16 %v2021
          %v2336 = vunpack.c.l.b16 %v2022
          %v2337 = vunpack.c.h.b16 %v2022
          %v2338 = vunpack.c.l.b16 %v2023
          %v2339 = vunpack.c.h.b16 %v2023
          %v2340 = vunpack.c.l.b16 %v2024
          %v2341 = vunpack.c.h.b16 %v2024
          %v2342 = vunpack.c.l.b16 %v2025
          %v2343 = vunpack.c.h.b16 %v2025
          %v2344 = vunpack.c.l.b16 %v2026
          %v2345 = vunpack.c.h.b16 %v2026
          %v2346 = vunpack.c.l.b16 %v2027
          %v2347 = vunpack.c.h.b16 %v2027
          %v2348 = vunpack.c.l.b16 %v2028
          %v2349 = vunpack.c.h.b16 %v2028
          %v2350 = vunpack.c.l.b16 %v2029
          %v2351 = vunpack.c.h.b16 %v2029
          %v2352 = vunpack.c.l.b16 %v2030
          %v2353 = vunpack.c.h.b16 %v2030
          %v2354 = vunpack.c.l.b16 %v2031
          %v2355 = vunpack.c.h.b16 %v2031
          %v2356 = vunpack.c.l.b16 %v2032
          %v2357 = vunpack.c.h.b16 %v2032
          %v2358 = vunpack.c.l.b16 %v2033
          %v2359 = vunpack.c.h.b16 %v2033
          %v2360 = vunpack.c.l.b16 %v2034
          %v2361 = vunpack.c.h.b16 %v2034
          %v2362 = vunpack.c.l.b16 %v2035
          %v2363 = vunpack.c.h.b16 %v2035
          %v2364 = vunpack.c.l.b16 %v2036
          %v2365 = vunpack.c.h.b16 %v2036
          %v2366 = vunpack.c.l.b16 %v2037
          %v2367 = vunpack.c.h.b16 %v2037
          %v2368 = vunpack.c.l.b16 %v2038
          %v2369 = vunpack.c.h.b16 %v2038
          %v2370 = vunpack.c.l.b16 %v2039
          %v2371 = vunpack.c.h.b16 %v2039
          %v2372 = vunpack.c.l.b16 %v2040
          %v2373 = vunpack.c.h.b16 %v2040
          %v2374 = vunpack.c.l.b16 %v2041
          %v2375 = vunpack.c.h.b16 %v2041
          %v2376 = vunpack.c.l.b16 %v2042
          %v2377 = vunpack.c.h.b16 %v2042
          %v2378 = vunpack.c.l.b16 %v2043
          %v2379 = vunpack.c.h.b16 %v2043
          %v2380 = vunpack.c.l.b16 %v2044
          %v2381 = vunpack.c.h.b16 %v2044
          %v2382 = vunpack.c.l.b16 %v2045
          %v2383 = vunpack.c.h.b16 %v2045
          %v2384 = vunpack.c.l.b16 %v2046
          %v2385 = vunpack.c.h.b16 %v2046
          %v2386 = vunpack.c.l.b16 %v2047
          %v2387 = vunpack.c.h.b16 %v2047
          %v2388 = vunpack.c.l.b16 %v2048
          %v2389 = vunpack.c.h.b16 %v2048
          %v2390 = vunpack.c.l.b16 %v2049
          %v2391 = vunpack.c.h.b16 %v2049
          %v2392 = vunpack.c.l.b16 %v2050
          %v2393 = vunpack.c.h.b16 %v2050
          %v2394 = vunpack.c.l.b16 %v2051
          %v2395 = vunpack.c.h.b16 %v2051
          %v2396 = vunpack.c.l.b16 %v2052
          %v2397 = vunpack.c.h.b16 %v2052
          %v2398 = vunpack.c.l.b16 %v2053
          %v2399 = vunpack.c.h.b16 %v2053
          %v2400 = vunpack.c.l.b16 %v2054
          %v2401 = vunpack.c.h.b16 %v2054
          %v2402 = vunpack.c.l.b16 %v2055
          %v2403 = vunpack.c.h.b16 %v2055
          %v2404 = vunpack.c.l.b16 %v2056
          %v2405 = vunpack.c.h.b16 %v2056
          %v2406 = vunpack.c.l.b16 %v2057
          %v2407 = vunpack.c.h.b16 %v2057
          %v2408 = vunpack.c.l.b16 %v2058
          %v2409 = vunpack.c.h.b16 %v2058
          %v2410 = vunpack.c.l.b16 %v2059
          %v2411 = vunpack.c.h.b16 %v2059
          %v2412 = vunpack.c.l.b16 %v2060
          %v2413 = vunpack.c.h.b16 %v2060
          %v2414 = vunpack.c.l.b16 %v2061
          %v2415 = vunpack.c.h.b16 %v2061
          %v2416 = vunpack.c.l.b16 %v2062
          %v2417 = vunpack.c.h.b16 %v2062
          %v2418 = vunpack.c.l.b16 %v2063
          %v2419 = vunpack.c.h.b16 %v2063
          %v2420 = vunpack.c.l.b16 %v2064
          %v2421 = vunpack.c.h.b16 %v2064
          %v2422 = vunpack.c.l.b16 %v2065
          %v2423 = vunpack.c.h.b16 %v2065
          %v2424 = vunpack.c.l.b16 %v2066
          %v2425 = vunpack.c.h.b16 %v2066
          %v2426 = vunpack.c.l.b16 %v2067
          %v2427 = vunpack.c.h.b16 %v2067
          %v2428 = vunpack.c.l.b16 %v2068
          %v2429 = vunpack.c.h.b16 %v2068
          %v2430 = vunpack.c.l.b16 %v2069
          %v2431 = vunpack.c.h.b16 %v2069
          %v2432 = vunpack.c.l.b16 %v2070
          %v2433 = vunpack.c.h.b16 %v2070
          %v2434 = vunpack.c.l.b16 %v2071
          %v2435 = vunpack.c.h.b16 %v2071
          %v2436 = vunpack.c.l.b16 %v2072
          %v2437 = vunpack.c.h.b16 %v2072
          %v2438 = vunpack.c.l.b16 %v2073
          %v2439 = vunpack.c.h.b16 %v2073
          %v2440 = vunpack.c.l.b16 %v2074
          %v2441 = vunpack.c.h.b16 %v2074
          %v2442 = vunpack.c.l.b16 %v2075
          %v2443 = vunpack.c.h.b16 %v2075
          %v2444 = vunpack.c.l.b16 %v2076
          %v2445 = vunpack.c.h.b16 %v2076
          %v2446 = vunpack.c.l.b16 %v2077
          %v2447 = vunpack.c.h.b16 %v2077
          %v2448 = vunpack.c.l.b16 %v2078
          %v2449 = vunpack.c.h.b16 %v2078
          %v2450 = vunpack.c.l.b16 %v2079
          %v2451 = vunpack.c.h.b16 %v2079
          %v2452 = vunpack.c.l.b16 %v2080
          %v2453 = vunpack.c.h.b16 %v2080
          %v2454 = vunpack.c.l.b16 %v2081
          %v2455 = vunpack.c.h.b16 %v2081
          %v2456 = vunpack.c.l.b16 %v2082
          %v2457 = vunpack.c.h.b16 %v2082
          %v2458 = vunpack.c.l.b16 %v2083
          %v2459 = vunpack.c.h.b16 %v2083
          %v2460 = vunpack.c.l.b16 %v2084
          %v2461 = vunpack.c.h.b16 %v2084
          %v2462 = vunpack.c.l.b16 %v2085
          %v2463 = vunpack.c.h.b16 %v2085
          %v2464 = vunpack.c.l.b16 %v2086
          %v2465 = vunpack.c.h.b16 %v2086
          %v2466 = vunpack.c.l.b16 %v2087
          %v2467 = vunpack.c.h.b16 %v2087
          %v2468 = vunpack.c.l.b16 %v2088
          %v2469 = vunpack.c.h.b16 %v2088
          %v2470 = vunpack.c.l.b16 %v2089
          %v2471 = vunpack.c.h.b16 %v2089
          %v2472 = vunpack.c.l.b16 %v2090
          %v2473 = vunpack.c.h.b16 %v2090
          %v2474 = vunpack.c.l.b16 %v2091
          %v2475 = vunpack.c.h.b16 %v2091
          %v2476 = vunpack.c.l.b16 %v2092
          %v2477 = vunpack.c.h.b16 %v2092
          %v2478 = vunpack.c.l.b16 %v2093
          %v2479 = vunpack.c.h.b16 %v2093
          %v2480 = vunpack.c.l.b16 %v2094
          %v2481 = vunpack.c.h.b16 %v2094
          %v2482 = vunpack.c.l.b16 %v2095
          %v2483 = vunpack.c.h.b16 %v2095
          %v2484 = vunpack.c.l.b16 %v2096
          %v2485 = vunpack.c.h.b16 %v2096
          %v2486 = vunpack.c.l.b16 %v2097
          %v2487 = vunpack.c.h.b16 %v2097
          %v2488 = vunpack.c.l.b16 %v2098
          %v2489 = vunpack.c.h.b16 %v2098
          %v2490 = vunpack.c.l.b16 %v2099
          %v2491 = vunpack.c.h.b16 %v2099
          %v2492 = vunpack.c.l.b16 %v2100
          %v2493 = vunpack.c.h.b16 %v2100
          %v2494 = vunpack.c.l.b16 %v2101
          %v2495 = vunpack.c.h.b16 %v2101
          %v2496 = vunpack.c.l.b16 %v2102
          %v2497 = vunpack.c.h.b16 %v2102
          %v2498 = vpack.c.b16 %v2246, %v2242
          %v2499 = vpack.c.b16 %v2247, %v2243
          %v2500 = vpack.c.b16 %v2248, %v2244
          %v2501 = vpack.c.b16 %v2249, %v2245
          %v2502 = vpack.c.b16 %v2254, %v2250
          %v2503 = vpack.c.b16 %v2255, %v2251
          %v2504 = vpack.c.b16 %v2256, %v2252
          %v2505 = vpack.c.b16 %v2257, %v2253
          %v2506 = vpack.c.b16 %v2262, %v2258
          %v2507 = vpack.c.b16 %v2263, %v2259
          %v2508 = vpack.c.b16 %v2264, %v2260
          %v2509 = vpack.c.b16 %v2265, %v2261
          %v2510 = vpack.c.b16 %v2270, %v2266
          %v2511 = vpack.c.b16 %v2271, %v2267
          %v2512 = vpack.c.b16 %v2272, %v2268
          %v2513 = vpack.c.b16 %v2273, %v2269
          %v2514 = vpack.c.b16 %v2278, %v2274
          %v2515 = vpack.c.b16 %v2279, %v2275
          %v2516 = vpack.c.b16 %v2280, %v2276
          %v2517 = vpack.c.b16 %v2281, %v2277
          %v2518 = vpack.c.b16 %v2286, %v2282
          %v2519 = vpack.c.b16 %v2287, %v2283
          %v2520 = vpack.c.b16 %v2288, %v2284
          %v2521 = vpack.c.b16 %v2289, %v2285
          %v2522 = vpack.c.b16 %v2294, %v2290
          %v2523 = vpack.c.b16 %v2295, %v2291
          %v2524 = vpack.c.b16 %v2296, %v2292
          %v2525 = vpack.c.b16 %v2297, %v2293
          %v2526 = vpack.c.b16 %v2302, %v2298
          %v2527 = vpack.c.b16 %v2303, %v2299
          %v2528 = vpack.c.b16 %v2304, %v2300
          %v2529 = vpack.c.b16 %v2305, %v2301
          %v2530 = vpack.c.b16 %v2310, %v2306
          %v2531 = vpack.c.b16 %v2311, %v2307
          %v2532 = vpack.c.b16 %v2312, %v2308
          %v2533 = vpack.c.b16 %v2313, %v2309
          %v2534 = vpack.c.b16 %v2318, %v2314
          %v2535 = vpack.c.b16 %v2319, %v2315
          %v2536 = vpack.c.b16 %v2320, %v2316
          %v2537 = vpack.c.b16 %v2321, %v2317
          %v2538 = vpack.c.b16 %v2326, %v2322
          %v2539 = vpack.c.b16 %v2327, %v2323
          %v2540 = vpack.c.b16 %v2328, %v2324
          %v2541 = vpack.c.b16 %v2329, %v2325
          %v2542 = vpack.c.b16 %v2334, %v2330
          %v2543 = vpack.c.b16 %v2335, %v2331
          %v2544 = vpack.c.b16 %v2336, %v2332
          %v2545 = vpack.c.b16 %v2337, %v2333
          %v2546 = vpack.c.b16 %v2342, %v2338
          %v2547 = vpack.c.b16 %v2343, %v2339
          %v2548 = vpack.c.b16 %v2344, %v2340
          %v2549 = vpack.c.b16 %v2345, %v2341
          %v2550 = vpack.c.b16 %v2350, %v2346
          %v2551 = vpack.c.b16 %v2351, %v2347
          %v2552 = vpack.c.b16 %v2352, %v2348
          %v2553 = vpack.c.b16 %v2353, %v2349
          %v2554 = vpack.c.b16 %v2358, %v2354
          %v2555 = vpack.c.b16 %v2359, %v2355
          %v2556 = vpack.c.b16 %v2360, %v2356
          %v2557 = vpack.c.b16 %v2361, %v2357
          %v2558 = vpack.c.b16 %v2366, %v2362
          %v2559 = vpack.c.b16 %v2367, %v2363
          %v2560 = vpack.c.b16 %v2368, %v2364
          %v2561 = vpack.c.b16 %v2369, %v2365
          %v2562 = vpack.c.b16 %v2374, %v2370
          %v2563 = vpack.c.b16 %v2375, %v2371
          %v2564 = vpack.c.b16 %v2376, %v2372
          %v2565 = vpack.c.b16 %v2377, %v2373
          %v2566 = vpack.c.b16 %v2382, %v2378
          %v2567 = vpack.c.b16 %v2383, %v2379
          %v2568 = vpack.c.b16 %v2384, %v2380
          %v2569 = vpack.c.b16 %v2385, %v2381
          %v2570 = vpack.c.b16 %v2390, %v2386
          %v2571 = vpack.c.b16 %v2391, %v2387
          %v2572 = vpack.c.b16 %v2392, %v2388
          %v2573 = vpack.c.b16 %v2393, %v2389
          %v2574 = vpack.c.b16 %v2398, %v2394
          %v2575 = vpack.c.b16 %v2399, %v2395
          %v2576 = vpack.c.b16 %v2400, %v2396
          %v2577 = vpack.c.b16 %v2401, %v2397
          %v2578 = vpack.c.b16 %v2406, %v2402
          %v2579 = vpack.c.b16 %v2407, %v2403
          %v2580 = vpack.c.b16 %v2408, %v2404
          %v2581 = vpack.c.b16 %v2409, %v2405
          %v2582 = vpack.c.b16 %v2414, %v2410
          %v2583 = vpack.c.b16 %v2415, %v2411
          %v2584 = vpack.c.b16 %v2416, %v2412
          %v2585 = vpack.c.b16 %v2417, %v2413
          %v2586 = vpack.c.b16 %v2422, %v2418
          %v2587 = vpack.c.b16 %v2423, %v2419
          %v2588 = vpack.c.b16 %v2424, %v2420
          %v2589 = vpack.c.b16 %v2425, %v2421
          %v2590 = vpack.c.b16 %v2430, %v2426
          %v2591 = vpack.c.b16 %v2431, %v2427
          %v2592 = vpack.c.b16 %v2432, %v2428
          %v2593 = vpack.c.b16 %v2433, %v2429
          %v2594 = vpack.c.b16 %v2438, %v2434
          %v2595 = vpack.c.b16 %v2439, %v2435
          %v2596 = vpack.c.b16 %v2440, %v2436
          %v2597 = vpack.c.b16 %v2441, %v2437
          %v2598 = vpack.c.b16 %v2446, %v2442
          %v2599 = vpack.c.b16 %v2447, %v2443
          %v2600 = vpack.c.b16 %v2448, %v2444
          %v2601 = vpack.c.b16 %v2449, %v2445
          %v2602 = vpack.c.b16 %v2454, %v2450
          %v2603 = vpack.c.b16 %v2455, %v2451
          %v2604 = vpack.c.b16 %v2456, %v2452
          %v2605 = vpack.c.b16 %v2457, %v2453
          %v2606 = vpack.c.b16 %v2462, %v2458
          %v2607 = vpack.c.b16 %v2463, %v2459
          %v2608 = vpack.c.b16 %v2464, %v2460
          %v2609 = vpack.c.b16 %v2465, %v2461
          %v2610 = vpack.c.b16 %v2470, %v2466
          %v2611 = vpack.c.b16 %v2471, %v2467
          %v2612 = vpack.c.b16 %v2472, %v2468
          %v2613 = vpack.c.b16 %v2473, %v2469
          %v2614 = vpack.c.b16 %v2478, %v2474
          %v2615 = vpack.c.b16 %v2479, %v2475
          %v2616 = vpack.c.b16 %v2480, %v2476
          %v2617 = vpack.c.b16 %v2481, %v2477
          %v2618 = vpack.c.b16 %v2486, %v2482
          %v2619 = vpack.c.b16 %v2487, %v2483
          %v2620 = vpack.c.b16 %v2488, %v2484
          %v2621 = vpack.c.b16 %v2489, %v2485
          %v2622 = vpack.c.b16 %v2494, %v2490
          %v2623 = vpack.c.b16 %v2495, %v2491
          %v2624 = vpack.c.b16 %v2496, %v2492
          %v2625 = vpack.c.b16 %v2497, %v2493
          %2754 = vmatpush.bf16.msra.mxu0 %v2526
          %2755 = vmatpush.bf16.msra.mxu0 %v2522
          %2756 = vmatpush.bf16.msra.mxu0 %v2518
          %2757 = vmatpush.bf16.msra.mxu0 %v2514
          %2758 = vmatpush.bf16.msra.mxu0 %v2510
          %2759 = vmatpush.bf16.msra.mxu0 %v2506
          %2760 = vmatpush.bf16.msra.mxu0 %v2502
          %2761 = vmatpush.bf16.msra.mxu0 %v2498
          %2762 = vmatmul.bf16.gmra.mxu0 %v1959
          %v2763 = vpop.f32.mrf.mxu0
          %v2764 = vadd.f32 %v2106, %v2763
          %v2765 = vpop.f32.mrf.mxu0
          %v2766 = vadd.f32 %v2106, %v2765
          %2767 = vmatmul.bf16.gmra.mxu0 %v1963
          %v2768 = vpop.f32.mrf.mxu0
          %v2769 = vadd.f32 %v2106, %v2768
          %v2770 = vpop.f32.mrf.mxu0
          %v2771 = vadd.f32 %v2106, %v2770
          %2772 = vmatmul.bf16.gmra.mxu0 %v1967
          %v2773 = vpop.f32.mrf.mxu0
          %v2774 = vadd.f32 %v2106, %v2773
          %v2775 = vpop.f32.mrf.mxu0
          %v2776 = vadd.f32 %v2106, %v2775
          %2777 = vmatmul.bf16.gmra.mxu0 %v1971
          %v2778 = vpop.f32.mrf.mxu0
          %v2779 = vadd.f32 %v2106, %v2778
          %v2780 = vpop.f32.mrf.mxu0
          %v2781 = vadd.f32 %v2106, %v2780
          %2782 = vdwg.mxu0
          %2783 = vmatpush.bf16.msra.mxu0 %v2558
          %2784 = vmatpush.bf16.msra.mxu0 %v2554
          %2785 = vmatpush.bf16.msra.mxu0 %v2550
          %2786 = vmatpush.bf16.msra.mxu0 %v2546
          %2787 = vmatpush.bf16.msra.mxu0 %v2542
          %2788 = vmatpush.bf16.msra.mxu0 %v2538
          %2789 = vmatpush.bf16.msra.mxu0 %v2534
          %2790 = vmatpush.bf16.msra.mxu0 %v2530
          %2791 = vmatmul.bf16.gmra.mxu0 %v1960
          %v2792 = vpop.f32.mrf.mxu0
          %v2793 = vadd.f32 %v2764, %v2792
          %v2794 = vpop.f32.mrf.mxu0
          %v2795 = vadd.f32 %v2766, %v2794
          %2796 = vmatmul.bf16.gmra.mxu0 %v1964
          %v2797 = vpop.f32.mrf.mxu0
          %v2798 = vadd.f32 %v2769, %v2797
          %v2799 = vpop.f32.mrf.mxu0
          %v2800 = vadd.f32 %v2771, %v2799
          %2801 = vmatmul.bf16.gmra.mxu0 %v1968
          %v2802 = vpop.f32.mrf.mxu0
          %v2803 = vadd.f32 %v2774, %v2802
          %v2804 = vpop.f32.mrf.mxu0
          %v2805 = vadd.f32 %v2776, %v2804
          %2806 = vmatmul.bf16.gmra.mxu0 %v1972
          %v2807 = vpop.f32.mrf.mxu0
          %v2808 = vadd.f32 %v2779, %v2807
          %v2809 = vpop.f32.mrf.mxu0
          %v2810 = vadd.f32 %v2781, %v2809
          %2811 = vdwg.mxu0
          %2812 = vmatpush.bf16.msra.mxu0 %v2590
          %2813 = vmatpush.bf16.msra.mxu0 %v2586
          %2814 = vmatpush.bf16.msra.mxu0 %v2582
          %2815 = vmatpush.bf16.msra.mxu0 %v2578
          %2816 = vmatpush.bf16.msra.mxu0 %v2574
          %2817 = vmatpush.bf16.msra.mxu0 %v2570
          %2818 = vmatpush.bf16.msra.mxu0 %v2566
          %2819 = vmatpush.bf16.msra.mxu0 %v2562
          %2820 = vmatmul.bf16.gmra.mxu0 %v1961
          %v2821 = vpop.f32.mrf.mxu0
          %v2822 = vadd.f32 %v2793, %v2821
          %v2823 = vpop.f32.mrf.mxu0
          %v2824 = vadd.f32 %v2795, %v2823
          %2825 = vmatmul.bf16.gmra.mxu0 %v1965
          %v2826 = vpop.f32.mrf.mxu0
          %v2827 = vadd.f32 %v2798, %v2826
          %v2828 = vpop.f32.mrf.mxu0
          %v2829 = vadd.f32 %v2800, %v2828
          %2830 = vmatmul.bf16.gmra.mxu0 %v1969
          %v2831 = vpop.f32.mrf.mxu0
          %v2832 = vadd.f32 %v2803, %v2831
          %v2833 = vpop.f32.mrf.mxu0
          %v2834 = vadd.f32 %v2805, %v2833
          %2835 = vmatmul.bf16.gmra.mxu0 %v1973
          %v2836 = vpop.f32.mrf.mxu0
          %v2837 = vadd.f32 %v2808, %v2836
          %v2838 = vpop.f32.mrf.mxu0
          %v2839 = vadd.f32 %v2810, %v2838
          %2840 = vdwg.mxu0
          %2841 = vmatpush.bf16.msra.mxu0 %v2622
          %2842 = vmatpush.bf16.msra.mxu0 %v2618
          %2843 = vmatpush.bf16.msra.mxu0 %v2614
          %2844 = vmatpush.bf16.msra.mxu0 %v2610
          %2845 = vmatpush.bf16.msra.mxu0 %v2606
          %2846 = vmatpush.bf16.msra.mxu0 %v2602
          %2847 = vmatpush.bf16.msra.mxu0 %v2598
          %2848 = vmatpush.bf16.msra.mxu0 %v2594
          %2849 = vmatmul.bf16.gmra.mxu0 %v1962
          %v2850 = vpop.f32.mrf.mxu0
          %v2851 = vadd.f32 %v2822, %v2850
          %v2852 = vpop.f32.mrf.mxu0
          %v2853 = vadd.f32 %v2824, %v2852
          %2854 = vmatmul.bf16.gmra.mxu0 %v1966
          %v2855 = vpop.f32.mrf.mxu0
          %v2856 = vadd.f32 %v2827, %v2855
          %v2857 = vpop.f32.mrf.mxu0
          %v2858 = vadd.f32 %v2829, %v2857
          %2859 = vmatmul.bf16.gmra.mxu0 %v1970
          %v2860 = vpop.f32.mrf.mxu0
          %v2861 = vadd.f32 %v2832, %v2860
          %v2862 = vpop.f32.mrf.mxu0
          %v2863 = vadd.f32 %v2834, %v2862
          %2864 = vmatmul.bf16.gmra.mxu0 %v1974
          %v2865 = vpop.f32.mrf.mxu0
          %v2866 = vadd.f32 %v2837, %v2865
          %v2867 = vpop.f32.mrf.mxu0
          %v2868 = vadd.f32 %v2839, %v2867
          %2869 = vdwg.mxu0
          %2870 = vmatpush.bf16.msra.mxu0 %v2527
          %2871 = vmatpush.bf16.msra.mxu0 %v2523
          %2872 = vmatpush.bf16.msra.mxu0 %v2519
          %2873 = vmatpush.bf16.msra.mxu0 %v2515
          %2874 = vmatpush.bf16.msra.mxu0 %v2511
          %2875 = vmatpush.bf16.msra.mxu0 %v2507
          %2876 = vmatpush.bf16.msra.mxu0 %v2503
          %2877 = vmatpush.bf16.msra.mxu0 %v2499
          %2878 = vmatmul.bf16.gmra.mxu0 %v1959
          %v2879 = vpop.f32.mrf.mxu0
          %v2880 = vadd.f32 %v2107, %v2879
          %v2881 = vpop.f32.mrf.mxu0
          %v2882 = vadd.f32 %v2107, %v2881
          %2883 = vmatmul.bf16.gmra.mxu0 %v1963
          %v2884 = vpop.f32.mrf.mxu0
          %v2885 = vadd.f32 %v2107, %v2884
          %v2886 = vpop.f32.mrf.mxu0
          %v2887 = vadd.f32 %v2107, %v2886
          %2888 = vmatmul.bf16.gmra.mxu0 %v1967
          %v2889 = vpop.f32.mrf.mxu0
          %v2890 = vadd.f32 %v2107, %v2889
          %v2891 = vpop.f32.mrf.mxu0
          %v2892 = vadd.f32 %v2107, %v2891
          %2893 = vmatmul.bf16.gmra.mxu0 %v1971
          %v2894 = vpop.f32.mrf.mxu0
          %v2895 = vadd.f32 %v2107, %v2894
          %v2896 = vpop.f32.mrf.mxu0
          %v2897 = vadd.f32 %v2107, %v2896
          %2898 = vdwg.mxu0
          %2899 = vmatpush.bf16.msra.mxu0 %v2559
          %2900 = vmatpush.bf16.msra.mxu0 %v2555
          %2901 = vmatpush.bf16.msra.mxu0 %v2551
          %2902 = vmatpush.bf16.msra.mxu0 %v2547
          %2903 = vmatpush.bf16.msra.mxu0 %v2543
          %2904 = vmatpush.bf16.msra.mxu0 %v2539
          %2905 = vmatpush.bf16.msra.mxu0 %v2535
          %2906 = vmatpush.bf16.msra.mxu0 %v2531
          %2907 = vmatmul.bf16.gmra.mxu0 %v1960
          %v2908 = vpop.f32.mrf.mxu0
          %v2909 = vadd.f32 %v2880, %v2908
          %v2910 = vpop.f32.mrf.mxu0
          %v2911 = vadd.f32 %v2882, %v2910
          %2912 = vmatmul.bf16.gmra.mxu0 %v1964
          %v2913 = vpop.f32.mrf.mxu0
          %v2914 = vadd.f32 %v2885, %v2913
          %v2915 = vpop.f32.mrf.mxu0
          %v2916 = vadd.f32 %v2887, %v2915
          %2917 = vmatmul.bf16.gmra.mxu0 %v1968
          %v2918 = vpop.f32.mrf.mxu0
          %v2919 = vadd.f32 %v2890, %v2918
          %v2920 = vpop.f32.mrf.mxu0
          %v2921 = vadd.f32 %v2892, %v2920
          %2922 = vmatmul.bf16.gmra.mxu0 %v1972
          %v2923 = vpop.f32.mrf.mxu0
          %v2924 = vadd.f32 %v2895, %v2923
          %v2925 = vpop.f32.mrf.mxu0
          %v2926 = vadd.f32 %v2897, %v2925
          %2927 = vdwg.mxu0
          %2928 = vmatpush.bf16.msra.mxu0 %v2591
          %2929 = vmatpush.bf16.msra.mxu0 %v2587
          %2930 = vmatpush.bf16.msra.mxu0 %v2583
          %2931 = vmatpush.bf16.msra.mxu0 %v2579
          %2932 = vmatpush.bf16.msra.mxu0 %v2575
          %2933 = vmatpush.bf16.msra.mxu0 %v2571
          %2934 = vmatpush.bf16.msra.mxu0 %v2567
          %2935 = vmatpush.bf16.msra.mxu0 %v2563
          %2936 = vmatmul.bf16.gmra.mxu0 %v1961
          %v2937 = vpop.f32.mrf.mxu0
          %v2938 = vadd.f32 %v2909, %v2937
          %v2939 = vpop.f32.mrf.mxu0
          %v2940 = vadd.f32 %v2911, %v2939
          %2941 = vmatmul.bf16.gmra.mxu0 %v1965
          %v2942 = vpop.f32.mrf.mxu0
          %v2943 = vadd.f32 %v2914, %v2942
          %v2944 = vpop.f32.mrf.mxu0
          %v2945 = vadd.f32 %v2916, %v2944
          %2946 = vmatmul.bf16.gmra.mxu0 %v1969
          %v2947 = vpop.f32.mrf.mxu0
          %v2948 = vadd.f32 %v2919, %v2947
          %v2949 = vpop.f32.mrf.mxu0
          %v2950 = vadd.f32 %v2921, %v2949
          %2951 = vmatmul.bf16.gmra.mxu0 %v1973
          %v2952 = vpop.f32.mrf.mxu0
          %v2953 = vadd.f32 %v2924, %v2952
          %v2954 = vpop.f32.mrf.mxu0
          %v2955 = vadd.f32 %v2926, %v2954
          %2956 = vdwg.mxu0
          %2957 = vmatpush.bf16.msra.mxu0 %v2623
          %2958 = vmatpush.bf16.msra.mxu0 %v2619
          %2959 = vmatpush.bf16.msra.mxu0 %v2615
          %2960 = vmatpush.bf16.msra.mxu0 %v2611
          %2961 = vmatpush.bf16.msra.mxu0 %v2607
          %2962 = vmatpush.bf16.msra.mxu0 %v2603
          %2963 = vmatpush.bf16.msra.mxu0 %v2599
          %2964 = vmatpush.bf16.msra.mxu0 %v2595
          %2965 = vmatmul.bf16.gmra.mxu0 %v1962
          %v2966 = vpop.f32.mrf.mxu0
          %v2967 = vadd.f32 %v2938, %v2966
          %v2968 = vpop.f32.mrf.mxu0
          %v2969 = vadd.f32 %v2940, %v2968
          %2970 = vmatmul.bf16.gmra.mxu0 %v1966
          %v2971 = vpop.f32.mrf.mxu0
          %v2972 = vadd.f32 %v2943, %v2971
          %v2973 = vpop.f32.mrf.mxu0
          %v2974 = vadd.f32 %v2945, %v2973
          %2975 = vmatmul.bf16.gmra.mxu0 %v1970
          %v2976 = vpop.f32.mrf.mxu0
          %v2977 = vadd.f32 %v2948, %v2976
          %v2978 = vpop.f32.mrf.mxu0
          %v2979 = vadd.f32 %v2950, %v2978
          %2980 = vmatmul.bf16.gmra.mxu0 %v1974
          %v2981 = vpop.f32.mrf.mxu0
          %v2982 = vadd.f32 %v2953, %v2981
          %v2983 = vpop.f32.mrf.mxu0
          %v2984 = vadd.f32 %v2955, %v2983
          %2985 = vdwg.mxu0
          %2986 = vmatpush.bf16.msra.mxu0 %v2528
          %2987 = vmatpush.bf16.msra.mxu0 %v2524
          %2988 = vmatpush.bf16.msra.mxu0 %v2520
          %2989 = vmatpush.bf16.msra.mxu0 %v2516
          %2990 = vmatpush.bf16.msra.mxu0 %v2512
          %2991 = vmatpush.bf16.msra.mxu0 %v2508
          %2992 = vmatpush.bf16.msra.mxu0 %v2504
          %2993 = vmatpush.bf16.msra.mxu0 %v2500
          %2994 = vmatmul.bf16.gmra.mxu0 %v1959
          %v2995 = vpop.f32.mrf.mxu0
          %v2996 = vadd.f32 %v2108, %v2995
          %v2997 = vpop.f32.mrf.mxu0
          %v2998 = vadd.f32 %v2108, %v2997
          %2999 = vmatmul.bf16.gmra.mxu0 %v1963
          %v3000 = vpop.f32.mrf.mxu0
          %v3001 = vadd.f32 %v2108, %v3000
          %v3002 = vpop.f32.mrf.mxu0
          %v3003 = vadd.f32 %v2108, %v3002
          %3004 = vmatmul.bf16.gmra.mxu0 %v1967
          %v3005 = vpop.f32.mrf.mxu0
          %v3006 = vadd.f32 %v2108, %v3005
          %v3007 = vpop.f32.mrf.mxu0
          %v3008 = vadd.f32 %v2108, %v3007
          %3009 = vmatmul.bf16.gmra.mxu0 %v1971
          %v3010 = vpop.f32.mrf.mxu0
          %v3011 = vadd.f32 %v2108, %v3010
          %v3012 = vpop.f32.mrf.mxu0
          %v3013 = vadd.f32 %v2108, %v3012
          %3014 = vdwg.mxu0
          %3015 = vmatpush.bf16.msra.mxu0 %v2560
          %3016 = vmatpush.bf16.msra.mxu0 %v2556
          %3017 = vmatpush.bf16.msra.mxu0 %v2552
          %3018 = vmatpush.bf16.msra.mxu0 %v2548
          %3019 = vmatpush.bf16.msra.mxu0 %v2544
          %3020 = vmatpush.bf16.msra.mxu0 %v2540
          %3021 = vmatpush.bf16.msra.mxu0 %v2536
          %3022 = vmatpush.bf16.msra.mxu0 %v2532
          %3023 = vmatmul.bf16.gmra.mxu0 %v1960
          %v3024 = vpop.f32.mrf.mxu0
          %v3025 = vadd.f32 %v2996, %v3024
          %v3026 = vpop.f32.mrf.mxu0
          %v3027 = vadd.f32 %v2998, %v3026
          %3028 = vmatmul.bf16.gmra.mxu0 %v1964
          %v3029 = vpop.f32.mrf.mxu0
          %v3030 = vadd.f32 %v3001, %v3029
          %v3031 = vpop.f32.mrf.mxu0
          %v3032 = vadd.f32 %v3003, %v3031
          %3033 = vmatmul.bf16.gmra.mxu0 %v1968
          %v3034 = vpop.f32.mrf.mxu0
          %v3035 = vadd.f32 %v3006, %v3034
          %v3036 = vpop.f32.mrf.mxu0
          %v3037 = vadd.f32 %v3008, %v3036
          %3038 = vmatmul.bf16.gmra.mxu0 %v1972
          %v3039 = vpop.f32.mrf.mxu0
          %v3040 = vadd.f32 %v3011, %v3039
          %v3041 = vpop.f32.mrf.mxu0
          %v3042 = vadd.f32 %v3013, %v3041
          %3043 = vdwg.mxu0
          %3044 = vmatpush.bf16.msra.mxu0 %v2592
          %3045 = vmatpush.bf16.msra.mxu0 %v2588
          %3046 = vmatpush.bf16.msra.mxu0 %v2584
          %3047 = vmatpush.bf16.msra.mxu0 %v2580
          %3048 = vmatpush.bf16.msra.mxu0 %v2576
          %3049 = vmatpush.bf16.msra.mxu0 %v2572
          %3050 = vmatpush.bf16.msra.mxu0 %v2568
          %3051 = vmatpush.bf16.msra.mxu0 %v2564
          %3052 = vmatmul.bf16.gmra.mxu0 %v1961
          %v3053 = vpop.f32.mrf.mxu0
          %v3054 = vadd.f32 %v3025, %v3053
          %v3055 = vpop.f32.mrf.mxu0
          %v3056 = vadd.f32 %v3027, %v3055
          %3057 = vmatmul.bf16.gmra.mxu0 %v1965
          %v3058 = vpop.f32.mrf.mxu0
          %v3059 = vadd.f32 %v3030, %v3058
          %v3060 = vpop.f32.mrf.mxu0
          %v3061 = vadd.f32 %v3032, %v3060
          %3062 = vmatmul.bf16.gmra.mxu0 %v1969
          %v3063 = vpop.f32.mrf.mxu0
          %v3064 = vadd.f32 %v3035, %v3063
          %v3065 = vpop.f32.mrf.mxu0
          %v3066 = vadd.f32 %v3037, %v3065
          %3067 = vmatmul.bf16.gmra.mxu0 %v1973
          %v3068 = vpop.f32.mrf.mxu0
          %v3069 = vadd.f32 %v3040, %v3068
          %v3070 = vpop.f32.mrf.mxu0
          %v3071 = vadd.f32 %v3042, %v3070
          %3072 = vdwg.mxu0
          %3073 = vmatpush.bf16.msra.mxu0 %v2624
          %3074 = vmatpush.bf16.msra.mxu0 %v2620
          %3075 = vmatpush.bf16.msra.mxu0 %v2616
          %3076 = vmatpush.bf16.msra.mxu0 %v2612
          %3077 = vmatpush.bf16.msra.mxu0 %v2608
          %3078 = vmatpush.bf16.msra.mxu0 %v2604
          %3079 = vmatpush.bf16.msra.mxu0 %v2600
          %3080 = vmatpush.bf16.msra.mxu0 %v2596
          %3081 = vmatmul.bf16.gmra.mxu0 %v1962
          %v3082 = vpop.f32.mrf.mxu0
          %v3083 = vadd.f32 %v3054, %v3082
          %v3084 = vpop.f32.mrf.mxu0
          %v3085 = vadd.f32 %v3056, %v3084
          %3086 = vmatmul.bf16.gmra.mxu0 %v1966
          %v3087 = vpop.f32.mrf.mxu0
          %v3088 = vadd.f32 %v3059, %v3087
          %v3089 = vpop.f32.mrf.mxu0
          %v3090 = vadd.f32 %v3061, %v3089
          %3091 = vmatmul.bf16.gmra.mxu0 %v1970
          %v3092 = vpop.f32.mrf.mxu0
          %v3093 = vadd.f32 %v3064, %v3092
          %v3094 = vpop.f32.mrf.mxu0
          %v3095 = vadd.f32 %v3066, %v3094
          %3096 = vmatmul.bf16.gmra.mxu0 %v1974
          %v3097 = vpop.f32.mrf.mxu0
          %v3098 = vadd.f32 %v3069, %v3097
          %v3099 = vpop.f32.mrf.mxu0
          %v3100 = vadd.f32 %v3071, %v3099
          %3101 = vdwg.mxu0
          %3102 = vmatpush.bf16.msra.mxu0 %v2529
          %3103 = vmatpush.bf16.msra.mxu0 %v2525
          %3104 = vmatpush.bf16.msra.mxu0 %v2521
          %3105 = vmatpush.bf16.msra.mxu0 %v2517
          %3106 = vmatpush.bf16.msra.mxu0 %v2513
          %3107 = vmatpush.bf16.msra.mxu0 %v2509
          %3108 = vmatpush.bf16.msra.mxu0 %v2505
          %3109 = vmatpush.bf16.msra.mxu0 %v2501
          %3110 = vmatmul.bf16.gmra.mxu0 %v1959
          %v3111 = vpop.f32.mrf.mxu0
          %v3112 = vadd.f32 %v2109, %v3111
          %v3113 = vpop.f32.mrf.mxu0
          %v3114 = vadd.f32 %v2109, %v3113
          %3115 = vmatmul.bf16.gmra.mxu0 %v1963
          %v3116 = vpop.f32.mrf.mxu0
          %v3117 = vadd.f32 %v2109, %v3116
          %v3118 = vpop.f32.mrf.mxu0
          %v3119 = vadd.f32 %v2109, %v3118
          %3120 = vmatmul.bf16.gmra.mxu0 %v1967
          %v3121 = vpop.f32.mrf.mxu0
          %v3122 = vadd.f32 %v2109, %v3121
          %v3123 = vpop.f32.mrf.mxu0
          %v3124 = vadd.f32 %v2109, %v3123
          %3125 = vmatmul.bf16.gmra.mxu0 %v1971
          %v3126 = vpop.f32.mrf.mxu0
          %v3127 = vadd.f32 %v2109, %v3126
          %v3128 = vpop.f32.mrf.mxu0
          %v3129 = vadd.f32 %v2109, %v3128
          %3130 = vdwg.mxu0
          %3131 = vmatpush.bf16.msra.mxu0 %v2561
          %3132 = vmatpush.bf16.msra.mxu0 %v2557
          %3133 = vmatpush.bf16.msra.mxu0 %v2553
          %3134 = vmatpush.bf16.msra.mxu0 %v2549
          %3135 = vmatpush.bf16.msra.mxu0 %v2545
          %3136 = vmatpush.bf16.msra.mxu0 %v2541
          %3137 = vmatpush.bf16.msra.mxu0 %v2537
          %3138 = vmatpush.bf16.msra.mxu0 %v2533
          %3139 = vmatmul.bf16.gmra.mxu0 %v1960
          %v3140 = vpop.f32.mrf.mxu0
          %v3141 = vadd.f32 %v3112, %v3140
          %v3142 = vpop.f32.mrf.mxu0
          %v3143 = vadd.f32 %v3114, %v3142
          %3144 = vmatmul.bf16.gmra.mxu0 %v1964
          %v3145 = vpop.f32.mrf.mxu0
          %v3146 = vadd.f32 %v3117, %v3145
          %v3147 = vpop.f32.mrf.mxu0
          %v3148 = vadd.f32 %v3119, %v3147
          %3149 = vmatmul.bf16.gmra.mxu0 %v1968
          %v3150 = vpop.f32.mrf.mxu0
          %v3151 = vadd.f32 %v3122, %v3150
          %v3152 = vpop.f32.mrf.mxu0
          %v3153 = vadd.f32 %v3124, %v3152
          %3154 = vmatmul.bf16.gmra.mxu0 %v1972
          %v3155 = vpop.f32.mrf.mxu0
          %v3156 = vadd.f32 %v3127, %v3155
          %v3157 = vpop.f32.mrf.mxu0
          %v3158 = vadd.f32 %v3129, %v3157
          %3159 = vdwg.mxu0
          %3160 = vmatpush.bf16.msra.mxu0 %v2593
          %3161 = vmatpush.bf16.msra.mxu0 %v2589
          %3162 = vmatpush.bf16.msra.mxu0 %v2585
          %3163 = vmatpush.bf16.msra.mxu0 %v2581
          %3164 = vmatpush.bf16.msra.mxu0 %v2577
          %3165 = vmatpush.bf16.msra.mxu0 %v2573
          %3166 = vmatpush.bf16.msra.mxu0 %v2569
          %3167 = vmatpush.bf16.msra.mxu0 %v2565
          %3168 = vmatmul.bf16.gmra.mxu0 %v1961
          %v3169 = vpop.f32.mrf.mxu0
          %v3170 = vadd.f32 %v3141, %v3169
          %v3171 = vpop.f32.mrf.mxu0
          %v3172 = vadd.f32 %v3143, %v3171
          %3173 = vmatmul.bf16.gmra.mxu0 %v1965
          %v3174 = vpop.f32.mrf.mxu0
          %v3175 = vadd.f32 %v3146, %v3174
          %v3176 = vpop.f32.mrf.mxu0
          %v3177 = vadd.f32 %v3148, %v3176
          %3178 = vmatmul.bf16.gmra.mxu0 %v1969
          %v3179 = vpop.f32.mrf.mxu0
          %v3180 = vadd.f32 %v3151, %v3179
          %v3181 = vpop.f32.mrf.mxu0
          %v3182 = vadd.f32 %v3153, %v3181
          %3183 = vmatmul.bf16.gmra.mxu0 %v1973
          %v3184 = vpop.f32.mrf.mxu0
          %v3185 = vadd.f32 %v3156, %v3184
          %v3186 = vpop.f32.mrf.mxu0
          %v3187 = vadd.f32 %v3158, %v3186
          %3188 = vdwg.mxu0
          %3189 = vmatpush.bf16.msra.mxu0 %v2625
          %3190 = vmatpush.bf16.msra.mxu0 %v2621
          %3191 = vmatpush.bf16.msra.mxu0 %v2617
          %3192 = vmatpush.bf16.msra.mxu0 %v2613
          %3193 = vmatpush.bf16.msra.mxu0 %v2609
          %3194 = vmatpush.bf16.msra.mxu0 %v2605
          %3195 = vmatpush.bf16.msra.mxu0 %v2601
          %3196 = vmatpush.bf16.msra.mxu0 %v2597
          %3197 = vmatmul.bf16.gmra.mxu0 %v1962
          %v3198 = vpop.f32.mrf.mxu0
          %v3199 = vadd.f32 %v3170, %v3198
          %v3200 = vpop.f32.mrf.mxu0
          %v3201 = vadd.f32 %v3172, %v3200
          %3202 = vmatmul.bf16.gmra.mxu0 %v1966
          %v3203 = vpop.f32.mrf.mxu0
          %v3204 = vadd.f32 %v3175, %v3203
          %v3205 = vpop.f32.mrf.mxu0
          %v3206 = vadd.f32 %v3177, %v3205
          %3207 = vmatmul.bf16.gmra.mxu0 %v1970
          %v3208 = vpop.f32.mrf.mxu0
          %v3209 = vadd.f32 %v3180, %v3208
          %v3210 = vpop.f32.mrf.mxu0
          %v3211 = vadd.f32 %v3182, %v3210
          %3212 = vmatmul.bf16.gmra.mxu0 %v1974
          %v3213 = vpop.f32.mrf.mxu0
          %v3214 = vadd.f32 %v3185, %v3213
          %v3215 = vpop.f32.mrf.mxu0
          %v3216 = vadd.f32 %v3187, %v3215
          %3217 = vdwg.mxu0
          %v3218 = vpack.c.bf16 %v2853, %v2851
          %v3219 = vpack.c.bf16 %v2969, %v2967
          %v3220 = vpack.c.bf16 %v3085, %v3083
          %v3221 = vpack.c.bf16 %v3201, %v3199
          %v3222 = vpack.c.bf16 %v2858, %v2856
          %v3223 = vpack.c.bf16 %v2974, %v2972
          %v3224 = vpack.c.bf16 %v3090, %v3088
          %v3225 = vpack.c.bf16 %v3206, %v3204
          %v3226 = vpack.c.bf16 %v2863, %v2861
          %v3227 = vpack.c.bf16 %v2979, %v2977
          %v3228 = vpack.c.bf16 %v3095, %v3093
          %v3229 = vpack.c.bf16 %v3211, %v3209
          %v3230 = vpack.c.bf16 %v2868, %v2866
          %v3231 = vpack.c.bf16 %v2984, %v2982
          %v3232 = vpack.c.bf16 %v3100, %v3098
          %v3233 = vpack.c.bf16 %v3216, %v3214
          %v3234 = vld [vmem:[%s8] sm:$0xf]
          %v3235 = vld [vmem:[%s8 + $0x4] sm:$0xf]
          %v3236 = vld [vmem:[%s8 + $0x8] sm:$0xf]
          %v3237 = vld [vmem:[%s8 + $0xc] sm:$0xf]
          %v3238 = vld [vmem:[%s8 + $0x10] sm:$0xf]
          %v3239 = vld [vmem:[%s8 + $0x14] sm:$0xf]
          %v3240 = vld [vmem:[%s8 + $0x18] sm:$0xf]
          %v3241 = vld [vmem:[%s8 + $0x1c] sm:$0xf]
          %v3242 = vld [vmem:[%s8 + $0x20] sm:$0xf]
          %v3243 = vld [vmem:[%s8 + $0x24] sm:$0xf]
          %v3244 = vld [vmem:[%s8 + $0x28] sm:$0xf]
          %v3245 = vld [vmem:[%s8 + $0x2c] sm:$0xf]
          %v3246 = vld [vmem:[%s8 + $0x30] sm:$0xf]
          %v3247 = vld [vmem:[%s8 + $0x34] sm:$0xf]
          %v3248 = vld [vmem:[%s8 + $0x38] sm:$0xf]
          %v3249 = vld [vmem:[%s8 + $0x3c] sm:$0xf]
          %v3250 = vld [vmem:[%s8 + $0x40] sm:$0xf]
          %v3251 = vld [vmem:[%s8 + $0x44] sm:$0xf]
          %v3252 = vld [vmem:[%s8 + $0x48] sm:$0xf]
          %v3253 = vld [vmem:[%s8 + $0x4c] sm:$0xf]
          %v3254 = vld [vmem:[%s8 + $0x50] sm:$0xf]
          %v3255 = vld [vmem:[%s8 + $0x54] sm:$0xf]
          %v3256 = vld [vmem:[%s8 + $0x58] sm:$0xf]
          %v3257 = vld [vmem:[%s8 + $0x5c] sm:$0xf]
          %v3258 = vld [vmem:[%s8 + $0x60] sm:$0xf]
          %v3259 = vld [vmem:[%s8 + $0x64] sm:$0xf]
          %v3260 = vld [vmem:[%s8 + $0x68] sm:$0xf]
          %v3261 = vld [vmem:[%s8 + $0x6c] sm:$0xf]
          %v3262 = vld [vmem:[%s8 + $0x70] sm:$0xf]
          %v3263 = vld [vmem:[%s8 + $0x74] sm:$0xf]
          %v3264 = vld [vmem:[%s8 + $0x78] sm:$0xf]
          %v3265 = vld [vmem:[%s8 + $0x7c] sm:$0xf]
          %v3266 = vld [vmem:[%s8 + $0x80] sm:$0xf]
          %v3267 = vld [vmem:[%s8 + $0x84] sm:$0xf]
          %v3268 = vld [vmem:[%s8 + $0x88] sm:$0xf]
          %v3269 = vld [vmem:[%s8 + $0x8c] sm:$0xf]
          %v3270 = vld [vmem:[%s8 + $0x90] sm:$0xf]
          %v3271 = vld [vmem:[%s8 + $0x94] sm:$0xf]
          %v3272 = vld [vmem:[%s8 + $0x98] sm:$0xf]
          %v3273 = vld [vmem:[%s8 + $0x9c] sm:$0xf]
          %v3274 = vld [vmem:[%s8 + $0xa0] sm:$0xf]
          %v3275 = vld [vmem:[%s8 + $0xa4] sm:$0xf]
          %v3276 = vld [vmem:[%s8 + $0xa8] sm:$0xf]
          %v3277 = vld [vmem:[%s8 + $0xac] sm:$0xf]
          %v3278 = vld [vmem:[%s8 + $0xb0] sm:$0xf]
          %v3279 = vld [vmem:[%s8 + $0xb4] sm:$0xf]
          %v3280 = vld [vmem:[%s8 + $0xb8] sm:$0xf]
          %v3281 = vld [vmem:[%s8 + $0xbc] sm:$0xf]
          %v3282 = vld [vmem:[%s8 + $0xc0] sm:$0xf]
          %v3283 = vld [vmem:[%s8 + $0xc4] sm:$0xf]
          %v3284 = vld [vmem:[%s8 + $0xc8] sm:$0xf]
          %v3285 = vld [vmem:[%s8 + $0xcc] sm:$0xf]
          %v3286 = vld [vmem:[%s8 + $0xd0] sm:$0xf]
          %v3287 = vld [vmem:[%s8 + $0xd4] sm:$0xf]
          %v3288 = vld [vmem:[%s8 + $0xd8] sm:$0xf]
          %v3289 = vld [vmem:[%s8 + $0xdc] sm:$0xf]
          %v3290 = vld [vmem:[%s8 + $0xe0] sm:$0xf]
          %v3291 = vld [vmem:[%s8 + $0xe4] sm:$0xf]
          %v3292 = vld [vmem:[%s8 + $0xe8] sm:$0xf]
          %v3293 = vld [vmem:[%s8 + $0xec] sm:$0xf]
          %v3294 = vld [vmem:[%s8 + $0xf0] sm:$0xf]
          %v3295 = vld [vmem:[%s8 + $0xf4] sm:$0xf]
          %v3296 = vld [vmem:[%s8 + $0xf8] sm:$0xf]
          %v3297 = vld [vmem:[%s8 + $0xfc] sm:$0xf]
          %v3298 = vld [vmem:[%s3 + $0x5] ss:$0 sm:$0xff]
          %v3363 = vunpack.c.l.b16 %v3234
          %v3364 = vunpack.c.l.b16 %v3235
          %v3365 = vunpack.c.l.b16 %v3236
          %v3366 = vunpack.c.l.b16 %v3237
          %v3367 = vunpack.c.l.b16 %v3238
          %v3368 = vunpack.c.l.b16 %v3239
          %v3369 = vunpack.c.l.b16 %v3240
          %v3370 = vunpack.c.l.b16 %v3241
          %v3371 = vunpack.c.l.b16 %v3242
          %v3372 = vunpack.c.l.b16 %v3243
          %v3373 = vunpack.c.l.b16 %v3244
          %v3374 = vunpack.c.l.b16 %v3245
          %v3375 = vunpack.c.l.b16 %v3246
          %v3376 = vunpack.c.l.b16 %v3247
          %v3377 = vunpack.c.l.b16 %v3248
          %v3378 = vunpack.c.l.b16 %v3249
          %v3379 = vunpack.c.l.b16 %v3250
          %v3380 = vunpack.c.l.b16 %v3251
          %v3381 = vunpack.c.l.b16 %v3252
          %v3382 = vunpack.c.l.b16 %v3253
          %v3383 = vunpack.c.l.b16 %v3254
          %v3384 = vunpack.c.l.b16 %v3255
          %v3385 = vunpack.c.l.b16 %v3256
          %v3386 = vunpack.c.l.b16 %v3257
          %v3387 = vunpack.c.l.b16 %v3258
          %v3388 = vunpack.c.l.b16 %v3259
          %v3389 = vunpack.c.l.b16 %v3260
          %v3390 = vunpack.c.l.b16 %v3261
          %v3391 = vunpack.c.l.b16 %v3262
          %v3392 = vunpack.c.l.b16 %v3263
          %v3393 = vunpack.c.l.b16 %v3264
          %v3394 = vunpack.c.l.b16 %v3265
          %v3395 = vunpack.c.l.b16 %v3266
          %v3396 = vunpack.c.l.b16 %v3267
          %v3397 = vunpack.c.l.b16 %v3268
          %v3398 = vunpack.c.l.b16 %v3269
          %v3399 = vunpack.c.l.b16 %v3270
          %v3400 = vunpack.c.l.b16 %v3271
          %v3401 = vunpack.c.l.b16 %v3272
          %v3402 = vunpack.c.l.b16 %v3273
          %v3403 = vunpack.c.l.b16 %v3274
          %v3404 = vunpack.c.l.b16 %v3275
          %v3405 = vunpack.c.l.b16 %v3276
          %v3406 = vunpack.c.l.b16 %v3277
          %v3407 = vunpack.c.l.b16 %v3278
          %v3408 = vunpack.c.l.b16 %v3279
          %v3409 = vunpack.c.l.b16 %v3280
          %v3410 = vunpack.c.l.b16 %v3281
          %v3411 = vunpack.c.l.b16 %v3282
          %v3412 = vunpack.c.l.b16 %v3283
          %v3413 = vunpack.c.l.b16 %v3284
          %v3414 = vunpack.c.l.b16 %v3285
          %v3415 = vunpack.c.l.b16 %v3286
          %v3416 = vunpack.c.l.b16 %v3287
          %v3417 = vunpack.c.l.b16 %v3288
          %v3418 = vunpack.c.l.b16 %v3289
          %v3419 = vunpack.c.l.b16 %v3290
          %v3420 = vunpack.c.l.b16 %v3291
          %v3421 = vunpack.c.l.b16 %v3292
          %v3422 = vunpack.c.l.b16 %v3293
          %v3423 = vunpack.c.l.b16 %v3294
          %v3424 = vunpack.c.l.b16 %v3295
          %v3425 = vunpack.c.l.b16 %v3296
          %v3426 = vunpack.c.l.b16 %v3297
          %v3427 = vpack.c.b16 %v3364, %v3363
          %v3428 = vpack.c.b16 %v3366, %v3365
          %v3429 = vpack.c.b16 %v3368, %v3367
          %v3430 = vpack.c.b16 %v3370, %v3369
          %v3431 = vpack.c.b16 %v3372, %v3371
          %v3432 = vpack.c.b16 %v3374, %v3373
          %v3433 = vpack.c.b16 %v3376, %v3375
          %v3434 = vpack.c.b16 %v3378, %v3377
          %v3435 = vpack.c.b16 %v3380, %v3379
          %v3436 = vpack.c.b16 %v3382, %v3381
          %v3437 = vpack.c.b16 %v3384, %v3383
          %v3438 = vpack.c.b16 %v3386, %v3385
          %v3439 = vpack.c.b16 %v3388, %v3387
          %v3440 = vpack.c.b16 %v3390, %v3389
          %v3441 = vpack.c.b16 %v3392, %v3391
          %v3442 = vpack.c.b16 %v3394, %v3393
          %v3443 = vpack.c.b16 %v3396, %v3395
          %v3444 = vpack.c.b16 %v3398, %v3397
          %v3445 = vpack.c.b16 %v3400, %v3399
          %v3446 = vpack.c.b16 %v3402, %v3401
          %v3447 = vpack.c.b16 %v3404, %v3403
          %v3448 = vpack.c.b16 %v3406, %v3405
          %v3449 = vpack.c.b16 %v3408, %v3407
          %v3450 = vpack.c.b16 %v3410, %v3409
          %v3451 = vpack.c.b16 %v3412, %v3411
          %v3452 = vpack.c.b16 %v3414, %v3413
          %v3453 = vpack.c.b16 %v3416, %v3415
          %v3454 = vpack.c.b16 %v3418, %v3417
          %v3455 = vpack.c.b16 %v3420, %v3419
          %v3456 = vpack.c.b16 %v3422, %v3421
          %v3457 = vpack.c.b16 %v3424, %v3423
          %v3458 = vpack.c.b16 %v3426, %v3425
          %3491 = vmatpush.bf16.msra.mxu0 %v3434
          %3492 = vmatpush.bf16.msra.mxu0 %v3433
          %3493 = vmatpush.bf16.msra.mxu0 %v3432
          %3494 = vmatpush.bf16.msra.mxu0 %v3431
          %3495 = vmatpush.bf16.msra.mxu0 %v3430
          %3496 = vmatpush.bf16.msra.mxu0 %v3429
          %3497 = vmatpush.bf16.msra.mxu0 %v3428
          %3498 = vmatpush.bf16.msra.mxu0 %v3427
          %3499 = vmatmul.bf16.gmra.mxu0 %v3218
          %v3500 = vpop.f32.mrf.mxu0
          %v3501 = vadd.f32 %v3298, %v3500
          %v3502 = vpop.f32.mrf.mxu0
          %v3503 = vadd.f32 %v3298, %v3502
          %3504 = vmatmul.bf16.gmra.mxu0 %v3222
          %v3505 = vpop.f32.mrf.mxu0
          %v3506 = vadd.f32 %v3298, %v3505
          %v3507 = vpop.f32.mrf.mxu0
          %v3508 = vadd.f32 %v3298, %v3507
          %3509 = vmatmul.bf16.gmra.mxu0 %v3226
          %v3510 = vpop.f32.mrf.mxu0
          %v3511 = vadd.f32 %v3298, %v3510
          %v3512 = vpop.f32.mrf.mxu0
          %v3513 = vadd.f32 %v3298, %v3512
          %3514 = vmatmul.bf16.gmra.mxu0 %v3230
          %v3515 = vpop.f32.mrf.mxu0
          %v3516 = vadd.f32 %v3298, %v3515
          %v3517 = vpop.f32.mrf.mxu0
          %v3518 = vadd.f32 %v3298, %v3517
          %3519 = vdwg.mxu0
          %3520 = vmatpush.bf16.msra.mxu0 %v3442
          %3521 = vmatpush.bf16.msra.mxu0 %v3441
          %3522 = vmatpush.bf16.msra.mxu0 %v3440
          %3523 = vmatpush.bf16.msra.mxu0 %v3439
          %3524 = vmatpush.bf16.msra.mxu0 %v3438
          %3525 = vmatpush.bf16.msra.mxu0 %v3437
          %3526 = vmatpush.bf16.msra.mxu0 %v3436
          %3527 = vmatpush.bf16.msra.mxu0 %v3435
          %3528 = vmatmul.bf16.gmra.mxu0 %v3219
          %v3529 = vpop.f32.mrf.mxu0
          %v3530 = vadd.f32 %v3501, %v3529
          %v3531 = vpop.f32.mrf.mxu0
          %v3532 = vadd.f32 %v3503, %v3531
          %3533 = vmatmul.bf16.gmra.mxu0 %v3223
          %v3534 = vpop.f32.mrf.mxu0
          %v3535 = vadd.f32 %v3506, %v3534
          %v3536 = vpop.f32.mrf.mxu0
          %v3537 = vadd.f32 %v3508, %v3536
          %3538 = vmatmul.bf16.gmra.mxu0 %v3227
          %v3539 = vpop.f32.mrf.mxu0
          %v3540 = vadd.f32 %v3511, %v3539
          %v3541 = vpop.f32.mrf.mxu0
          %v3542 = vadd.f32 %v3513, %v3541
          %3543 = vmatmul.bf16.gmra.mxu0 %v3231
          %v3544 = vpop.f32.mrf.mxu0
          %v3545 = vadd.f32 %v3516, %v3544
          %v3546 = vpop.f32.mrf.mxu0
          %v3547 = vadd.f32 %v3518, %v3546
          %3548 = vdwg.mxu0
          %3549 = vmatpush.bf16.msra.mxu0 %v3450
          %3550 = vmatpush.bf16.msra.mxu0 %v3449
          %3551 = vmatpush.bf16.msra.mxu0 %v3448
          %3552 = vmatpush.bf16.msra.mxu0 %v3447
          %3553 = vmatpush.bf16.msra.mxu0 %v3446
          %3554 = vmatpush.bf16.msra.mxu0 %v3445
          %3555 = vmatpush.bf16.msra.mxu0 %v3444
          %3556 = vmatpush.bf16.msra.mxu0 %v3443
          %3557 = vmatmul.bf16.gmra.mxu0 %v3220
          %v3558 = vpop.f32.mrf.mxu0
          %v3559 = vadd.f32 %v3530, %v3558
          %v3560 = vpop.f32.mrf.mxu0
          %v3561 = vadd.f32 %v3532, %v3560
          %3562 = vmatmul.bf16.gmra.mxu0 %v3224
          %v3563 = vpop.f32.mrf.mxu0
          %v3564 = vadd.f32 %v3535, %v3563
          %v3565 = vpop.f32.mrf.mxu0
          %v3566 = vadd.f32 %v3537, %v3565
          %3567 = vmatmul.bf16.gmra.mxu0 %v3228
          %v3568 = vpop.f32.mrf.mxu0
          %v3569 = vadd.f32 %v3540, %v3568
          %v3570 = vpop.f32.mrf.mxu0
          %v3571 = vadd.f32 %v3542, %v3570
          %3572 = vmatmul.bf16.gmra.mxu0 %v3232
          %v3573 = vpop.f32.mrf.mxu0
          %v3574 = vadd.f32 %v3545, %v3573
          %v3575 = vpop.f32.mrf.mxu0
          %v3576 = vadd.f32 %v3547, %v3575
          %3577 = vdwg.mxu0
          %3578 = vmatpush.bf16.msra.mxu0 %v3458
          %3579 = vmatpush.bf16.msra.mxu0 %v3457
          %3580 = vmatpush.bf16.msra.mxu0 %v3456
          %3581 = vmatpush.bf16.msra.mxu0 %v3455
          %3582 = vmatpush.bf16.msra.mxu0 %v3454
          %3583 = vmatpush.bf16.msra.mxu0 %v3453
          %3584 = vmatpush.bf16.msra.mxu0 %v3452
          %3585 = vmatpush.bf16.msra.mxu0 %v3451
          %3586 = vmatmul.bf16.gmra.mxu0 %v3221
          %v3587 = vpop.f32.mrf.mxu0
          %v3588 = vadd.f32 %v3559, %v3587
          %v3589 = vpop.f32.mrf.mxu0
          %v3590 = vadd.f32 %v3561, %v3589
          %3591 = vmatmul.bf16.gmra.mxu0 %v3225
          %v3592 = vpop.f32.mrf.mxu0
          %v3593 = vadd.f32 %v3564, %v3592
          %v3594 = vpop.f32.mrf.mxu0
          %v3595 = vadd.f32 %v3566, %v3594
          %3596 = vmatmul.bf16.gmra.mxu0 %v3229
          %v3597 = vpop.f32.mrf.mxu0
          %v3598 = vadd.f32 %v3569, %v3597
          %v3599 = vpop.f32.mrf.mxu0
          %v3600 = vadd.f32 %v3571, %v3599
          %3601 = vmatmul.bf16.gmra.mxu0 %v3233
          %v3602 = vpop.f32.mrf.mxu0
          %v3603 = vadd.f32 %v3574, %v3602
          %v3604 = vpop.f32.mrf.mxu0
          %v3605 = vadd.f32 %v3576, %v3604
          %3606 = vdwg.mxu0
          %v3607 = vld [vmem:[%s608] sm:$0xff]
          %v3608 = vld [vmem:[%s608 + $0x8] sm:$0xff]
          %v3609 = vld [vmem:[%s608 + $0x10] sm:$0xff]
          %v3610 = vld [vmem:[%s608 + $0x18] sm:$0xff]
          %v3611 = vld [vmem:[%s608 + $0x20] sm:$0xff]
          %v3612 = vld [vmem:[%s608 + $0x28] sm:$0xff]
          %v3613 = vld [vmem:[%s608 + $0x30] sm:$0xff]
          %v3614 = vld [vmem:[%s608 + $0x38] sm:$0xff]
          %v3615 = vmul.f32 %v3588, 0.5
          %v3616 = vmul.f32 %v3590, 0.5
          %v3617 = vmul.f32 %v3593, 0.5
          %v3618 = vmul.f32 %v3595, 0.5
          %v3619 = vmul.f32 %v3598, 0.5
          %v3620 = vmul.f32 %v3600, 0.5
          %v3621 = vmul.f32 %v3603, 0.5
          %v3622 = vmul.f32 %v3605, 0.5
          %v3623 = vmul.f32 %v3615, 1.442695
          %v3624 = vpow.pop %v3623
          %v3625 = vmul.f32 %v3616, 1.442695
          %v3626 = vpow.pop %v3625
          %v3627 = vmul.f32 %v3617, 1.442695
          %v3628 = vpow.pop %v3627
          %v3629 = vmul.f32 %v3618, 1.442695
          %v3630 = vpow.pop %v3629
          %v3631 = vmul.f32 %v3619, 1.442695
          %v3632 = vpow.pop %v3631
          %v3633 = vmul.f32 %v3620, 1.442695
          %v3634 = vpow.pop %v3633
          %v3635 = vmul.f32 %v3621, 1.442695
          %v3636 = vpow.pop %v3635
          %v3637 = vmul.f32 %v3622, 1.442695
          %v3638 = vpow.pop %v3637
          %3647 = vrot.lane.b32.xlu0 %v3624, 96
          %v3648 = vpop.permute.xlu0 %3647
          %3649 = vrot.lane.b32.xlu0 %v3626, 96
          %v3650 = vpop.permute.xlu0 %3649
          %3651 = vrot.lane.b32.xlu0 %v3628, 96
          %v3652 = vpop.permute.xlu0 %3651
          %3653 = vrot.lane.b32.xlu0 %v3630, 96
          %v3654 = vpop.permute.xlu0 %3653
          %3655 = vrot.lane.b32.xlu0 %v3632, 96
          %v3656 = vpop.permute.xlu0 %3655
          %3657 = vrot.lane.b32.xlu0 %v3634, 96
          %v3658 = vpop.permute.xlu0 %3657
          %3659 = vrot.lane.b32.xlu0 %v3636, 96
          %v3660 = vpop.permute.xlu0 %3659
          %3661 = vrot.lane.b32.xlu0 %v3638, 96
          %v3662 = vpop.permute.xlu0 %3661
          %v3671 = vmul.f32 %v3607, %v3648
          %v3672 = vmul.f32 %v3608, %v3650
          %v3673 = vmul.f32 %v3609, %v3652
          %v3674 = vmul.f32 %v3610, %v3654
          %v3675 = vmul.f32 %v3611, %v3656
          %v3676 = vmul.f32 %v3612, %v3658
          %v3677 = vmul.f32 %v3613, %v3660
          %v3678 = vmul.f32 %v3614, %v3662
          %v3679 = vadd.f32 %v3671, %v3588
          %v3680 = vadd.f32 %v3672, %v3590
          %v3681 = vadd.f32 %v3673, %v3593
          %v3682 = vadd.f32 %v3674, %v3595
          %v3683 = vadd.f32 %v3675, %v3598
          %v3684 = vadd.f32 %v3676, %v3600
          %v3685 = vadd.f32 %v3677, %v3603
          %v3686 = vadd.f32 %v3678, %v3605
          %v3687 = vpack.c.bf16 %v3680, %v3679
          %v3688 = vpack.c.bf16 %v3682, %v3681
          %v3689 = vpack.c.bf16 %v3684, %v3683
          %v3690 = vpack.c.bf16 %v3686, %v3685
          %v3691 = vld [vmem:[%s9] sm:$0xff]
          %v3692 = vld [vmem:[%s9 + $0x8] sm:$0xff]
          %v3693 = vld [vmem:[%s9 + $0x10] sm:$0xff]
          %v3694 = vld [vmem:[%s9 + $0x18] sm:$0xff]
          %v3695 = vld [vmem:[%s9 + $0x20] sm:$0xff]
          %v3696 = vld [vmem:[%s9 + $0x28] sm:$0xff]
          %v3697 = vld [vmem:[%s9 + $0x30] sm:$0xff]
          %v3698 = vld [vmem:[%s9 + $0x38] sm:$0xff]
          %v3699 = vld [vmem:[%s10] sm:$0xff]
          %v3700 = vld [vmem:[%s10 + $0x8] sm:$0xff]
          %v3703 = vunpack.c.l.b16 %v3699
          %v3704 = vunpack.c.h.b16 %v3699
          %v3705 = vunpack.c.l.b16 %v3700
          %v3706 = vunpack.c.h.b16 %v3700
          %v3707 = vpack.c.b16 %v3703, %v3703
          %v3708 = vpack.c.b16 %v3704, %v3704
          %v3709 = vpack.c.b16 %v3705, %v3705
          %v3710 = vpack.c.b16 %v3706, %v3706
          %v3712 = vsel %vm1926, %v3707, 0
          %v3715 = vsel %vm1926, %v3708, 0
          %v3718 = vsel %vm1926, %v3709, 0
          %v3721 = vsel %vm1926, %v3710, 0
          %3723 = vmatpush.bf16.msra.mxu0 0
          %3724 = vmatpush.bf16.msra.mxu0 0
          %3725 = vmatpush.bf16.msra.mxu0 0
          %3726 = vmatpush.bf16.msra.mxu0 0
          %3727 = vmatpush.bf16.msra.mxu0 0
          %3728 = vmatpush.bf16.msra.mxu0 0
          %3729 = vmatpush.bf16.msra.mxu0 0
          %3730 = vmatpush.bf16.msra.mxu0 %v3712
          %3731 = vmatmul.bf16.gmra.mxu0 %v1915
          %v3732 = vpop.f32.mrf.mxu0
          %v3733 = vadd.f32 0.0, %v3732
          %v3734 = vpop.f32.mrf.mxu0
          %v3735 = vadd.f32 0.0, %v3734
          %3736 = vmatmul.bf16.gmra.mxu0 %v1918
          %v3737 = vpop.f32.mrf.mxu0
          %v3738 = vadd.f32 0.0, %v3737
          %v3739 = vpop.f32.mrf.mxu0
          %v3740 = vadd.f32 0.0, %v3739
          %3741 = vmatmul.bf16.gmra.mxu0 %v1921
          %v3742 = vpop.f32.mrf.mxu0
          %v3743 = vadd.f32 0.0, %v3742
          %v3744 = vpop.f32.mrf.mxu0
          %v3745 = vadd.f32 0.0, %v3744
          %3746 = vmatmul.bf16.gmra.mxu0 %v1924
          %v3747 = vpop.f32.mrf.mxu0
          %v3748 = vadd.f32 0.0, %v3747
          %v3749 = vpop.f32.mrf.mxu0
          %v3750 = vadd.f32 0.0, %v3749
          %3751 = vdwg.mxu0
          %3752 = vmatpush.bf16.msra.mxu0 0
          %3753 = vmatpush.bf16.msra.mxu0 0
          %3754 = vmatpush.bf16.msra.mxu0 0
          %3755 = vmatpush.bf16.msra.mxu0 0
          %3756 = vmatpush.bf16.msra.mxu0 0
          %3757 = vmatpush.bf16.msra.mxu0 0
          %3758 = vmatpush.bf16.msra.mxu0 0
          %3759 = vmatpush.bf16.msra.mxu0 %v3715
          %3760 = vmatmul.bf16.gmra.mxu0 %v1915
          %v3761 = vpop.f32.mrf.mxu0
          %v3762 = vadd.f32 0.0, %v3761
          %v3763 = vpop.f32.mrf.mxu0
          %v3764 = vadd.f32 0.0, %v3763
          %3765 = vmatmul.bf16.gmra.mxu0 %v1918
          %v3766 = vpop.f32.mrf.mxu0
          %v3767 = vadd.f32 0.0, %v3766
          %v3768 = vpop.f32.mrf.mxu0
          %v3769 = vadd.f32 0.0, %v3768
          %3770 = vmatmul.bf16.gmra.mxu0 %v1921
          %v3771 = vpop.f32.mrf.mxu0
          %v3772 = vadd.f32 0.0, %v3771
          %v3773 = vpop.f32.mrf.mxu0
          %v3774 = vadd.f32 0.0, %v3773
          %3775 = vmatmul.bf16.gmra.mxu0 %v1924
          %v3776 = vpop.f32.mrf.mxu0
          %v3777 = vadd.f32 0.0, %v3776
          %v3778 = vpop.f32.mrf.mxu0
          %v3779 = vadd.f32 0.0, %v3778
          %3780 = vdwg.mxu0
          %3781 = vmatpush.bf16.msra.mxu0 0
          %3782 = vmatpush.bf16.msra.mxu0 0
          %3783 = vmatpush.bf16.msra.mxu0 0
          %3784 = vmatpush.bf16.msra.mxu0 0
          %3785 = vmatpush.bf16.msra.mxu0 0
          %3786 = vmatpush.bf16.msra.mxu0 0
          %3787 = vmatpush.bf16.msra.mxu0 0
          %3788 = vmatpush.bf16.msra.mxu0 %v3718
          %3789 = vmatmul.bf16.gmra.mxu0 %v1915
          %v3790 = vpop.f32.mrf.mxu0
          %v3791 = vadd.f32 0.0, %v3790
          %v3792 = vpop.f32.mrf.mxu0
          %v3793 = vadd.f32 0.0, %v3792
          %3794 = vmatmul.bf16.gmra.mxu0 %v1918
          %v3795 = vpop.f32.mrf.mxu0
          %v3796 = vadd.f32 0.0, %v3795
          %v3797 = vpop.f32.mrf.mxu0
          %v3798 = vadd.f32 0.0, %v3797
          %3799 = vmatmul.bf16.gmra.mxu0 %v1921
          %v3800 = vpop.f32.mrf.mxu0
          %v3801 = vadd.f32 0.0, %v3800
          %v3802 = vpop.f32.mrf.mxu0
          %v3803 = vadd.f32 0.0, %v3802
          %3804 = vmatmul.bf16.gmra.mxu0 %v1924
          %v3805 = vpop.f32.mrf.mxu0
          %v3806 = vadd.f32 0.0, %v3805
          %v3807 = vpop.f32.mrf.mxu0
          %v3808 = vadd.f32 0.0, %v3807
          %3809 = vdwg.mxu0
          %3810 = vmatpush.bf16.msra.mxu0 0
          %3811 = vmatpush.bf16.msra.mxu0 0
          %3812 = vmatpush.bf16.msra.mxu0 0
          %3813 = vmatpush.bf16.msra.mxu0 0
          %3814 = vmatpush.bf16.msra.mxu0 0
          %3815 = vmatpush.bf16.msra.mxu0 0
          %3816 = vmatpush.bf16.msra.mxu0 0
          %3817 = vmatpush.bf16.msra.mxu0 %v3721
          %3818 = vmatmul.bf16.gmra.mxu0 %v1915
          %v3819 = vpop.f32.mrf.mxu0
          %v3820 = vadd.f32 0.0, %v3819
          %v3821 = vpop.f32.mrf.mxu0
          %v3822 = vadd.f32 0.0, %v3821
          %3823 = vmatmul.bf16.gmra.mxu0 %v1918
          %v3824 = vpop.f32.mrf.mxu0
          %v3825 = vadd.f32 0.0, %v3824
          %v3826 = vpop.f32.mrf.mxu0
          %v3827 = vadd.f32 0.0, %v3826
          %3828 = vmatmul.bf16.gmra.mxu0 %v1921
          %v3829 = vpop.f32.mrf.mxu0
          %v3830 = vadd.f32 0.0, %v3829
          %v3831 = vpop.f32.mrf.mxu0
          %v3832 = vadd.f32 0.0, %v3831
          %3833 = vmatmul.bf16.gmra.mxu0 %v1924
          %v3834 = vpop.f32.mrf.mxu0
          %v3835 = vadd.f32 0.0, %v3834
          %v3836 = vpop.f32.mrf.mxu0
          %v3837 = vadd.f32 0.0, %v3836
          %3838 = vdwg.mxu0
          %v3847 = vunpack.c.l.b16 %v3691
          %v3848 = vunpack.c.h.b16 %v3691
          %v3849 = vunpack.c.l.b16 %v3692
          %v3850 = vunpack.c.h.b16 %v3692
          %v3851 = vunpack.c.l.b16 %v3693
          %v3852 = vunpack.c.h.b16 %v3693
          %v3853 = vunpack.c.l.b16 %v3694
          %v3854 = vunpack.c.h.b16 %v3694
          %v3855 = vunpack.c.l.b16 %v3695
          %v3856 = vunpack.c.h.b16 %v3695
          %v3857 = vunpack.c.l.b16 %v3696
          %v3858 = vunpack.c.h.b16 %v3696
          %v3859 = vunpack.c.l.b16 %v3697
          %v3860 = vunpack.c.h.b16 %v3697
          %v3861 = vunpack.c.l.b16 %v3698
          %v3862 = vunpack.c.h.b16 %v3698
          %v3863 = vpack.c.b16 %v3851, %v3847
          %v3864 = vpack.c.b16 %v3852, %v3848
          %v3865 = vpack.c.b16 %v3853, %v3849
          %v3866 = vpack.c.b16 %v3854, %v3850
          %v3867 = vpack.c.b16 %v3859, %v3855
          %v3868 = vpack.c.b16 %v3860, %v3856
          %v3869 = vpack.c.b16 %v3861, %v3857
          %v3870 = vpack.c.b16 %v3862, %v3858
          %vm3879 = vcmask 261120
          %v3881 = vsel %vm3879, %v3687, 0
          %v3884 = vsel %vm3879, %v3688, 0
          %v3887 = vsel %vm3879, %v3689, 0
          %v3890 = vsel %vm3879, %v3690, 0
          %3892 = vmatpush.bf16.msra.mxu0 0
          %3893 = vmatpush.bf16.msra.mxu0 0
          %3894 = vmatpush.bf16.msra.mxu0 0
          %3895 = vmatpush.bf16.msra.mxu0 0
          %3896 = vmatpush.bf16.msra.mxu0 0
          %3897 = vmatpush.bf16.msra.mxu0 0
          %3898 = vmatpush.bf16.msra.mxu0 %v3867
          %3899 = vmatpush.bf16.msra.mxu0 %v3863
          %3900 = vmatmul.bf16.gmra.mxu0 %v3881
          %v3901 = vpop.f32.mrf.mxu0
          %v3902 = vadd.f32 %v3733, %v3901
          %v3903 = vpop.f32.mrf.mxu0
          %v3904 = vadd.f32 %v3735, %v3903
          %3905 = vmatmul.bf16.gmra.mxu0 %v3884
          %v3906 = vpop.f32.mrf.mxu0
          %v3907 = vadd.f32 %v3738, %v3906
          %v3908 = vpop.f32.mrf.mxu0
          %v3909 = vadd.f32 %v3740, %v3908
          %3910 = vmatmul.bf16.gmra.mxu0 %v3887
          %v3911 = vpop.f32.mrf.mxu0
          %v3912 = vadd.f32 %v3743, %v3911
          %v3913 = vpop.f32.mrf.mxu0
          %v3914 = vadd.f32 %v3745, %v3913
          %3915 = vmatmul.bf16.gmra.mxu0 %v3890
          %v3916 = vpop.f32.mrf.mxu0
          %v3917 = vadd.f32 %v3748, %v3916
          %v3918 = vpop.f32.mrf.mxu0
          %v3919 = vadd.f32 %v3750, %v3918
          %3920 = vdwg.mxu0
          %3921 = vmatpush.bf16.msra.mxu0 0
          %3922 = vmatpush.bf16.msra.mxu0 0
          %3923 = vmatpush.bf16.msra.mxu0 0
          %3924 = vmatpush.bf16.msra.mxu0 0
          %3925 = vmatpush.bf16.msra.mxu0 0
          %3926 = vmatpush.bf16.msra.mxu0 0
          %3927 = vmatpush.bf16.msra.mxu0 %v3868
          %3928 = vmatpush.bf16.msra.mxu0 %v3864
          %3929 = vmatmul.bf16.gmra.mxu0 %v3881
          %v3930 = vpop.f32.mrf.mxu0
          %v3931 = vadd.f32 %v3762, %v3930
          %v3932 = vpop.f32.mrf.mxu0
          %v3933 = vadd.f32 %v3764, %v3932
          %3934 = vmatmul.bf16.gmra.mxu0 %v3884
          %v3935 = vpop.f32.mrf.mxu0
          %v3936 = vadd.f32 %v3767, %v3935
          %v3937 = vpop.f32.mrf.mxu0
          %v3938 = vadd.f32 %v3769, %v3937
          %3939 = vmatmul.bf16.gmra.mxu0 %v3887
          %v3940 = vpop.f32.mrf.mxu0
          %v3941 = vadd.f32 %v3772, %v3940
          %v3942 = vpop.f32.mrf.mxu0
          %v3943 = vadd.f32 %v3774, %v3942
          %3944 = vmatmul.bf16.gmra.mxu0 %v3890
          %v3945 = vpop.f32.mrf.mxu0
          %v3946 = vadd.f32 %v3777, %v3945
          %v3947 = vpop.f32.mrf.mxu0
          %v3948 = vadd.f32 %v3779, %v3947
          %3949 = vdwg.mxu0
          %3950 = vmatpush.bf16.msra.mxu0 0
          %3951 = vmatpush.bf16.msra.mxu0 0
          %3952 = vmatpush.bf16.msra.mxu0 0
          %3953 = vmatpush.bf16.msra.mxu0 0
          %3954 = vmatpush.bf16.msra.mxu0 0
          %3955 = vmatpush.bf16.msra.mxu0 0
          %3956 = vmatpush.bf16.msra.mxu0 %v3869
          %3957 = vmatpush.bf16.msra.mxu0 %v3865
          %3958 = vmatmul.bf16.gmra.mxu0 %v3881
          %v3959 = vpop.f32.mrf.mxu0
          %v3960 = vadd.f32 %v3791, %v3959
          %v3961 = vpop.f32.mrf.mxu0
          %v3962 = vadd.f32 %v3793, %v3961
          %3963 = vmatmul.bf16.gmra.mxu0 %v3884
          %v3964 = vpop.f32.mrf.mxu0
          %v3965 = vadd.f32 %v3796, %v3964
          %v3966 = vpop.f32.mrf.mxu0
          %v3967 = vadd.f32 %v3798, %v3966
          %3968 = vmatmul.bf16.gmra.mxu0 %v3887
          %v3969 = vpop.f32.mrf.mxu0
          %v3970 = vadd.f32 %v3801, %v3969
          %v3971 = vpop.f32.mrf.mxu0
          %v3972 = vadd.f32 %v3803, %v3971
          %3973 = vmatmul.bf16.gmra.mxu0 %v3890
          %v3974 = vpop.f32.mrf.mxu0
          %v3975 = vadd.f32 %v3806, %v3974
          %v3976 = vpop.f32.mrf.mxu0
          %v3977 = vadd.f32 %v3808, %v3976
          %3978 = vdwg.mxu0
          %3979 = vmatpush.bf16.msra.mxu0 0
          %3980 = vmatpush.bf16.msra.mxu0 0
          %3981 = vmatpush.bf16.msra.mxu0 0
          %3982 = vmatpush.bf16.msra.mxu0 0
          %3983 = vmatpush.bf16.msra.mxu0 0
          %3984 = vmatpush.bf16.msra.mxu0 0
          %3985 = vmatpush.bf16.msra.mxu0 %v3870
          %3986 = vmatpush.bf16.msra.mxu0 %v3866
          %3987 = vmatmul.bf16.gmra.mxu0 %v3881
          %v3988 = vpop.f32.mrf.mxu0
          %v3989 = vadd.f32 %v3820, %v3988
          %v3990 = vpop.f32.mrf.mxu0
          %v3991 = vadd.f32 %v3822, %v3990
          %3992 = vmatmul.bf16.gmra.mxu0 %v3884
          %v3993 = vpop.f32.mrf.mxu0
          %v3994 = vadd.f32 %v3825, %v3993
          %v3995 = vpop.f32.mrf.mxu0
          %v3996 = vadd.f32 %v3827, %v3995
          %3997 = vmatmul.bf16.gmra.mxu0 %v3887
          %v3998 = vpop.f32.mrf.mxu0
          %v3999 = vadd.f32 %v3830, %v3998
          %v4000 = vpop.f32.mrf.mxu0
          %v4001 = vadd.f32 %v3832, %v4000
          %4002 = vmatmul.bf16.gmra.mxu0 %v3890
          %v4003 = vpop.f32.mrf.mxu0
          %v4004 = vadd.f32 %v3835, %v4003
          %v4005 = vpop.f32.mrf.mxu0
          %v4006 = vadd.f32 %v3837, %v4005
          %4007 = vdwg.mxu0
          %s4008 = scalar_lea.vmem %s3, 6
          %v4009 = vld [vmem:[%s4008] ss:$8 sm:$0xf]
          %v4011 = vperm.slane %v4009, 0
          %v4012 = vperm.slane %v4009, 1
          %v4013 = vperm.slane %v4009, 2
          %v4014 = vperm.slane %v4009, 3
          %v4019 = vadd.f32 %v3902, %v4011
          %v4020 = vadd.f32 %v3931, %v4012
          %v4021 = vadd.f32 %v3960, %v4013
          %v4022 = vadd.f32 %v3989, %v4014
          %v4023 = vadd.f32 %v3904, %v4011
          %v4024 = vadd.f32 %v3933, %v4012
          %v4025 = vadd.f32 %v3962, %v4013
          %v4026 = vadd.f32 %v3991, %v4014
          %v4027 = vadd.f32 %v3907, %v4011
          %v4028 = vadd.f32 %v3936, %v4012
          %v4029 = vadd.f32 %v3965, %v4013
          %v4030 = vadd.f32 %v3994, %v4014
          %v4031 = vadd.f32 %v3909, %v4011
          %v4032 = vadd.f32 %v3938, %v4012
          %v4033 = vadd.f32 %v3967, %v4013
          %v4034 = vadd.f32 %v3996, %v4014
          %v4035 = vadd.f32 %v3912, %v4011
          %v4036 = vadd.f32 %v3941, %v4012
          %v4037 = vadd.f32 %v3970, %v4013
          %v4038 = vadd.f32 %v3999, %v4014
          %v4039 = vadd.f32 %v3914, %v4011
          %v4040 = vadd.f32 %v3943, %v4012
          %v4041 = vadd.f32 %v3972, %v4013
          %v4042 = vadd.f32 %v4001, %v4014
          %v4043 = vadd.f32 %v3917, %v4011
          %v4044 = vadd.f32 %v3946, %v4012
          %v4045 = vadd.f32 %v3975, %v4013
          %v4046 = vadd.f32 %v4004, %v4014
          %v4047 = vadd.f32 %v3919, %v4011
          %v4048 = vadd.f32 %v3948, %v4012
          %v4049 = vadd.f32 %v3977, %v4013
          %v4050 = vadd.f32 %v4006, %v4014
          %v4051 = vmax.f32 %v4019, 0.0
          %v4052 = vmax.f32 %v4020, 0.0
          %v4053 = vmax.f32 %v4021, 0.0
          %v4054 = vmax.f32 %v4022, 0.0
          %v4055 = vmax.f32 %v4023, 0.0
          %v4056 = vmax.f32 %v4024, 0.0
          %v4057 = vmax.f32 %v4025, 0.0
          %v4058 = vmax.f32 %v4026, 0.0
          %v4059 = vmax.f32 %v4027, 0.0
          %v4060 = vmax.f32 %v4028, 0.0
          %v4061 = vmax.f32 %v4029, 0.0
          %v4062 = vmax.f32 %v4030, 0.0
          %v4063 = vmax.f32 %v4031, 0.0
          %v4064 = vmax.f32 %v4032, 0.0
          %v4065 = vmax.f32 %v4033, 0.0
          %v4066 = vmax.f32 %v4034, 0.0
          %v4067 = vmax.f32 %v4035, 0.0
          %v4068 = vmax.f32 %v4036, 0.0
          %v4069 = vmax.f32 %v4037, 0.0
          %v4070 = vmax.f32 %v4038, 0.0
          %v4071 = vmax.f32 %v4039, 0.0
          %v4072 = vmax.f32 %v4040, 0.0
          %v4073 = vmax.f32 %v4041, 0.0
          %v4074 = vmax.f32 %v4042, 0.0
          %v4075 = vmax.f32 %v4043, 0.0
          %v4076 = vmax.f32 %v4044, 0.0
          %v4077 = vmax.f32 %v4045, 0.0
          %v4078 = vmax.f32 %v4046, 0.0
          %v4079 = vmax.f32 %v4047, 0.0
          %v4080 = vmax.f32 %v4048, 0.0
          %v4081 = vmax.f32 %v4049, 0.0
          %v4082 = vmax.f32 %v4050, 0.0
          %v4083 = vpack.c.bf16 %v4055, %v4051
          %v4084 = vpack.c.bf16 %v4056, %v4052
          %v4085 = vpack.c.bf16 %v4057, %v4053
          %v4086 = vpack.c.bf16 %v4058, %v4054
          %v4087 = vpack.c.bf16 %v4063, %v4059
          %v4088 = vpack.c.bf16 %v4064, %v4060
          %v4089 = vpack.c.bf16 %v4065, %v4061
          %v4090 = vpack.c.bf16 %v4066, %v4062
          %v4091 = vpack.c.bf16 %v4071, %v4067
          %v4092 = vpack.c.bf16 %v4072, %v4068
          %v4093 = vpack.c.bf16 %v4073, %v4069
          %v4094 = vpack.c.bf16 %v4074, %v4070
          %v4095 = vpack.c.bf16 %v4079, %v4075
          %v4096 = vpack.c.bf16 %v4080, %v4076
          %v4097 = vpack.c.bf16 %v4081, %v4077
          %v4098 = vpack.c.bf16 %v4082, %v4078
          %v4099 = vld [vmem:[#allocation9] sm:$0xff]
          %v4100 = vld [vmem:[#allocation9 + $0x8] sm:$0xff]
          %v4101 = vld [vmem:[#allocation9 + $0x10] sm:$0xff]
          %v4102 = vld [vmem:[#allocation9 + $0x18] sm:$0xff]
          %v4103 = vld [vmem:[#allocation9 + $0x20] sm:$0xff]
          %v4104 = vld [vmem:[#allocation9 + $0x28] sm:$0xff]
          %v4105 = vld [vmem:[#allocation9 + $0x30] sm:$0xff]
          %v4106 = vld [vmem:[#allocation9 + $0x38] sm:$0xff]
          %v4107 = vld [vmem:[#allocation9 + $0x40] sm:$0xff]
          %v4108 = vld [vmem:[#allocation9 + $0x48] sm:$0xff]
          %v4109 = vld [vmem:[#allocation9 + $0x50] sm:$0xff]
          %v4110 = vld [vmem:[#allocation9 + $0x58] sm:$0xff]
          %v4111 = vld [vmem:[#allocation9 + $0x60] sm:$0xff]
          %v4112 = vld [vmem:[#allocation9 + $0x68] sm:$0xff]
          %v4113 = vld [vmem:[#allocation9 + $0x70] sm:$0xff]
          %v4114 = vld [vmem:[#allocation9 + $0x78] sm:$0xff]
          %v4115 = vld [vmem:[#allocation9 + $0x80] sm:$0xff]
          %v4116 = vld [vmem:[#allocation9 + $0x88] sm:$0xff]
          %v4117 = vld [vmem:[#allocation9 + $0x90] sm:$0xff]
          %v4118 = vld [vmem:[#allocation9 + $0x98] sm:$0xff]
          %v4119 = vld [vmem:[#allocation9 + $0xa0] sm:$0xff]
          %v4120 = vld [vmem:[#allocation9 + $0xa8] sm:$0xff]
          %v4121 = vld [vmem:[#allocation9 + $0xb0] sm:$0xff]
          %v4122 = vld [vmem:[#allocation9 + $0xb8] sm:$0xff]
          %v4123 = vld [vmem:[#allocation9 + $0xc0] sm:$0xff]
          %v4124 = vld [vmem:[#allocation9 + $0xc8] sm:$0xff]
          %v4125 = vld [vmem:[#allocation9 + $0xd0] sm:$0xff]
          %v4126 = vld [vmem:[#allocation9 + $0xd8] sm:$0xff]
          %v4127 = vld [vmem:[#allocation9 + $0xe0] sm:$0xff]
          %v4128 = vld [vmem:[#allocation9 + $0xe8] sm:$0xff]
          %v4129 = vld [vmem:[#allocation9 + $0xf0] sm:$0xff]
          %v4130 = vld [vmem:[#allocation9 + $0xf8] sm:$0xff]
          %v4131 = vld [vmem:[#allocation9 + $0x100] sm:$0xff]
          %v4132 = vld [vmem:[#allocation9 + $0x108] sm:$0xff]
          %v4133 = vld [vmem:[#allocation9 + $0x110] sm:$0xff]
          %v4134 = vld [vmem:[#allocation9 + $0x118] sm:$0xff]
          %v4135 = vld [vmem:[#allocation9 + $0x120] sm:$0xff]
          %v4136 = vld [vmem:[#allocation9 + $0x128] sm:$0xff]
          %v4137 = vld [vmem:[#allocation9 + $0x130] sm:$0xff]
          %v4138 = vld [vmem:[#allocation9 + $0x138] sm:$0xff]
          %v4139 = vld [vmem:[#allocation9 + $0x140] sm:$0xff]
          %v4140 = vld [vmem:[#allocation9 + $0x148] sm:$0xff]
          %v4141 = vld [vmem:[#allocation9 + $0x150] sm:$0xff]
          %v4142 = vld [vmem:[#allocation9 + $0x158] sm:$0xff]
          %v4143 = vld [vmem:[#allocation9 + $0x160] sm:$0xff]
          %v4144 = vld [vmem:[#allocation9 + $0x168] sm:$0xff]
          %v4145 = vld [vmem:[#allocation9 + $0x170] sm:$0xff]
          %v4146 = vld [vmem:[#allocation9 + $0x178] sm:$0xff]
          %v4147 = vld [vmem:[#allocation9 + $0x180] sm:$0xff]
          %v4148 = vld [vmem:[#allocation9 + $0x188] sm:$0xff]
          %v4149 = vld [vmem:[#allocation9 + $0x190] sm:$0xff]
          %v4150 = vld [vmem:[#allocation9 + $0x198] sm:$0xff]
          %v4151 = vld [vmem:[#allocation9 + $0x1a0] sm:$0xff]
          %v4152 = vld [vmem:[#allocation9 + $0x1a8] sm:$0xff]
          %v4153 = vld [vmem:[#allocation9 + $0x1b0] sm:$0xff]
          %v4154 = vld [vmem:[#allocation9 + $0x1b8] sm:$0xff]
          %v4155 = vld [vmem:[#allocation9 + $0x1c0] sm:$0xff]
          %v4156 = vld [vmem:[#allocation9 + $0x1c8] sm:$0xff]
          %v4157 = vld [vmem:[#allocation9 + $0x1d0] sm:$0xff]
          %v4158 = vld [vmem:[#allocation9 + $0x1d8] sm:$0xff]
          %v4159 = vld [vmem:[#allocation9 + $0x1e0] sm:$0xff]
          %v4160 = vld [vmem:[#allocation9 + $0x1e8] sm:$0xff]
          %v4161 = vld [vmem:[#allocation9 + $0x1f0] sm:$0xff]
          %v4162 = vld [vmem:[#allocation9 + $0x1f8] sm:$0xff]
          %s4163 = scalar_lea.vmem %s3, 7
          %v4164 = vld [vmem:[%s4163] ss:$8 sm:$0x3]
          %v4166 = vperm.slane %v4164, 0
          %v4167 = vperm.slane %v4164, 1
          %v4234 = vunpack.c.l.b16 %v4099
          %v4235 = vunpack.c.h.b16 %v4099
          %v4236 = vunpack.c.l.b16 %v4100
          %v4237 = vunpack.c.h.b16 %v4100
          %v4238 = vunpack.c.l.b16 %v4101
          %v4239 = vunpack.c.h.b16 %v4101
          %v4240 = vunpack.c.l.b16 %v4102
          %v4241 = vunpack.c.h.b16 %v4102
          %v4242 = vunpack.c.l.b16 %v4103
          %v4243 = vunpack.c.h.b16 %v4103
          %v4244 = vunpack.c.l.b16 %v4104
          %v4245 = vunpack.c.h.b16 %v4104
          %v4246 = vunpack.c.l.b16 %v4105
          %v4247 = vunpack.c.h.b16 %v4105
          %v4248 = vunpack.c.l.b16 %v4106
          %v4249 = vunpack.c.h.b16 %v4106
          %v4250 = vunpack.c.l.b16 %v4107
          %v4251 = vunpack.c.h.b16 %v4107
          %v4252 = vunpack.c.l.b16 %v4108
          %v4253 = vunpack.c.h.b16 %v4108
          %v4254 = vunpack.c.l.b16 %v4109
          %v4255 = vunpack.c.h.b16 %v4109
          %v4256 = vunpack.c.l.b16 %v4110
          %v4257 = vunpack.c.h.b16 %v4110
          %v4258 = vunpack.c.l.b16 %v4111
          %v4259 = vunpack.c.h.b16 %v4111
          %v4260 = vunpack.c.l.b16 %v4112
          %v4261 = vunpack.c.h.b16 %v4112
          %v4262 = vunpack.c.l.b16 %v4113
          %v4263 = vunpack.c.h.b16 %v4113
          %v4264 = vunpack.c.l.b16 %v4114
          %v4265 = vunpack.c.h.b16 %v4114
          %v4266 = vunpack.c.l.b16 %v4115
          %v4267 = vunpack.c.h.b16 %v4115
          %v4268 = vunpack.c.l.b16 %v4116
          %v4269 = vunpack.c.h.b16 %v4116
          %v4270 = vunpack.c.l.b16 %v4117
          %v4271 = vunpack.c.h.b16 %v4117
          %v4272 = vunpack.c.l.b16 %v4118
          %v4273 = vunpack.c.h.b16 %v4118
          %v4274 = vunpack.c.l.b16 %v4119
          %v4275 = vunpack.c.h.b16 %v4119
          %v4276 = vunpack.c.l.b16 %v4120
          %v4277 = vunpack.c.h.b16 %v4120
          %v4278 = vunpack.c.l.b16 %v4121
          %v4279 = vunpack.c.h.b16 %v4121
          %v4280 = vunpack.c.l.b16 %v4122
          %v4281 = vunpack.c.h.b16 %v4122
          %v4282 = vunpack.c.l.b16 %v4123
          %v4283 = vunpack.c.h.b16 %v4123
          %v4284 = vunpack.c.l.b16 %v4124
          %v4285 = vunpack.c.h.b16 %v4124
          %v4286 = vunpack.c.l.b16 %v4125
          %v4287 = vunpack.c.h.b16 %v4125
          %v4288 = vunpack.c.l.b16 %v4126
          %v4289 = vunpack.c.h.b16 %v4126
          %v4290 = vunpack.c.l.b16 %v4127
          %v4291 = vunpack.c.h.b16 %v4127
          %v4292 = vunpack.c.l.b16 %v4128
          %v4293 = vunpack.c.h.b16 %v4128
          %v4294 = vunpack.c.l.b16 %v4129
          %v4295 = vunpack.c.h.b16 %v4129
          %v4296 = vunpack.c.l.b16 %v4130
          %v4297 = vunpack.c.h.b16 %v4130
          %v4298 = vunpack.c.l.b16 %v4131
          %v4299 = vunpack.c.h.b16 %v4131
          %v4300 = vunpack.c.l.b16 %v4132
          %v4301 = vunpack.c.h.b16 %v4132
          %v4302 = vunpack.c.l.b16 %v4133
          %v4303 = vunpack.c.h.b16 %v4133
          %v4304 = vunpack.c.l.b16 %v4134
          %v4305 = vunpack.c.h.b16 %v4134
          %v4306 = vunpack.c.l.b16 %v4135
          %v4307 = vunpack.c.h.b16 %v4135
          %v4308 = vunpack.c.l.b16 %v4136
          %v4309 = vunpack.c.h.b16 %v4136
          %v4310 = vunpack.c.l.b16 %v4137
          %v4311 = vunpack.c.h.b16 %v4137
          %v4312 = vunpack.c.l.b16 %v4138
          %v4313 = vunpack.c.h.b16 %v4138
          %v4314 = vunpack.c.l.b16 %v4139
          %v4315 = vunpack.c.h.b16 %v4139
          %v4316 = vunpack.c.l.b16 %v4140
          %v4317 = vunpack.c.h.b16 %v4140
          %v4318 = vunpack.c.l.b16 %v4141
          %v4319 = vunpack.c.h.b16 %v4141
          %v4320 = vunpack.c.l.b16 %v4142
          %v4321 = vunpack.c.h.b16 %v4142
          %v4322 = vunpack.c.l.b16 %v4143
          %v4323 = vunpack.c.h.b16 %v4143
          %v4324 = vunpack.c.l.b16 %v4144
          %v4325 = vunpack.c.h.b16 %v4144
          %v4326 = vunpack.c.l.b16 %v4145
          %v4327 = vunpack.c.h.b16 %v4145
          %v4328 = vunpack.c.l.b16 %v4146
          %v4329 = vunpack.c.h.b16 %v4146
          %v4330 = vunpack.c.l.b16 %v4147
          %v4331 = vunpack.c.h.b16 %v4147
          %v4332 = vunpack.c.l.b16 %v4148
          %v4333 = vunpack.c.h.b16 %v4148
          %v4334 = vunpack.c.l.b16 %v4149
          %v4335 = vunpack.c.h.b16 %v4149
          %v4336 = vunpack.c.l.b16 %v4150
          %v4337 = vunpack.c.h.b16 %v4150
          %v4338 = vunpack.c.l.b16 %v4151
          %v4339 = vunpack.c.h.b16 %v4151
          %v4340 = vunpack.c.l.b16 %v4152
          %v4341 = vunpack.c.h.b16 %v4152
          %v4342 = vunpack.c.l.b16 %v4153
          %v4343 = vunpack.c.h.b16 %v4153
          %v4344 = vunpack.c.l.b16 %v4154
          %v4345 = vunpack.c.h.b16 %v4154
          %v4346 = vunpack.c.l.b16 %v4155
          %v4347 = vunpack.c.h.b16 %v4155
          %v4348 = vunpack.c.l.b16 %v4156
          %v4349 = vunpack.c.h.b16 %v4156
          %v4350 = vunpack.c.l.b16 %v4157
          %v4351 = vunpack.c.h.b16 %v4157
          %v4352 = vunpack.c.l.b16 %v4158
          %v4353 = vunpack.c.h.b16 %v4158
          %v4354 = vunpack.c.l.b16 %v4159
          %v4355 = vunpack.c.h.b16 %v4159
          %v4356 = vunpack.c.l.b16 %v4160
          %v4357 = vunpack.c.h.b16 %v4160
          %v4358 = vunpack.c.l.b16 %v4161
          %v4359 = vunpack.c.h.b16 %v4161
          %v4360 = vunpack.c.l.b16 %v4162
          %v4361 = vunpack.c.h.b16 %v4162
          %v4362 = vpack.c.b16 %v4236, %v4234
          %v4363 = vpack.c.b16 %v4237, %v4235
          %v4364 = vpack.c.b16 %v4240, %v4238
          %v4365 = vpack.c.b16 %v4241, %v4239
          %v4366 = vpack.c.b16 %v4244, %v4242
          %v4367 = vpack.c.b16 %v4245, %v4243
          %v4368 = vpack.c.b16 %v4248, %v4246
          %v4369 = vpack.c.b16 %v4249, %v4247
          %v4370 = vpack.c.b16 %v4252, %v4250
          %v4371 = vpack.c.b16 %v4253, %v4251
          %v4372 = vpack.c.b16 %v4256, %v4254
          %v4373 = vpack.c.b16 %v4257, %v4255
          %v4374 = vpack.c.b16 %v4260, %v4258
          %v4375 = vpack.c.b16 %v4261, %v4259
          %v4376 = vpack.c.b16 %v4264, %v4262
          %v4377 = vpack.c.b16 %v4265, %v4263
          %v4378 = vpack.c.b16 %v4268, %v4266
          %v4379 = vpack.c.b16 %v4269, %v4267
          %v4380 = vpack.c.b16 %v4272, %v4270
          %v4381 = vpack.c.b16 %v4273, %v4271
          %v4382 = vpack.c.b16 %v4276, %v4274
          %v4383 = vpack.c.b16 %v4277, %v4275
          %v4384 = vpack.c.b16 %v4280, %v4278
          %v4385 = vpack.c.b16 %v4281, %v4279
          %v4386 = vpack.c.b16 %v4284, %v4282
          %v4387 = vpack.c.b16 %v4285, %v4283
          %v4388 = vpack.c.b16 %v4288, %v4286
          %v4389 = vpack.c.b16 %v4289, %v4287
          %v4390 = vpack.c.b16 %v4292, %v4290
          %v4391 = vpack.c.b16 %v4293, %v4291
          %v4392 = vpack.c.b16 %v4296, %v4294
          %v4393 = vpack.c.b16 %v4297, %v4295
          %v4394 = vpack.c.b16 %v4300, %v4298
          %v4395 = vpack.c.b16 %v4301, %v4299
          %v4396 = vpack.c.b16 %v4304, %v4302
          %v4397 = vpack.c.b16 %v4305, %v4303
          %v4398 = vpack.c.b16 %v4308, %v4306
          %v4399 = vpack.c.b16 %v4309, %v4307
          %v4400 = vpack.c.b16 %v4312, %v4310
          %v4401 = vpack.c.b16 %v4313, %v4311
          %v4402 = vpack.c.b16 %v4316, %v4314
          %v4403 = vpack.c.b16 %v4317, %v4315
          %v4404 = vpack.c.b16 %v4320, %v4318
          %v4405 = vpack.c.b16 %v4321, %v4319
          %v4406 = vpack.c.b16 %v4324, %v4322
          %v4407 = vpack.c.b16 %v4325, %v4323
          %v4408 = vpack.c.b16 %v4328, %v4326
          %v4409 = vpack.c.b16 %v4329, %v4327
          %v4410 = vpack.c.b16 %v4332, %v4330
          %v4411 = vpack.c.b16 %v4333, %v4331
          %v4412 = vpack.c.b16 %v4336, %v4334
          %v4413 = vpack.c.b16 %v4337, %v4335
          %v4414 = vpack.c.b16 %v4340, %v4338
          %v4415 = vpack.c.b16 %v4341, %v4339
          %v4416 = vpack.c.b16 %v4344, %v4342
          %v4417 = vpack.c.b16 %v4345, %v4343
          %v4418 = vpack.c.b16 %v4348, %v4346
          %v4419 = vpack.c.b16 %v4349, %v4347
          %v4420 = vpack.c.b16 %v4352, %v4350
          %v4421 = vpack.c.b16 %v4353, %v4351
          %v4422 = vpack.c.b16 %v4356, %v4354
          %v4423 = vpack.c.b16 %v4357, %v4355
          %v4424 = vpack.c.b16 %v4360, %v4358
          %v4425 = vpack.c.b16 %v4361, %v4359
          %4490 = vmatpush.bf16.msra.mxu0 %v4376
          %4491 = vmatpush.bf16.msra.mxu0 %v4374
          %4492 = vmatpush.bf16.msra.mxu0 %v4372
          %4493 = vmatpush.bf16.msra.mxu0 %v4370
          %4494 = vmatpush.bf16.msra.mxu0 %v4368
          %4495 = vmatpush.bf16.msra.mxu0 %v4366
          %4496 = vmatpush.bf16.msra.mxu0 %v4364
          %4497 = vmatpush.bf16.msra.mxu0 %v4362
          %4498 = vmatmul.bf16.gmra.mxu0 %v4083
          %v4499 = vpop.f32.mrf.mxu0
          %v4500 = vadd.f32 %v4166, %v4499
          %v4501 = vpop.f32.mrf.mxu0
          %v4502 = vadd.f32 %v4166, %v4501
          %4503 = vmatmul.bf16.gmra.mxu0 %v4087
          %v4504 = vpop.f32.mrf.mxu0
          %v4505 = vadd.f32 %v4166, %v4504
          %v4506 = vpop.f32.mrf.mxu0
          %v4507 = vadd.f32 %v4166, %v4506
          %4508 = vmatmul.bf16.gmra.mxu0 %v4091
          %v4509 = vpop.f32.mrf.mxu0
          %v4510 = vadd.f32 %v4166, %v4509
          %v4511 = vpop.f32.mrf.mxu0
          %v4512 = vadd.f32 %v4166, %v4511
          %4513 = vmatmul.bf16.gmra.mxu0 %v4095
          %v4514 = vpop.f32.mrf.mxu0
          %v4515 = vadd.f32 %v4166, %v4514
          %v4516 = vpop.f32.mrf.mxu0
          %v4517 = vadd.f32 %v4166, %v4516
          %4518 = vdwg.mxu0
          %4519 = vmatpush.bf16.msra.mxu0 %v4392
          %4520 = vmatpush.bf16.msra.mxu0 %v4390
          %4521 = vmatpush.bf16.msra.mxu0 %v4388
          %4522 = vmatpush.bf16.msra.mxu0 %v4386
          %4523 = vmatpush.bf16.msra.mxu0 %v4384
          %4524 = vmatpush.bf16.msra.mxu0 %v4382
          %4525 = vmatpush.bf16.msra.mxu0 %v4380
          %4526 = vmatpush.bf16.msra.mxu0 %v4378
          %4527 = vmatmul.bf16.gmra.mxu0 %v4084
          %v4528 = vpop.f32.mrf.mxu0
          %v4529 = vadd.f32 %v4500, %v4528
          %v4530 = vpop.f32.mrf.mxu0
          %v4531 = vadd.f32 %v4502, %v4530
          %4532 = vmatmul.bf16.gmra.mxu0 %v4088
          %v4533 = vpop.f32.mrf.mxu0
          %v4534 = vadd.f32 %v4505, %v4533
          %v4535 = vpop.f32.mrf.mxu0
          %v4536 = vadd.f32 %v4507, %v4535
          %4537 = vmatmul.bf16.gmra.mxu0 %v4092
          %v4538 = vpop.f32.mrf.mxu0
          %v4539 = vadd.f32 %v4510, %v4538
          %v4540 = vpop.f32.mrf.mxu0
          %v4541 = vadd.f32 %v4512, %v4540
          %4542 = vmatmul.bf16.gmra.mxu0 %v4096
          %v4543 = vpop.f32.mrf.mxu0
          %v4544 = vadd.f32 %v4515, %v4543
          %v4545 = vpop.f32.mrf.mxu0
          %v4546 = vadd.f32 %v4517, %v4545
          %4547 = vdwg.mxu0
          %4548 = vmatpush.bf16.msra.mxu0 %v4408
          %4549 = vmatpush.bf16.msra.mxu0 %v4406
          %4550 = vmatpush.bf16.msra.mxu0 %v4404
          %4551 = vmatpush.bf16.msra.mxu0 %v4402
          %4552 = vmatpush.bf16.msra.mxu0 %v4400
          %4553 = vmatpush.bf16.msra.mxu0 %v4398
          %4554 = vmatpush.bf16.msra.mxu0 %v4396
          %4555 = vmatpush.bf16.msra.mxu0 %v4394
          %4556 = vmatmul.bf16.gmra.mxu0 %v4085
          %v4557 = vpop.f32.mrf.mxu0
          %v4558 = vadd.f32 %v4529, %v4557
          %v4559 = vpop.f32.mrf.mxu0
          %v4560 = vadd.f32 %v4531, %v4559
          %4561 = vmatmul.bf16.gmra.mxu0 %v4089
          %v4562 = vpop.f32.mrf.mxu0
          %v4563 = vadd.f32 %v4534, %v4562
          %v4564 = vpop.f32.mrf.mxu0
          %v4565 = vadd.f32 %v4536, %v4564
          %4566 = vmatmul.bf16.gmra.mxu0 %v4093
          %v4567 = vpop.f32.mrf.mxu0
          %v4568 = vadd.f32 %v4539, %v4567
          %v4569 = vpop.f32.mrf.mxu0
          %v4570 = vadd.f32 %v4541, %v4569
          %4571 = vmatmul.bf16.gmra.mxu0 %v4097
          %v4572 = vpop.f32.mrf.mxu0
          %v4573 = vadd.f32 %v4544, %v4572
          %v4574 = vpop.f32.mrf.mxu0
          %v4575 = vadd.f32 %v4546, %v4574
          %4576 = vdwg.mxu0
          %4577 = vmatpush.bf16.msra.mxu0 %v4424
          %4578 = vmatpush.bf16.msra.mxu0 %v4422
          %4579 = vmatpush.bf16.msra.mxu0 %v4420
          %4580 = vmatpush.bf16.msra.mxu0 %v4418
          %4581 = vmatpush.bf16.msra.mxu0 %v4416
          %4582 = vmatpush.bf16.msra.mxu0 %v4414
          %4583 = vmatpush.bf16.msra.mxu0 %v4412
          %4584 = vmatpush.bf16.msra.mxu0 %v4410
          %4585 = vmatmul.bf16.gmra.mxu0 %v4086
          %v4586 = vpop.f32.mrf.mxu0
          %v4587 = vadd.f32 %v4558, %v4586
          %v4588 = vpop.f32.mrf.mxu0
          %v4589 = vadd.f32 %v4560, %v4588
          %4590 = vmatmul.bf16.gmra.mxu0 %v4090
          %v4591 = vpop.f32.mrf.mxu0
          %v4592 = vadd.f32 %v4563, %v4591
          %v4593 = vpop.f32.mrf.mxu0
          %v4594 = vadd.f32 %v4565, %v4593
          %4595 = vmatmul.bf16.gmra.mxu0 %v4094
          %v4596 = vpop.f32.mrf.mxu0
          %v4597 = vadd.f32 %v4568, %v4596
          %v4598 = vpop.f32.mrf.mxu0
          %v4599 = vadd.f32 %v4570, %v4598
          %4600 = vmatmul.bf16.gmra.mxu0 %v4098
          %v4601 = vpop.f32.mrf.mxu0
          %v4602 = vadd.f32 %v4573, %v4601
          %v4603 = vpop.f32.mrf.mxu0
          %v4604 = vadd.f32 %v4575, %v4603
          %4605 = vdwg.mxu0
          %4606 = vmatpush.bf16.msra.mxu0 %v4377
          %4607 = vmatpush.bf16.msra.mxu0 %v4375
          %4608 = vmatpush.bf16.msra.mxu0 %v4373
          %4609 = vmatpush.bf16.msra.mxu0 %v4371
          %4610 = vmatpush.bf16.msra.mxu0 %v4369
          %4611 = vmatpush.bf16.msra.mxu0 %v4367
          %4612 = vmatpush.bf16.msra.mxu0 %v4365
          %4613 = vmatpush.bf16.msra.mxu0 %v4363
          %4614 = vmatmul.bf16.gmra.mxu0 %v4083
          %v4615 = vpop.f32.mrf.mxu0
          %v4616 = vadd.f32 %v4167, %v4615
          %v4617 = vpop.f32.mrf.mxu0
          %v4618 = vadd.f32 %v4167, %v4617
          %4619 = vmatmul.bf16.gmra.mxu0 %v4087
          %v4620 = vpop.f32.mrf.mxu0
          %v4621 = vadd.f32 %v4167, %v4620
          %v4622 = vpop.f32.mrf.mxu0
          %v4623 = vadd.f32 %v4167, %v4622
          %4624 = vmatmul.bf16.gmra.mxu0 %v4091
          %v4625 = vpop.f32.mrf.mxu0
          %v4626 = vadd.f32 %v4167, %v4625
          %v4627 = vpop.f32.mrf.mxu0
          %v4628 = vadd.f32 %v4167, %v4627
          %4629 = vmatmul.bf16.gmra.mxu0 %v4095
          %v4630 = vpop.f32.mrf.mxu0
          %v4631 = vadd.f32 %v4167, %v4630
          %v4632 = vpop.f32.mrf.mxu0
          %v4633 = vadd.f32 %v4167, %v4632
          %4634 = vdwg.mxu0
          %4635 = vmatpush.bf16.msra.mxu0 %v4393
          %4636 = vmatpush.bf16.msra.mxu0 %v4391
          %4637 = vmatpush.bf16.msra.mxu0 %v4389
          %4638 = vmatpush.bf16.msra.mxu0 %v4387
          %4639 = vmatpush.bf16.msra.mxu0 %v4385
          %4640 = vmatpush.bf16.msra.mxu0 %v4383
          %4641 = vmatpush.bf16.msra.mxu0 %v4381
          %4642 = vmatpush.bf16.msra.mxu0 %v4379
          %4643 = vmatmul.bf16.gmra.mxu0 %v4084
          %v4644 = vpop.f32.mrf.mxu0
          %v4645 = vadd.f32 %v4616, %v4644
          %v4646 = vpop.f32.mrf.mxu0
          %v4647 = vadd.f32 %v4618, %v4646
          %4648 = vmatmul.bf16.gmra.mxu0 %v4088
          %v4649 = vpop.f32.mrf.mxu0
          %v4650 = vadd.f32 %v4621, %v4649
          %v4651 = vpop.f32.mrf.mxu0
          %v4652 = vadd.f32 %v4623, %v4651
          %4653 = vmatmul.bf16.gmra.mxu0 %v4092
          %v4654 = vpop.f32.mrf.mxu0
          %v4655 = vadd.f32 %v4626, %v4654
          %v4656 = vpop.f32.mrf.mxu0
          %v4657 = vadd.f32 %v4628, %v4656
          %4658 = vmatmul.bf16.gmra.mxu0 %v4096
          %v4659 = vpop.f32.mrf.mxu0
          %v4660 = vadd.f32 %v4631, %v4659
          %v4661 = vpop.f32.mrf.mxu0
          %v4662 = vadd.f32 %v4633, %v4661
          %4663 = vdwg.mxu0
          %4664 = vmatpush.bf16.msra.mxu0 %v4409
          %4665 = vmatpush.bf16.msra.mxu0 %v4407
          %4666 = vmatpush.bf16.msra.mxu0 %v4405
          %4667 = vmatpush.bf16.msra.mxu0 %v4403
          %4668 = vmatpush.bf16.msra.mxu0 %v4401
          %4669 = vmatpush.bf16.msra.mxu0 %v4399
          %4670 = vmatpush.bf16.msra.mxu0 %v4397
          %4671 = vmatpush.bf16.msra.mxu0 %v4395
          %4672 = vmatmul.bf16.gmra.mxu0 %v4085
          %v4673 = vpop.f32.mrf.mxu0
          %v4674 = vadd.f32 %v4645, %v4673
          %v4675 = vpop.f32.mrf.mxu0
          %v4676 = vadd.f32 %v4647, %v4675
          %4677 = vmatmul.bf16.gmra.mxu0 %v4089
          %v4678 = vpop.f32.mrf.mxu0
          %v4679 = vadd.f32 %v4650, %v4678
          %v4680 = vpop.f32.mrf.mxu0
          %v4681 = vadd.f32 %v4652, %v4680
          %4682 = vmatmul.bf16.gmra.mxu0 %v4093
          %v4683 = vpop.f32.mrf.mxu0
          %v4684 = vadd.f32 %v4655, %v4683
          %v4685 = vpop.f32.mrf.mxu0
          %v4686 = vadd.f32 %v4657, %v4685
          %4687 = vmatmul.bf16.gmra.mxu0 %v4097
          %v4688 = vpop.f32.mrf.mxu0
          %v4689 = vadd.f32 %v4660, %v4688
          %v4690 = vpop.f32.mrf.mxu0
          %v4691 = vadd.f32 %v4662, %v4690
          %4692 = vdwg.mxu0
          %4693 = vmatpush.bf16.msra.mxu0 %v4425
          %4694 = vmatpush.bf16.msra.mxu0 %v4423
          %4695 = vmatpush.bf16.msra.mxu0 %v4421
          %4696 = vmatpush.bf16.msra.mxu0 %v4419
          %4697 = vmatpush.bf16.msra.mxu0 %v4417
          %4698 = vmatpush.bf16.msra.mxu0 %v4415
          %4699 = vmatpush.bf16.msra.mxu0 %v4413
          %4700 = vmatpush.bf16.msra.mxu0 %v4411
          %4701 = vmatmul.bf16.gmra.mxu0 %v4086
          %v4702 = vpop.f32.mrf.mxu0
          %v4703 = vadd.f32 %v4674, %v4702
          %v4704 = vpop.f32.mrf.mxu0
          %v4705 = vadd.f32 %v4676, %v4704
          %4706 = vmatmul.bf16.gmra.mxu0 %v4090
          %v4707 = vpop.f32.mrf.mxu0
          %v4708 = vadd.f32 %v4679, %v4707
          %v4709 = vpop.f32.mrf.mxu0
          %v4710 = vadd.f32 %v4681, %v4709
          %4711 = vmatmul.bf16.gmra.mxu0 %v4094
          %v4712 = vpop.f32.mrf.mxu0
          %v4713 = vadd.f32 %v4684, %v4712
          %v4714 = vpop.f32.mrf.mxu0
          %v4715 = vadd.f32 %v4686, %v4714
          %4716 = vmatmul.bf16.gmra.mxu0 %v4098
          %v4717 = vpop.f32.mrf.mxu0
          %v4718 = vadd.f32 %v4689, %v4717
          %v4719 = vpop.f32.mrf.mxu0
          %v4720 = vadd.f32 %v4691, %v4719
          %4721 = vdwg.mxu0
          %v4722 = vpack.c.bf16 %v4589, %v4587
          %v4723 = vpack.c.bf16 %v4705, %v4703
          %v4724 = vpack.c.bf16 %v4594, %v4592
          %v4725 = vpack.c.bf16 %v4710, %v4708
          %v4726 = vpack.c.bf16 %v4599, %v4597
          %v4727 = vpack.c.bf16 %v4715, %v4713
          %v4728 = vpack.c.bf16 %v4604, %v4602
          %v4729 = vpack.c.bf16 %v4720, %v4718
          %v4730 = vld [vmem:[%s12] sm:$0xf]
          %v4731 = vld [vmem:[%s12 + $0x4] sm:$0xf]
          %v4732 = vld [vmem:[%s12 + $0x8] sm:$0xf]
          %v4733 = vld [vmem:[%s12 + $0xc] sm:$0xf]
          %v4734 = vld [vmem:[%s12 + $0x10] sm:$0xf]
          %v4735 = vld [vmem:[%s12 + $0x14] sm:$0xf]
          %v4736 = vld [vmem:[%s12 + $0x18] sm:$0xf]
          %v4737 = vld [vmem:[%s12 + $0x1c] sm:$0xf]
          %v4738 = vld [vmem:[%s12 + $0x20] sm:$0xf]
          %v4739 = vld [vmem:[%s12 + $0x24] sm:$0xf]
          %v4740 = vld [vmem:[%s12 + $0x28] sm:$0xf]
          %v4741 = vld [vmem:[%s12 + $0x2c] sm:$0xf]
          %v4742 = vld [vmem:[%s12 + $0x30] sm:$0xf]
          %v4743 = vld [vmem:[%s12 + $0x34] sm:$0xf]
          %v4744 = vld [vmem:[%s12 + $0x38] sm:$0xf]
          %v4745 = vld [vmem:[%s12 + $0x3c] sm:$0xf]
          %v4746 = vld [vmem:[%s12 + $0x40] sm:$0xf]
          %v4747 = vld [vmem:[%s12 + $0x44] sm:$0xf]
          %v4748 = vld [vmem:[%s12 + $0x48] sm:$0xf]
          %v4749 = vld [vmem:[%s12 + $0x4c] sm:$0xf]
          %v4750 = vld [vmem:[%s12 + $0x50] sm:$0xf]
          %v4751 = vld [vmem:[%s12 + $0x54] sm:$0xf]
          %v4752 = vld [vmem:[%s12 + $0x58] sm:$0xf]
          %v4753 = vld [vmem:[%s12 + $0x5c] sm:$0xf]
          %v4754 = vld [vmem:[%s12 + $0x60] sm:$0xf]
          %v4755 = vld [vmem:[%s12 + $0x64] sm:$0xf]
          %v4756 = vld [vmem:[%s12 + $0x68] sm:$0xf]
          %v4757 = vld [vmem:[%s12 + $0x6c] sm:$0xf]
          %v4758 = vld [vmem:[%s12 + $0x70] sm:$0xf]
          %v4759 = vld [vmem:[%s12 + $0x74] sm:$0xf]
          %v4760 = vld [vmem:[%s12 + $0x78] sm:$0xf]
          %v4761 = vld [vmem:[%s12 + $0x7c] sm:$0xf]
          %v4762 = vld [vmem:[%s3 + $0x20] ss:$0 sm:$0xff]
          %v4795 = vunpack.c.l.b16 %v4730
          %v4796 = vunpack.c.l.b16 %v4731
          %v4797 = vunpack.c.l.b16 %v4732
          %v4798 = vunpack.c.l.b16 %v4733
          %v4799 = vunpack.c.l.b16 %v4734
          %v4800 = vunpack.c.l.b16 %v4735
          %v4801 = vunpack.c.l.b16 %v4736
          %v4802 = vunpack.c.l.b16 %v4737
          %v4803 = vunpack.c.l.b16 %v4738
          %v4804 = vunpack.c.l.b16 %v4739
          %v4805 = vunpack.c.l.b16 %v4740
          %v4806 = vunpack.c.l.b16 %v4741
          %v4807 = vunpack.c.l.b16 %v4742
          %v4808 = vunpack.c.l.b16 %v4743
          %v4809 = vunpack.c.l.b16 %v4744
          %v4810 = vunpack.c.l.b16 %v4745
          %v4811 = vunpack.c.l.b16 %v4746
          %v4812 = vunpack.c.l.b16 %v4747
          %v4813 = vunpack.c.l.b16 %v4748
          %v4814 = vunpack.c.l.b16 %v4749
          %v4815 = vunpack.c.l.b16 %v4750
          %v4816 = vunpack.c.l.b16 %v4751
          %v4817 = vunpack.c.l.b16 %v4752
          %v4818 = vunpack.c.l.b16 %v4753
          %v4819 = vunpack.c.l.b16 %v4754
          %v4820 = vunpack.c.l.b16 %v4755
          %v4821 = vunpack.c.l.b16 %v4756
          %v4822 = vunpack.c.l.b16 %v4757
          %v4823 = vunpack.c.l.b16 %v4758
          %v4824 = vunpack.c.l.b16 %v4759
          %v4825 = vunpack.c.l.b16 %v4760
          %v4826 = vunpack.c.l.b16 %v4761
          %v4827 = vpack.c.b16 %v4796, %v4795
          %v4828 = vpack.c.b16 %v4798, %v4797
          %v4829 = vpack.c.b16 %v4800, %v4799
          %v4830 = vpack.c.b16 %v4802, %v4801
          %v4831 = vpack.c.b16 %v4804, %v4803
          %v4832 = vpack.c.b16 %v4806, %v4805
          %v4833 = vpack.c.b16 %v4808, %v4807
          %v4834 = vpack.c.b16 %v4810, %v4809
          %v4835 = vpack.c.b16 %v4812, %v4811
          %v4836 = vpack.c.b16 %v4814, %v4813
          %v4837 = vpack.c.b16 %v4816, %v4815
          %v4838 = vpack.c.b16 %v4818, %v4817
          %v4839 = vpack.c.b16 %v4820, %v4819
          %v4840 = vpack.c.b16 %v4822, %v4821
          %v4841 = vpack.c.b16 %v4824, %v4823
          %v4842 = vpack.c.b16 %v4826, %v4825
          %4859 = vmatpush.bf16.msra.mxu0 %v4834
          %4860 = vmatpush.bf16.msra.mxu0 %v4833
          %4861 = vmatpush.bf16.msra.mxu0 %v4832
          %4862 = vmatpush.bf16.msra.mxu0 %v4831
          %4863 = vmatpush.bf16.msra.mxu0 %v4830
          %4864 = vmatpush.bf16.msra.mxu0 %v4829
          %4865 = vmatpush.bf16.msra.mxu0 %v4828
          %4866 = vmatpush.bf16.msra.mxu0 %v4827
          %4867 = vmatmul.bf16.gmra.mxu0 %v4722
          %v4868 = vpop.f32.mrf.mxu0
          %v4869 = vadd.f32 %v4762, %v4868
          %v4870 = vpop.f32.mrf.mxu0
          %v4871 = vadd.f32 %v4762, %v4870
          %4872 = vmatmul.bf16.gmra.mxu0 %v4724
          %v4873 = vpop.f32.mrf.mxu0
          %v4874 = vadd.f32 %v4762, %v4873
          %v4875 = vpop.f32.mrf.mxu0
          %v4876 = vadd.f32 %v4762, %v4875
          %4877 = vmatmul.bf16.gmra.mxu0 %v4726
          %v4878 = vpop.f32.mrf.mxu0
          %v4879 = vadd.f32 %v4762, %v4878
          %v4880 = vpop.f32.mrf.mxu0
          %v4881 = vadd.f32 %v4762, %v4880
          %4882 = vmatmul.bf16.gmra.mxu0 %v4728
          %v4883 = vpop.f32.mrf.mxu0
          %v4884 = vadd.f32 %v4762, %v4883
          %v4885 = vpop.f32.mrf.mxu0
          %v4886 = vadd.f32 %v4762, %v4885
          %4887 = vdwg.mxu0
          %4888 = vmatpush.bf16.msra.mxu0 %v4842
          %4889 = vmatpush.bf16.msra.mxu0 %v4841
          %4890 = vmatpush.bf16.msra.mxu0 %v4840
          %4891 = vmatpush.bf16.msra.mxu0 %v4839
          %4892 = vmatpush.bf16.msra.mxu0 %v4838
          %4893 = vmatpush.bf16.msra.mxu0 %v4837
          %4894 = vmatpush.bf16.msra.mxu0 %v4836
          %4895 = vmatpush.bf16.msra.mxu0 %v4835
          %4896 = vmatmul.bf16.gmra.mxu0 %v4723
          %v4897 = vpop.f32.mrf.mxu0
          %v4898 = vadd.f32 %v4869, %v4897
          %v4899 = vpop.f32.mrf.mxu0
          %v4900 = vadd.f32 %v4871, %v4899
          %4901 = vmatmul.bf16.gmra.mxu0 %v4725
          %v4902 = vpop.f32.mrf.mxu0
          %v4903 = vadd.f32 %v4874, %v4902
          %v4904 = vpop.f32.mrf.mxu0
          %v4905 = vadd.f32 %v4876, %v4904
          %4906 = vmatmul.bf16.gmra.mxu0 %v4727
          %v4907 = vpop.f32.mrf.mxu0
          %v4908 = vadd.f32 %v4879, %v4907
          %v4909 = vpop.f32.mrf.mxu0
          %v4910 = vadd.f32 %v4881, %v4909
          %4911 = vmatmul.bf16.gmra.mxu0 %v4729
          %v4912 = vpop.f32.mrf.mxu0
          %v4913 = vadd.f32 %v4884, %v4912
          %v4914 = vpop.f32.mrf.mxu0
          %v4915 = vadd.f32 %v4886, %v4914
          %4916 = vdwg.mxu0
          %4917 = vst [vmem:[%s577] sm:$0xff] %v4587
          %4918 = vst [vmem:[%s577 + $0x8] sm:$0xff] %v4703
          %4919 = vst [vmem:[%s577 + $0x10] sm:$0xff] %v4589
          %4920 = vst [vmem:[%s577 + $0x18] sm:$0xff] %v4705
          %4921 = vst [vmem:[%s577 + $0x20] sm:$0xff] %v4592
          %4922 = vst [vmem:[%s577 + $0x28] sm:$0xff] %v4708
          %4923 = vst [vmem:[%s577 + $0x30] sm:$0xff] %v4594
          %4924 = vst [vmem:[%s577 + $0x38] sm:$0xff] %v4710
          %4925 = vst [vmem:[%s577 + $0x40] sm:$0xff] %v4597
          %4926 = vst [vmem:[%s577 + $0x48] sm:$0xff] %v4713
          %4927 = vst [vmem:[%s577 + $0x50] sm:$0xff] %v4599
          %4928 = vst [vmem:[%s577 + $0x58] sm:$0xff] %v4715
          %4929 = vst [vmem:[%s577 + $0x60] sm:$0xff] %v4602
          %4930 = vst [vmem:[%s577 + $0x68] sm:$0xff] %v4718
          %4931 = vst [vmem:[%s577 + $0x70] sm:$0xff] %v4604
          %4932 = vst [vmem:[%s577 + $0x78] sm:$0xff] %v4720
          %4941 = vrot.lane.b32.xlu0 %v4898, 64
          %v4942 = vpop.permute.xlu0 %4941
          %4943 = vrot.lane.b32.xlu0 %v4900, 64
          %v4944 = vpop.permute.xlu0 %4943
          %4945 = vrot.lane.b32.xlu0 %v4903, 64
          %v4946 = vpop.permute.xlu0 %4945
          %4947 = vrot.lane.b32.xlu0 %v4905, 64
          %v4948 = vpop.permute.xlu0 %4947
          %4949 = vrot.lane.b32.xlu0 %v4908, 64
          %v4950 = vpop.permute.xlu0 %4949
          %4951 = vrot.lane.b32.xlu0 %v4910, 64
          %v4952 = vpop.permute.xlu0 %4951
          %4953 = vrot.lane.b32.xlu0 %v4913, 64
          %v4954 = vpop.permute.xlu0 %4953
          %4955 = vrot.lane.b32.xlu0 %v4915, 64
          %v4956 = vpop.permute.xlu0 %4955
          %4973 = vrot.lane.b32.xlu0 %v1940, 72
          %v4974 = vpop.permute.xlu0 %4973
          %4975 = vrot.lane.b32.xlu0 %v1942, 72
          %v4976 = vpop.permute.xlu0 %4975
          %4977 = vrot.lane.b32.xlu0 %v1945, 72
          %v4978 = vpop.permute.xlu0 %4977
          %4979 = vrot.lane.b32.xlu0 %v1947, 72
          %v4980 = vpop.permute.xlu0 %4979
          %4981 = vrot.lane.b32.xlu0 %v1950, 72
          %v4982 = vpop.permute.xlu0 %4981
          %4983 = vrot.lane.b32.xlu0 %v1952, 72
          %v4984 = vpop.permute.xlu0 %4983
          %4985 = vrot.lane.b32.xlu0 %v1955, 72
          %v4986 = vpop.permute.xlu0 %4985
          %4987 = vrot.lane.b32.xlu0 %v1957, 72
          %v4988 = vpop.permute.xlu0 %4987
          %vm4997 = vcmask 523264
          %v4998 = vsel %vm4997, %v3588, %v4942
          %v4999 = vsel %vm4997, %v3590, %v4944
          %v5000 = vsel %vm4997, %v3593, %v4946
          %v5001 = vsel %vm4997, %v3595, %v4948
          %v5002 = vsel %vm4997, %v3598, %v4950
          %v5003 = vsel %vm4997, %v3600, %v4952
          %v5004 = vsel %vm4997, %v3603, %v4954
          %v5005 = vsel %vm4997, %v3605, %v4956
          %vm5006 = vcmask 588800
          %v5007 = vsel %vm5006, %v4998, %v4974
          %v5008 = vsel %vm5006, %v4999, %v4976
          %v5009 = vsel %vm5006, %v5000, %v4978
          %v5010 = vsel %vm5006, %v5001, %v4980
          %v5011 = vsel %vm5006, %v5002, %v4982
          %v5012 = vsel %vm5006, %v5003, %v4984
          %v5013 = vsel %vm5006, %v5004, %v4986
          %v5014 = vsel %vm5006, %v5005, %v4988
          %vm5015 = vcmask 719872
          %v5016 = vsel %vm5015, %v5007, 0.0
          %v5017 = vsel %vm5015, %v5008, 0.0
          %v5018 = vsel %vm5015, %v5009, 0.0
          %v5019 = vsel %vm5015, %v5010, 0.0
          %v5020 = vsel %vm5015, %v5011, 0.0
          %v5021 = vsel %vm5015, %v5012, 0.0
          %v5022 = vsel %vm5015, %v5013, 0.0
          %v5023 = vsel %vm5015, %v5014, 0.0
          %5024 = vst [vmem:[%s618] sm:$0xff] %v5016
          %5025 = vst [vmem:[%s618 + $0x8] sm:$0xff] %v5017
          %5026 = vst [vmem:[%s618 + $0x10] sm:$0xff] %v5018
          %5027 = vst [vmem:[%s618 + $0x18] sm:$0xff] %v5019
          %5028 = vst [vmem:[%s618 + $0x20] sm:$0xff] %v5020
          %5029 = vst [vmem:[%s618 + $0x28] sm:$0xff] %v5021
          %5030 = vst [vmem:[%s618 + $0x30] sm:$0xff] %v5022
          %5031 = vst [vmem:[%s618 + $0x38] sm:$0xff] %v5023
        $region100: #{multilab_class_vae_forward.1} parent=71 // pred_fallthru
          _
        %s5032 = sand.u32 %s347, 1
        %s5033 = scalar_lea.sflag [#allocation6], %s5032
        %s5034 = sand.u32 %s347, 1
        %s5035 = smul.addr %s5034, 128
        %s5036 = scalar_lea.vmem [#allocation10], %s5035
        %s5037 = smul.u32 %s35, %s36
        %s5038 = smul.u32 8, %s5037
        %p5039 = scmp.lt.s32.totalorder %s5038, 7
        %s5040 = scalar_select %p5039, %s5038, 7
        %s5041 = smul.addr %s5040, 8
        %s5042 = scalar_lea.vmem %s14, %s5041
        // Predicated region
        $region101: #{multilab_class_vae_forward.1} parent=71 // pred_check
          %p5043 = pneg %p357
        $region102: #{multilab_class_vae_forward.1} parent=71 // pred_check_branch
          %5045 = sbr.rel (%p5043) target = $region104
        $region103: #{multilab_class_vae_forward.1} parent=71 // pred_region
          %s5046 = smul.u32 %s35, %s36
          %s5047 = smul.u32 8, %s5046
          %5049 = vsyncadd %s5033, 0
          %s5050 = smul.addr %s5047, 2
          %s5051 = smul.addr %s5050, 8
          %s5052 = scalar_lea.hbm %s13, %s5051
          %s5053 = sshll.u32 %s5036, 4
          %s5054 = int_to_ptr.vmem [resolvable:$true] %s5053
          %s5055 = sshll.u32 %s5052, 4
          %s5056 = int_to_ptr.hbm [resolvable:$true] %s5055
          %5061 = dma.vmem_to_hbm [thread:$0]  %s5054, 2048, %s5056, %s5033, 256, 256, 16
        $region104: #{multilab_class_vae_forward.1} parent=71 // pred_fallthru
          _
        // Predicated region
        $region105: #{multilab_class_vae_forward.1} parent=71 // pred_check
          %p5062 = pneg %p385
        $region106: #{multilab_class_vae_forward.1} parent=71 // pred_check_branch
          %5064 = sbr.rel (%p5062) target = $region108
        $region107: #{multilab_class_vae_forward.1} parent=71 // pred_region
          %s5065 = smul.u32 %s35, %s36
          %s5066 = smul.u32 8, %s5065
        $region108: #{multilab_class_vae_forward.1} parent=71 // pred_fallthru
          _
      $region72: #{multilab_class_vae_forward.1} parent=5 // pred_fallthru
        _
      %p5067 = scmp.le.s32.totalorder 2, %s26
      // Predicated region
      $region109: #{multilab_class_vae_forward.1} parent=5 // pred_check
        %p5068 = pneg %p5067
      $region110: #{multilab_class_vae_forward.1} parent=5 // pred_check_branch
        %5070 = sbr.rel (%p5068) target = $region112
      $region111: #{multilab_class_vae_forward.1} parent=5 // pred_region
        %s5071 = ssub.s32 %s26, 2
        // Predicated region
        $region113: #{multilab_class_vae_forward.1} parent=111 // pred_check
          %p5072 = pneg %p363
        $region114: #{multilab_class_vae_forward.1} parent=111 // pred_check_branch
          %5074 = sbr.rel (%p5072) target = $region116
        $region115: #{multilab_class_vae_forward.1} parent=111 // pred_region
          %s5075 = sand.u32 %s348, 1
          %s5076 = scalar_lea.sflag [#allocation6], %s5075
          %s5077 = sand.u32 %s348, 1
          %s5078 = smul.addr %s5077, 128
          %s5079 = scalar_lea.vmem [#allocation10], %s5078
          %5081 = dma.done %s5076, 2048
        $region116: #{multilab_class_vae_forward.1} parent=111 // pred_fallthru
          _
        // Predicated region
        $region117: #{multilab_class_vae_forward.1} parent=111 // pred_check
          %p5082 = pneg %p391
        $region118: #{multilab_class_vae_forward.1} parent=111 // pred_check_branch
          %5084 = sbr.rel (%p5082) target = $region120
        $region119: #{multilab_class_vae_forward.1} parent=111 // pred_region
          %s5085 = smul.u32 %s37, %s38
          %s5086 = smul.u32 8, %s5085
          %p5087 = scmp.lt.s32.totalorder %s5086, 7
          %s5088 = scalar_select %p5087, %s5086, 7
          %s5089 = smul.addr %s5088, 8
          %s5090 = scalar_lea.vmem %s14, %s5089
        $region120: #{multilab_class_vae_forward.1} parent=111 // pred_fallthru
          _
      $region112: #{multilab_class_vae_forward.1} parent=5 // pred_fallthru
        _
    $region6: #{multilab_class_vae_forward.1} parent=1 // loop_footer
      %s30 = sadd.s32 1, %s26
    $region7: #{multilab_class_vae_forward.1} parent=1 // loop_footer_branch
      %25 = sbr.rel target = $region3
    $region8: #{multilab_class_vae_forward.1} parent=1 // loop_exit
      _
    %5091 = vsyncpa [#allocation5], 1
    %s5092 = scalar_lea.sflag [#allocation5], 1
    %5093 = vsyncpa %s5092, 1
    %5094 = vsyncpa [#allocation8], 1
    %5095 = vsyncpa [#allocation6], 1
    %s5096 = scalar_lea.sflag [#allocation6], 1
    %5097 = vsyncpa %s5096, 1

</llo_original>
